<compile_context>
chip_gen: v5e
topology: v5e:2x2
jax: 0.10.0
libtpu: 0.0.40
codegen_flags: <defaults>
</compile_context>

<pallas_src>
import functools

import jax
import jax.numpy as jnp
from jax import lax
from jax.experimental import pallas as pl
from jax.experimental.pallas import tpu as pltpu


def _round_up(x, m):
    return ((x + m - 1) // m) * m


# ----------------------------------------------------------------------------
# Kernel: full GRU recurrence over time for one batch block, single grid step.
#   gi_ref  : (T, Bb, 3*Hp) f32  precomputed input projection x@Wih + biases
#                                (gate blocks at [0:Hp], [Hp:2Hp], [2Hp:3Hp])
#   whh_ref : (Hp, 3*Hp)   bf16  recurrent weights (per-gate 128-aligned blocks)
#   bhn_ref : (1, Hp)      f32   b_hn (must stay inside r * (...))
#   out_ref : (T, Bb, Hp)  f32   per-step hidden states (lane-dense, 128 wide)
# ----------------------------------------------------------------------------
def _encoder_gru_kernel(gi_ref, whh_ref, bhn_ref, out_ref, *, unroll):
    T = gi_ref.shape[0]
    Bb = gi_ref.shape[1]
    Hp = whh_ref.shape[0]

    # Prebroadcast once (JAX does not CSE broadcast_in_dim inside the loop).
    bhn = jnp.broadcast_to(bhn_ref[...], (Bb, Hp))

    def step(t, h):
        gi = gi_ref[t]                                             # (Bb, 3*Hp) f32
        # Only recurrent matmul left on the serial path; bf16 MXU operands,
        # f32 accumulation. W_hh is indexed from the ref (no long live range).
        gh = jnp.dot(h.astype(jnp.bfloat16), whh_ref[...],
                     preferred_element_type=jnp.float32)           # (Bb, 3*Hp)
        # 128-lane-aligned gate slices (Hp is a multiple of 128).
        r = jax.nn.sigmoid(gi[:, 0:Hp] + gh[:, 0:Hp])
        z = jax.nn.sigmoid(gi[:, Hp:2 * Hp] + gh[:, Hp:2 * Hp])
        n = jnp.tanh(gi[:, 2 * Hp:3 * Hp] + r * (gh[:, 2 * Hp:3 * Hp] + bhn))
        h_new = (1.0 - z) * n + z * h
        out_ref[t] = h_new                                         # lane-dense store
        return h_new

    h0 = jnp.zeros((Bb, Hp), jnp.float32)
    lax.fori_loop(0, T, step, h0, unroll=unroll)


# ----------------------------------------------------------------------------
# Parameter prep (one-time, amortized over calls):
#   * gi_table = emb @ W_ih + b_ih, with b_hh folded in for the r,z gates
#     (valid: those biases sit outside any gating); shape (VOCAB, 3*Hp),
#     per-gate blocks zero-padded to 128 lanes.
#   * W_hh padded to (Hp, 3*Hp) and cast to bf16. Pad rows/cols are zero, so
#     padded lanes of h stay exactly 0 and cannot leak into logical lanes.
#   * b_hn kept separate (inside r * (...)), padded to (1, Hp).
# ----------------------------------------------------------------------------
def _prepare_params(params, Hp):
    E, threeH = params["wih"].shape
    H = threeH // 3

    # Combined additive bias: r,z get b_ih + b_hh; n gets only b_ih.
    bias = params["bih"] + jnp.concatenate(
        [params["bhh"][:, :2 * H], jnp.zeros((1, H), jnp.float32)], axis=1)
    gi = params["emb"] @ params["wih"] + bias                      # (V, 3H) f32

    gi_p = jnp.zeros((gi.shape[0], 3 * Hp), jnp.float32)
    whh_p = jnp.zeros((Hp, 3 * Hp), jnp.float32)
    for g in range(3):
        gi_p = gi_p.at[:, g * Hp:g * Hp + H].set(gi[:, g * H:(g + 1) * H])
        whh_p = whh_p.at[:H, g * Hp:g * Hp + H].set(
            params["whh"][:, g * H:(g + 1) * H])

    bhn_p = jnp.zeros((1, Hp), jnp.float32).at[:, :H].set(
        params["bhh"][:, 2 * H:3 * H])
    return gi_p, whh_p.astype(jnp.bfloat16), bhn_p


def _choose_block_b(B, T, Hp):
    Bp = _round_up(B, 8)
    if Bp <= 16:
        block_b = Bp
    elif Bp <= 256:
        # >= 2 batch blocks so the "parallel" axis can shard across both
        # TensorCores on v7x; still <= 128 rows per MXU pass.
        block_b = min(128, _round_up((Bp + 1) // 2, 8))
    else:
        block_b = 128
    # Crude VMEM budget: double-buffered (T,Bb,3Hp)+(T,Bb,Hp) f32 blocks must
    # stay well under v7x's 64 MiB physical VMEM.
    while block_b > 8 and 2 * T * block_b * (4 * Hp) * 4 > 24 * 1024 * 1024:
        block_b = max(8, _round_up(block_b // 2, 8))
    return block_b


# ----------------------------------------------------------------------------
# EncoderRNN.forward equivalent.
#   tokens: (B, T) int32 token ids  (mirrors self.embedding(input_var[0]))
# Returns:
#   output: (B, T, H)   encoded features (batch_first)
#   hidden: (1, B, H)   final hidden state (num_layers * num_directions = 1)
# ----------------------------------------------------------------------------
def encoder_forward(params, tokens, *, block_b=None):
    B, T = tokens.shape
    H = params["whh"].shape[0]
    Hp = _round_up(H, 128)

    gi_table, whh_p, bhn_p = _prepare_params(params, Hp)

    if block_b is None:
        block_b = _choose_block_b(B, T, Hp)
    block_b = max(8, _round_up(block_b, 8))
    Bp = _round_up(_round_up(B, 8), block_b)
    tokens_p = jnp.pad(tokens, ((0, Bp - B), (0, 0)))

    # Runtime input projection is a pure gather of the precomputed table,
    # emitted directly time-major (no separate activation transpose).
    gi_tm = gi_table[tokens_p.T]                                   # (T, Bp, 3*Hp) f32

    n_bb = Bp // block_b
    unroll = True if T <= 16 else 4

    grid_spec = pltpu.PrefetchScalarGridSpec(
        num_scalar_prefetch=0,
        grid=(n_bb,),                                              # batch blocks only
        in_specs=[
            pl.BlockSpec((T, block_b, 3 * Hp), lambda i: (0, i, 0)),
            pl.BlockSpec((Hp, 3 * Hp), lambda i: (0, 0)),
            pl.BlockSpec((1, Hp), lambda i: (0, 0)),
        ],
        out_specs=pl.BlockSpec((T, block_b, Hp), lambda i: (0, i, 0)),
    )

    out_tm = pl.pallas_call(
        functools.partial(_encoder_gru_kernel, unroll=unroll),
        out_shape=jax.ShapeDtypeStruct((T, Bp, Hp), jnp.float32),
        grid_spec=grid_spec,
        compiler_params=pltpu.CompilerParams(
            dimension_semantics=("parallel",),                     # megacore on v7x
            vmem_limit_bytes=64 * 1024 * 1024),
    )(gi_tm, whh_p, bhn_p)

    out_tm = out_tm[:, :B, :H]                                     # strip padding
    output = jnp.transpose(out_tm, (1, 0, 2))                      # (B, T, H) batch_first
    hidden = out_tm[T - 1][None]                                   # (1, B, H)
    return output, hidden


# ----------------------------------------------------------------------------
# Pure-JAX reference (PyTorch nn.GRU semantics) for correctness checking.
# ----------------------------------------------------------------------------
def _reference_forward(params, tokens):
    H = params["whh"].shape[0]
    x = jnp.transpose(params["emb"][tokens], (1, 0, 2))            # (T, B, E)

    def step(h, xt):
        gi = xt @ params["wih"] + params["bih"]
        gh = h @ params["whh"] + params["bhh"]
        r = jax.nn.sigmoid(gi[:, 0:H] + gh[:, 0:H])
        z = jax.nn.sigmoid(gi[:, H:2 * H] + gh[:, H:2 * H])
        n = jnp.tanh(gi[:, 2 * H:3 * H] + r * gh[:, 2 * H:3 * H])
        h = (1.0 - z) * n + z * h
        return h, h

    h0 = jnp.zeros((x.shape[1], H), jnp.float32)
    hT, outs = lax.scan(step, h0, x)
    return jnp.transpose(outs, (1, 0, 2)), hT[None]


# ----------------------------------------------------------------------------
if __name__ == "__main__":
    # Small deterministic config: embedding dim == hidden_size (per EncoderRNN).
    B, T = 8, 12
    VOCAB, HID = 32, 32

    key = jax.random.PRNGKey(0)
    ks = jax.random.split(key, 6)
    scale = 0.3
    params = {
        "emb": scale * jax.random.normal(ks[0], (VOCAB, HID), jnp.float32),
        "wih": scale * jax.random.normal(ks[1], (HID, 3 * HID), jnp.float32),
        "whh": scale * jax.random.normal(ks[2], (HID, 3 * HID), jnp.float32),
        "bih": scale * jax.random.normal(ks[3], (1, 3 * HID), jnp.float32),
        "bhh": scale * jax.random.normal(ks[4], (1, 3 * HID), jnp.float32),
    }
    tokens = jax.random.randint(ks[5], (B, T), 0, VOCAB, dtype=jnp.int32)

    fwd = jax.jit(encoder_forward)
    output, hidden = fwd(params, tokens)
    jax.block_until_ready((output, hidden))

    ref_out, ref_hid = _reference_forward(params, tokens)
    assert output.shape == (B, T, HID)
    assert hidden.shape == (1, B, HID)
    # Tolerance loosened because the recurrent matmul uses bf16 MXU operands
    # (f32 accumulation); this is a test artifact, not a correctness change.
    assert jnp.allclose(output, ref_out, atol=2e-2, rtol=2e-2)
    assert jnp.allclose(hidden, ref_hid, atol=2e-2, rtol=2e-2)

    print("KERNEL_OK")
</pallas_src>

<mosaic_0001>
module attributes {stable_mosaic.version = 11 : i64} {
  func.func @_encoder_gru_kernel(%arg0: i32, %arg1: memref<12x8x384xf32, #tpu.memory_space<vmem>>, %arg2: memref<128x384xbf16, #tpu.memory_space<vmem>>, %arg3: memref<1x128xf32, #tpu.memory_space<vmem>>, %arg4: memref<12x8x128xf32, #tpu.memory_space<vmem>>) attributes {dimension_semantics = [#tpu.dimension_semantics<parallel>], iteration_bounds = array<i64: 1>, scalar_prefetch = 0 : i64, scratch_operands = 0 : i64, tpu.core_type = #tpu.core_type<tc>, window_params = [{transform_indices = @transform_0, window_bounds = array<i64: 12, 8, 384>}, {pipeline_mode = #tpu.pipeline_mode<synchronous>, transform_indices = @transform_1, window_bounds = array<i64: 128, 384>}, {pipeline_mode = #tpu.pipeline_mode<synchronous>, transform_indices = @transform_2, window_bounds = array<i64: 1, 128>}, {transform_indices = @transform_3, window_bounds = array<i64: 12, 8, 128>}]} {
    %c0 = arith.constant 0 : index
    %c0_0 = arith.constant 0 : index
    %0 = vector.load %arg3[%c0, %c0_0] : memref<1x128xf32, #tpu.memory_space<vmem>>, vector<1x128xf32>
    %1 = vector.shape_cast %0 : vector<1x128xf32> to vector<1x128xf32>
    %2 = vector.broadcast %1 : vector<1x128xf32> to vector<8x128xf32>
    %cst = arith.constant 0.000000e+00 : f32
    %3 = vector.broadcast %cst : f32 to vector<8x128xf32>
    %c0_i32 = arith.constant 0 : i32
    %4 = arith.index_cast %c0_i32 : i32 to index
    %c0_1 = arith.constant 0 : index
    %c0_2 = arith.constant 0 : index
    %5 = vector.load %arg1[%4, %c0_1, %c0_2] : memref<12x8x384xf32, #tpu.memory_space<vmem>>, vector<1x8x384xf32>
    %6 = vector.shape_cast %5 : vector<1x8x384xf32> to vector<8x384xf32>
    %7 = arith.truncf %3 : vector<8x128xf32> to vector<8x128xbf16>
    %c0_3 = arith.constant 0 : index
    %c0_4 = arith.constant 0 : index
    %8 = vector.load %arg2[%c0_3, %c0_4] : memref<128x384xbf16, #tpu.memory_space<vmem>>, vector<128x384xbf16>
    %cst_5 = arith.constant dense<0.000000e+00> : vector<8x384xf32>
    %9 = tpu.matmul %7, %8, %cst_5 {dimension_numbers = #tpu.dot_dimension_numbers<[1], [0], [0], [1], [0, 0, 1, 1], [], []>} : vector<8x128xbf16>, vector<128x384xbf16>, vector<8x384xf32> -> vector<8x384xf32>
    %10 = vector.extract_strided_slice %6 {offsets = [0, 0], sizes = [8, 128], strides = [1, 1]} : vector<8x384xf32> to vector<8x128xf32>
    %11 = vector.extract_strided_slice %9 {offsets = [0, 0], sizes = [8, 128], strides = [1, 1]} : vector<8x384xf32> to vector<8x128xf32>
    %12 = arith.addf %10, %11 : vector<8x128xf32>
    %13 = arith.negf %12 : vector<8x128xf32>
    %14 = math.exp %13 : vector<8x128xf32>
    %cst_6 = arith.constant 1.000000e+00 : f32
    %15 = vector.broadcast %cst_6 : f32 to vector<8x128xf32>
    %16 = arith.addf %15, %14 : vector<8x128xf32>
    %17 = arith.divf %15, %16 : vector<8x128xf32>
    %18 = vector.extract_strided_slice %6 {offsets = [0, 128], sizes = [8, 128], strides = [1, 1]} : vector<8x384xf32> to vector<8x128xf32>
    %19 = vector.extract_strided_slice %9 {offsets = [0, 128], sizes = [8, 128], strides = [1, 1]} : vector<8x384xf32> to vector<8x128xf32>
    %20 = arith.addf %18, %19 : vector<8x128xf32>
    %21 = arith.negf %20 : vector<8x128xf32>
    %22 = math.exp %21 : vector<8x128xf32>
    %cst_7 = arith.constant 1.000000e+00 : f32
    %23 = vector.broadcast %cst_7 : f32 to vector<8x128xf32>
    %24 = arith.addf %23, %22 : vector<8x128xf32>
    %25 = arith.divf %23, %24 : vector<8x128xf32>
    %26 = vector.extract_strided_slice %6 {offsets = [0, 256], sizes = [8, 128], strides = [1, 1]} : vector<8x384xf32> to vector<8x128xf32>
    %27 = vector.extract_strided_slice %9 {offsets = [0, 256], sizes = [8, 128], strides = [1, 1]} : vector<8x384xf32> to vector<8x128xf32>
    %28 = arith.addf %27, %2 : vector<8x128xf32>
    %29 = arith.mulf %17, %28 : vector<8x128xf32>
    %30 = arith.addf %26, %29 : vector<8x128xf32>
    %31 = math.tanh %30 : vector<8x128xf32>
    %cst_8 = arith.constant 1.000000e+00 : f32
    %32 = vector.broadcast %cst_8 : f32 to vector<8x128xf32>
    %33 = arith.subf %32, %25 : vector<8x128xf32>
    %34 = arith.mulf %33, %31 : vector<8x128xf32>
    %35 = arith.mulf %25, %3 : vector<8x128xf32>
    %36 = arith.addf %34, %35 : vector<8x128xf32>
    %37 = arith.index_cast %c0_i32 : i32 to index
    %c0_9 = arith.constant 0 : index
    %c0_10 = arith.constant 0 : index
    %38 = vector.load %arg4[%37, %c0_9, %c0_10] : memref<12x8x128xf32, #tpu.memory_space<vmem>>, vector<1x8x128xf32>
    %39 = vector.shape_cast %38 : vector<1x8x128xf32> to vector<8x128xf32>
    %40 = vector.shape_cast %36 : vector<8x128xf32> to vector<1x8x128xf32>
    tpu.vector_store %arg4[%37, %c0_9, %c0_10], %40 {strides = array<i32>} : memref<12x8x128xf32, #tpu.memory_space<vmem>>, vector<1x8x128xf32>,
    %c1_i32 = arith.constant 1 : i32
    %41 = arith.index_cast %c1_i32 : i32 to index
    %c0_11 = arith.constant 0 : index
    %c0_12 = arith.constant 0 : index
    %42 = vector.load %arg1[%41, %c0_11, %c0_12] : memref<12x8x384xf32, #tpu.memory_space<vmem>>, vector<1x8x384xf32>
    %43 = vector.shape_cast %42 : vector<1x8x384xf32> to vector<8x384xf32>
    %44 = arith.truncf %36 : vector<8x128xf32> to vector<8x128xbf16>
    %c0_13 = arith.constant 0 : index
    %c0_14 = arith.constant 0 : index
    %45 = vector.load %arg2[%c0_13, %c0_14] : memref<128x384xbf16, #tpu.memory_space<vmem>>, vector<128x384xbf16>
    %cst_15 = arith.constant dense<0.000000e+00> : vector<8x384xf32>
    %46 = tpu.matmul %44, %45, %cst_15 {dimension_numbers = #tpu.dot_dimension_numbers<[1], [0], [0], [1], [0, 0, 1, 1], [], []>} : vector<8x128xbf16>, vector<128x384xbf16>, vector<8x384xf32> -> vector<8x384xf32>
    %47 = vector.extract_strided_slice %43 {offsets = [0, 0], sizes = [8, 128], strides = [1, 1]} : vector<8x384xf32> to vector<8x128xf32>
    %48 = vector.extract_strided_slice %46 {offsets = [0, 0], sizes = [8, 128], strides = [1, 1]} : vector<8x384xf32> to vector<8x128xf32>
    %49 = arith.addf %47, %48 : vector<8x128xf32>
    %50 = arith.negf %49 : vector<8x128xf32>
    %51 = math.exp %50 : vector<8x128xf32>
    %cst_16 = arith.constant 1.000000e+00 : f32
    %52 = vector.broadcast %cst_16 : f32 to vector<8x128xf32>
    %53 = arith.addf %52, %51 : vector<8x128xf32>
    %54 = arith.divf %52, %53 : vector<8x128xf32>
    %55 = vector.extract_strided_slice %43 {offsets = [0, 128], sizes = [8, 128], strides = [1, 1]} : vector<8x384xf32> to vector<8x128xf32>
    %56 = vector.extract_strided_slice %46 {offsets = [0, 128], sizes = [8, 128], strides = [1, 1]} : vector<8x384xf32> to vector<8x128xf32>
    %57 = arith.addf %55, %56 : vector<8x128xf32>
    %58 = arith.negf %57 : vector<8x128xf32>
    %59 = math.exp %58 : vector<8x128xf32>
    %cst_17 = arith.constant 1.000000e+00 : f32
    %60 = vector.broadcast %cst_17 : f32 to vector<8x128xf32>
    %61 = arith.addf %60, %59 : vector<8x128xf32>
    %62 = arith.divf %60, %61 : vector<8x128xf32>
    %63 = vector.extract_strided_slice %43 {offsets = [0, 256], sizes = [8, 128], strides = [1, 1]} : vector<8x384xf32> to vector<8x128xf32>
    %64 = vector.extract_strided_slice %46 {offsets = [0, 256], sizes = [8, 128], strides = [1, 1]} : vector<8x384xf32> to vector<8x128xf32>
    %65 = arith.addf %64, %2 : vector<8x128xf32>
    %66 = arith.mulf %54, %65 : vector<8x128xf32>
    %67 = arith.addf %63, %66 : vector<8x128xf32>
    %68 = math.tanh %67 : vector<8x128xf32>
    %cst_18 = arith.constant 1.000000e+00 : f32
    %69 = vector.broadcast %cst_18 : f32 to vector<8x128xf32>
    %70 = arith.subf %69, %62 : vector<8x128xf32>
    %71 = arith.mulf %70, %68 : vector<8x128xf32>
    %72 = arith.mulf %62, %36 : vector<8x128xf32>
    %73 = arith.addf %71, %72 : vector<8x128xf32>
    %74 = arith.index_cast %c1_i32 : i32 to index
    %c0_19 = arith.constant 0 : index
    %c0_20 = arith.constant 0 : index
    %75 = vector.load %arg4[%74, %c0_19, %c0_20] : memref<12x8x128xf32, #tpu.memory_space<vmem>>, vector<1x8x128xf32>
    %76 = vector.shape_cast %75 : vector<1x8x128xf32> to vector<8x128xf32>
    %77 = vector.shape_cast %73 : vector<8x128xf32> to vector<1x8x128xf32>
    tpu.vector_store %arg4[%74, %c0_19, %c0_20], %77 {strides = array<i32>} : memref<12x8x128xf32, #tpu.memory_space<vmem>>, vector<1x8x128xf32>,
    %c2_i32 = arith.constant 2 : i32
    %78 = arith.index_cast %c2_i32 : i32 to index
    %c0_21 = arith.constant 0 : index
    %c0_22 = arith.constant 0 : index
    %79 = vector.load %arg1[%78, %c0_21, %c0_22] : memref<12x8x384xf32, #tpu.memory_space<vmem>>, vector<1x8x384xf32>
    %80 = vector.shape_cast %79 : vector<1x8x384xf32> to vector<8x384xf32>
    %81 = arith.truncf %73 : vector<8x128xf32> to vector<8x128xbf16>
    %c0_23 = arith.constant 0 : index
    %c0_24 = arith.constant 0 : index
    %82 = vector.load %arg2[%c0_23, %c0_24] : memref<128x384xbf16, #tpu.memory_space<vmem>>, vector<128x384xbf16>
    %cst_25 = arith.constant dense<0.000000e+00> : vector<8x384xf32>
    %83 = tpu.matmul %81, %82, %cst_25 {dimension_numbers = #tpu.dot_dimension_numbers<[1], [0], [0], [1], [0, 0, 1, 1], [], []>} : vector<8x128xbf16>, vector<128x384xbf16>, vector<8x384xf32> -> vector<8x384xf32>
    %84 = vector.extract_strided_slice %80 {offsets = [0, 0], sizes = [8, 128], strides = [1, 1]} : vector<8x384xf32> to vector<8x128xf32>
    %85 = vector.extract_strided_slice %83 {offsets = [0, 0], sizes = [8, 128], strides = [1, 1]} : vector<8x384xf32> to vector<8x128xf32>
    %86 = arith.addf %84, %85 : vector<8x128xf32>
    %87 = arith.negf %86 : vector<8x128xf32>
    %88 = math.exp %87 : vector<8x128xf32>
    %cst_26 = arith.constant 1.000000e+00 : f32
    %89 = vector.broadcast %cst_26 : f32 to vector<8x128xf32>
    %90 = arith.addf %89, %88 : vector<8x128xf32>
    %91 = arith.divf %89, %90 : vector<8x128xf32>
    %92 = vector.extract_strided_slice %80 {offsets = [0, 128], sizes = [8, 128], strides = [1, 1]} : vector<8x384xf32> to vector<8x128xf32>
    %93 = vector.extract_strided_slice %83 {offsets = [0, 128], sizes = [8, 128], strides = [1, 1]} : vector<8x384xf32> to vector<8x128xf32>
    %94 = arith.addf %92, %93 : vector<8x128xf32>
    %95 = arith.negf %94 : vector<8x128xf32>
    %96 = math.exp %95 : vector<8x128xf32>
    %cst_27 = arith.constant 1.000000e+00 : f32
    %97 = vector.broadcast %cst_27 : f32 to vector<8x128xf32>
    %98 = arith.addf %97, %96 : vector<8x128xf32>
    %99 = arith.divf %97, %98 : vector<8x128xf32>
    %100 = vector.extract_strided_slice %80 {offsets = [0, 256], sizes = [8, 128], strides = [1, 1]} : vector<8x384xf32> to vector<8x128xf32>
    %101 = vector.extract_strided_slice %83 {offsets = [0, 256], sizes = [8, 128], strides = [1, 1]} : vector<8x384xf32> to vector<8x128xf32>
    %102 = arith.addf %101, %2 : vector<8x128xf32>
    %103 = arith.mulf %91, %102 : vector<8x128xf32>
    %104 = arith.addf %100, %103 : vector<8x128xf32>
    %105 = math.tanh %104 : vector<8x128xf32>
    %cst_28 = arith.constant 1.000000e+00 : f32
    %106 = vector.broadcast %cst_28 : f32 to vector<8x128xf32>
    %107 = arith.subf %106, %99 : vector<8x128xf32>
    %108 = arith.mulf %107, %105 : vector<8x128xf32>
    %109 = arith.mulf %99, %73 : vector<8x128xf32>
    %110 = arith.addf %108, %109 : vector<8x128xf32>
    %111 = arith.index_cast %c2_i32 : i32 to index
    %c0_29 = arith.constant 0 : index
    %c0_30 = arith.constant 0 : index
    %112 = vector.load %arg4[%111, %c0_29, %c0_30] : memref<12x8x128xf32, #tpu.memory_space<vmem>>, vector<1x8x128xf32>
    %113 = vector.shape_cast %112 : vector<1x8x128xf32> to vector<8x128xf32>
    %114 = vector.shape_cast %110 : vector<8x128xf32> to vector<1x8x128xf32>
    tpu.vector_store %arg4[%111, %c0_29, %c0_30], %114 {strides = array<i32>} : memref<12x8x128xf32, #tpu.memory_space<vmem>>, vector<1x8x128xf32>,
    %c3_i32 = arith.constant 3 : i32
    %115 = arith.index_cast %c3_i32 : i32 to index
    %c0_31 = arith.constant 0 : index
    %c0_32 = arith.constant 0 : index
    %116 = vector.load %arg1[%115, %c0_31, %c0_32] : memref<12x8x384xf32, #tpu.memory_space<vmem>>, vector<1x8x384xf32>
    %117 = vector.shape_cast %116 : vector<1x8x384xf32> to vector<8x384xf32>
    %118 = arith.truncf %110 : vector<8x128xf32> to vector<8x128xbf16>
    %c0_33 = arith.constant 0 : index
    %c0_34 = arith.constant 0 : index
    %119 = vector.load %arg2[%c0_33, %c0_34] : memref<128x384xbf16, #tpu.memory_space<vmem>>, vector<128x384xbf16>
    %cst_35 = arith.constant dense<0.000000e+00> : vector<8x384xf32>
    %120 = tpu.matmul %118, %119, %cst_35 {dimension_numbers = #tpu.dot_dimension_numbers<[1], [0], [0], [1], [0, 0, 1, 1], [], []>} : vector<8x128xbf16>, vector<128x384xbf16>, vector<8x384xf32> -> vector<8x384xf32>
    %121 = vector.extract_strided_slice %117 {offsets = [0, 0], sizes = [8, 128], strides = [1, 1]} : vector<8x384xf32> to vector<8x128xf32>
    %122 = vector.extract_strided_slice %120 {offsets = [0, 0], sizes = [8, 128], strides = [1, 1]} : vector<8x384xf32> to vector<8x128xf32>
    %123 = arith.addf %121, %122 : vector<8x128xf32>
    %124 = arith.negf %123 : vector<8x128xf32>
    %125 = math.exp %124 : vector<8x128xf32>
    %cst_36 = arith.constant 1.000000e+00 : f32
    %126 = vector.broadcast %cst_36 : f32 to vector<8x128xf32>
    %127 = arith.addf %126, %125 : vector<8x128xf32>
    %128 = arith.divf %126, %127 : vector<8x128xf32>
    %129 = vector.extract_strided_slice %117 {offsets = [0, 128], sizes = [8, 128], strides = [1, 1]} : vector<8x384xf32> to vector<8x128xf32>
    %130 = vector.extract_strided_slice %120 {offsets = [0, 128], sizes = [8, 128], strides = [1, 1]} : vector<8x384xf32> to vector<8x128xf32>
    %131 = arith.addf %129, %130 : vector<8x128xf32>
    %132 = arith.negf %131 : vector<8x128xf32>
    %133 = math.exp %132 : vector<8x128xf32>
    %cst_37 = arith.constant 1.000000e+00 : f32
    %134 = vector.broadcast %cst_37 : f32 to vector<8x128xf32>
    %135 = arith.addf %134, %133 : vector<8x128xf32>
    %136 = arith.divf %134, %135 : vector<8x128xf32>
    %137 = vector.extract_strided_slice %117 {offsets = [0, 256], sizes = [8, 128], strides = [1, 1]} : vector<8x384xf32> to vector<8x128xf32>
    %138 = vector.extract_strided_slice %120 {offsets = [0, 256], sizes = [8, 128], strides = [1, 1]} : vector<8x384xf32> to vector<8x128xf32>
    %139 = arith.addf %138, %2 : vector<8x128xf32>
    %140 = arith.mulf %128, %139 : vector<8x128xf32>
    %141 = arith.addf %137, %140 : vector<8x128xf32>
    %142 = math.tanh %141 : vector<8x128xf32>
    %cst_38 = arith.constant 1.000000e+00 : f32
    %143 = vector.broadcast %cst_38 : f32 to vector<8x128xf32>
    %144 = arith.subf %143, %136 : vector<8x128xf32>
    %145 = arith.mulf %144, %142 : vector<8x128xf32>
    %146 = arith.mulf %136, %110 : vector<8x128xf32>
    %147 = arith.addf %145, %146 : vector<8x128xf32>
    %148 = arith.index_cast %c3_i32 : i32 to index
    %c0_39 = arith.constant 0 : index
    %c0_40 = arith.constant 0 : index
    %149 = vector.load %arg4[%148, %c0_39, %c0_40] : memref<12x8x128xf32, #tpu.memory_space<vmem>>, vector<1x8x128xf32>
    %150 = vector.shape_cast %149 : vector<1x8x128xf32> to vector<8x128xf32>
    %151 = vector.shape_cast %147 : vector<8x128xf32> to vector<1x8x128xf32>
    tpu.vector_store %arg4[%148, %c0_39, %c0_40], %151 {strides = array<i32>} : memref<12x8x128xf32, #tpu.memory_space<vmem>>, vector<1x8x128xf32>,
    %c4_i32 = arith.constant 4 : i32
    %152 = arith.index_cast %c4_i32 : i32 to index
    %c0_41 = arith.constant 0 : index
    %c0_42 = arith.constant 0 : index
    %153 = vector.load %arg1[%152, %c0_41, %c0_42] : memref<12x8x384xf32, #tpu.memory_space<vmem>>, vector<1x8x384xf32>
    %154 = vector.shape_cast %153 : vector<1x8x384xf32> to vector<8x384xf32>
    %155 = arith.truncf %147 : vector<8x128xf32> to vector<8x128xbf16>
    %c0_43 = arith.constant 0 : index
    %c0_44 = arith.constant 0 : index
    %156 = vector.load %arg2[%c0_43, %c0_44] : memref<128x384xbf16, #tpu.memory_space<vmem>>, vector<128x384xbf16>
    %cst_45 = arith.constant dense<0.000000e+00> : vector<8x384xf32>
    %157 = tpu.matmul %155, %156, %cst_45 {dimension_numbers = #tpu.dot_dimension_numbers<[1], [0], [0], [1], [0, 0, 1, 1], [], []>} : vector<8x128xbf16>, vector<128x384xbf16>, vector<8x384xf32> -> vector<8x384xf32>
    %158 = vector.extract_strided_slice %154 {offsets = [0, 0], sizes = [8, 128], strides = [1, 1]} : vector<8x384xf32> to vector<8x128xf32>
    %159 = vector.extract_strided_slice %157 {offsets = [0, 0], sizes = [8, 128], strides = [1, 1]} : vector<8x384xf32> to vector<8x128xf32>
    %160 = arith.addf %158, %159 : vector<8x128xf32>
    %161 = arith.negf %160 : vector<8x128xf32>
    %162 = math.exp %161 : vector<8x128xf32>
    %cst_46 = arith.constant 1.000000e+00 : f32
    %163 = vector.broadcast %cst_46 : f32 to vector<8x128xf32>
    %164 = arith.addf %163, %162 : vector<8x128xf32>
    %165 = arith.divf %163, %164 : vector<8x128xf32>
    %166 = vector.extract_strided_slice %154 {offsets = [0, 128], sizes = [8, 128], strides = [1, 1]} : vector<8x384xf32> to vector<8x128xf32>
    %167 = vector.extract_strided_slice %157 {offsets = [0, 128], sizes = [8, 128], strides = [1, 1]} : vector<8x384xf32> to vector<8x128xf32>
    %168 = arith.addf %166, %167 : vector<8x128xf32>
    %169 = arith.negf %168 : vector<8x128xf32>
    %170 = math.exp %169 : vector<8x128xf32>
    %cst_47 = arith.constant 1.000000e+00 : f32
    %171 = vector.broadcast %cst_47 : f32 to vector<8x128xf32>
    %172 = arith.addf %171, %170 : vector<8x128xf32>
    %173 = arith.divf %171, %172 : vector<8x128xf32>
    %174 = vector.extract_strided_slice %154 {offsets = [0, 256], sizes = [8, 128], strides = [1, 1]} : vector<8x384xf32> to vector<8x128xf32>
    %175 = vector.extract_strided_slice %157 {offsets = [0, 256], sizes = [8, 128], strides = [1, 1]} : vector<8x384xf32> to vector<8x128xf32>
    %176 = arith.addf %175, %2 : vector<8x128xf32>
    %177 = arith.mulf %165, %176 : vector<8x128xf32>
    %178 = arith.addf %174, %177 : vector<8x128xf32>
    %179 = math.tanh %178 : vector<8x128xf32>
    %cst_48 = arith.constant 1.000000e+00 : f32
    %180 = vector.broadcast %cst_48 : f32 to vector<8x128xf32>
    %181 = arith.subf %180, %173 : vector<8x128xf32>
    %182 = arith.mulf %181, %179 : vector<8x128xf32>
    %183 = arith.mulf %173, %147 : vector<8x128xf32>
    %184 = arith.addf %182, %183 : vector<8x128xf32>
    %185 = arith.index_cast %c4_i32 : i32 to index
    %c0_49 = arith.constant 0 : index
    %c0_50 = arith.constant 0 : index
    %186 = vector.load %arg4[%185, %c0_49, %c0_50] : memref<12x8x128xf32, #tpu.memory_space<vmem>>, vector<1x8x128xf32>
    %187 = vector.shape_cast %186 : vector<1x8x128xf32> to vector<8x128xf32>
    %188 = vector.shape_cast %184 : vector<8x128xf32> to vector<1x8x128xf32>
    tpu.vector_store %arg4[%185, %c0_49, %c0_50], %188 {strides = array<i32>} : memref<12x8x128xf32, #tpu.memory_space<vmem>>, vector<1x8x128xf32>,
    %c5_i32 = arith.constant 5 : i32
    %189 = arith.index_cast %c5_i32 : i32 to index
    %c0_51 = arith.constant 0 : index
    %c0_52 = arith.constant 0 : index
    %190 = vector.load %arg1[%189, %c0_51, %c0_52] : memref<12x8x384xf32, #tpu.memory_space<vmem>>, vector<1x8x384xf32>
    %191 = vector.shape_cast %190 : vector<1x8x384xf32> to vector<8x384xf32>
    %192 = arith.truncf %184 : vector<8x128xf32> to vector<8x128xbf16>
    %c0_53 = arith.constant 0 : index
    %c0_54 = arith.constant 0 : index
    %193 = vector.load %arg2[%c0_53, %c0_54] : memref<128x384xbf16, #tpu.memory_space<vmem>>, vector<128x384xbf16>
    %cst_55 = arith.constant dense<0.000000e+00> : vector<8x384xf32>
    %194 = tpu.matmul %192, %193, %cst_55 {dimension_numbers = #tpu.dot_dimension_numbers<[1], [0], [0], [1], [0, 0, 1, 1], [], []>} : vector<8x128xbf16>, vector<128x384xbf16>, vector<8x384xf32> -> vector<8x384xf32>
    %195 = vector.extract_strided_slice %191 {offsets = [0, 0], sizes = [8, 128], strides = [1, 1]} : vector<8x384xf32> to vector<8x128xf32>
    %196 = vector.extract_strided_slice %194 {offsets = [0, 0], sizes = [8, 128], strides = [1, 1]} : vector<8x384xf32> to vector<8x128xf32>
    %197 = arith.addf %195, %196 : vector<8x128xf32>
    %198 = arith.negf %197 : vector<8x128xf32>
    %199 = math.exp %198 : vector<8x128xf32>
    %cst_56 = arith.constant 1.000000e+00 : f32
    %200 = vector.broadcast %cst_56 : f32 to vector<8x128xf32>
    %201 = arith.addf %200, %199 : vector<8x128xf32>
    %202 = arith.divf %200, %201 : vector<8x128xf32>
    %203 = vector.extract_strided_slice %191 {offsets = [0, 128], sizes = [8, 128], strides = [1, 1]} : vector<8x384xf32> to vector<8x128xf32>
    %204 = vector.extract_strided_slice %194 {offsets = [0, 128], sizes = [8, 128], strides = [1, 1]} : vector<8x384xf32> to vector<8x128xf32>
    %205 = arith.addf %203, %204 : vector<8x128xf32>
    %206 = arith.negf %205 : vector<8x128xf32>
    %207 = math.exp %206 : vector<8x128xf32>
    %cst_57 = arith.constant 1.000000e+00 : f32
    %208 = vector.broadcast %cst_57 : f32 to vector<8x128xf32>
    %209 = arith.addf %208, %207 : vector<8x128xf32>
    %210 = arith.divf %208, %209 : vector<8x128xf32>
    %211 = vector.extract_strided_slice %191 {offsets = [0, 256], sizes = [8, 128], strides = [1, 1]} : vector<8x384xf32> to vector<8x128xf32>
    %212 = vector.extract_strided_slice %194 {offsets = [0, 256], sizes = [8, 128], strides = [1, 1]} : vector<8x384xf32> to vector<8x128xf32>
    %213 = arith.addf %212, %2 : vector<8x128xf32>
    %214 = arith.mulf %202, %213 : vector<8x128xf32>
    %215 = arith.addf %211, %214 : vector<8x128xf32>
    %216 = math.tanh %215 : vector<8x128xf32>
    %cst_58 = arith.constant 1.000000e+00 : f32
    %217 = vector.broadcast %cst_58 : f32 to vector<8x128xf32>
    %218 = arith.subf %217, %210 : vector<8x128xf32>
    %219 = arith.mulf %218, %216 : vector<8x128xf32>
    %220 = arith.mulf %210, %184 : vector<8x128xf32>
    %221 = arith.addf %219, %220 : vector<8x128xf32>
    %222 = arith.index_cast %c5_i32 : i32 to index
    %c0_59 = arith.constant 0 : index
    %c0_60 = arith.constant 0 : index
    %223 = vector.load %arg4[%222, %c0_59, %c0_60] : memref<12x8x128xf32, #tpu.memory_space<vmem>>, vector<1x8x128xf32>
    %224 = vector.shape_cast %223 : vector<1x8x128xf32> to vector<8x128xf32>
    %225 = vector.shape_cast %221 : vector<8x128xf32> to vector<1x8x128xf32>
    tpu.vector_store %arg4[%222, %c0_59, %c0_60], %225 {strides = array<i32>} : memref<12x8x128xf32, #tpu.memory_space<vmem>>, vector<1x8x128xf32>,
    %c6_i32 = arith.constant 6 : i32
    %226 = arith.index_cast %c6_i32 : i32 to index
    %c0_61 = arith.constant 0 : index
    %c0_62 = arith.constant 0 : index
    %227 = vector.load %arg1[%226, %c0_61, %c0_62] : memref<12x8x384xf32, #tpu.memory_space<vmem>>, vector<1x8x384xf32>
    %228 = vector.shape_cast %227 : vector<1x8x384xf32> to vector<8x384xf32>
    %229 = arith.truncf %221 : vector<8x128xf32> to vector<8x128xbf16>
    %c0_63 = arith.constant 0 : index
    %c0_64 = arith.constant 0 : index
    %230 = vector.load %arg2[%c0_63, %c0_64] : memref<128x384xbf16, #tpu.memory_space<vmem>>, vector<128x384xbf16>
    %cst_65 = arith.constant dense<0.000000e+00> : vector<8x384xf32>
    %231 = tpu.matmul %229, %230, %cst_65 {dimension_numbers = #tpu.dot_dimension_numbers<[1], [0], [0], [1], [0, 0, 1, 1], [], []>} : vector<8x128xbf16>, vector<128x384xbf16>, vector<8x384xf32> -> vector<8x384xf32>
    %232 = vector.extract_strided_slice %228 {offsets = [0, 0], sizes = [8, 128], strides = [1, 1]} : vector<8x384xf32> to vector<8x128xf32>
    %233 = vector.extract_strided_slice %231 {offsets = [0, 0], sizes = [8, 128], strides = [1, 1]} : vector<8x384xf32> to vector<8x128xf32>
    %234 = arith.addf %232, %233 : vector<8x128xf32>
    %235 = arith.negf %234 : vector<8x128xf32>
    %236 = math.exp %235 : vector<8x128xf32>
    %cst_66 = arith.constant 1.000000e+00 : f32
    %237 = vector.broadcast %cst_66 : f32 to vector<8x128xf32>
    %238 = arith.addf %237, %236 : vector<8x128xf32>
    %239 = arith.divf %237, %238 : vector<8x128xf32>
    %240 = vector.extract_strided_slice %228 {offsets = [0, 128], sizes = [8, 128], strides = [1, 1]} : vector<8x384xf32> to vector<8x128xf32>
    %241 = vector.extract_strided_slice %231 {offsets = [0, 128], sizes = [8, 128], strides = [1, 1]} : vector<8x384xf32> to vector<8x128xf32>
    %242 = arith.addf %240, %241 : vector<8x128xf32>
    %243 = arith.negf %242 : vector<8x128xf32>
    %244 = math.exp %243 : vector<8x128xf32>
    %cst_67 = arith.constant 1.000000e+00 : f32
    %245 = vector.broadcast %cst_67 : f32 to vector<8x128xf32>
    %246 = arith.addf %245, %244 : vector<8x128xf32>
    %247 = arith.divf %245, %246 : vector<8x128xf32>
    %248 = vector.extract_strided_slice %228 {offsets = [0, 256], sizes = [8, 128], strides = [1, 1]} : vector<8x384xf32> to vector<8x128xf32>
    %249 = vector.extract_strided_slice %231 {offsets = [0, 256], sizes = [8, 128], strides = [1, 1]} : vector<8x384xf32> to vector<8x128xf32>
    %250 = arith.addf %249, %2 : vector<8x128xf32>
    %251 = arith.mulf %239, %250 : vector<8x128xf32>
    %252 = arith.addf %248, %251 : vector<8x128xf32>
    %253 = math.tanh %252 : vector<8x128xf32>
    %cst_68 = arith.constant 1.000000e+00 : f32
    %254 = vector.broadcast %cst_68 : f32 to vector<8x128xf32>
    %255 = arith.subf %254, %247 : vector<8x128xf32>
    %256 = arith.mulf %255, %253 : vector<8x128xf32>
    %257 = arith.mulf %247, %221 : vector<8x128xf32>
    %258 = arith.addf %256, %257 : vector<8x128xf32>
    %259 = arith.index_cast %c6_i32 : i32 to index
    %c0_69 = arith.constant 0 : index
    %c0_70 = arith.constant 0 : index
    %260 = vector.load %arg4[%259, %c0_69, %c0_70] : memref<12x8x128xf32, #tpu.memory_space<vmem>>, vector<1x8x128xf32>
    %261 = vector.shape_cast %260 : vector<1x8x128xf32> to vector<8x128xf32>
    %262 = vector.shape_cast %258 : vector<8x128xf32> to vector<1x8x128xf32>
    tpu.vector_store %arg4[%259, %c0_69, %c0_70], %262 {strides = array<i32>} : memref<12x8x128xf32, #tpu.memory_space<vmem>>, vector<1x8x128xf32>,
    %c7_i32 = arith.constant 7 : i32
    %263 = arith.index_cast %c7_i32 : i32 to index
    %c0_71 = arith.constant 0 : index
    %c0_72 = arith.constant 0 : index
    %264 = vector.load %arg1[%263, %c0_71, %c0_72] : memref<12x8x384xf32, #tpu.memory_space<vmem>>, vector<1x8x384xf32>
    %265 = vector.shape_cast %264 : vector<1x8x384xf32> to vector<8x384xf32>
    %266 = arith.truncf %258 : vector<8x128xf32> to vector<8x128xbf16>
    %c0_73 = arith.constant 0 : index
    %c0_74 = arith.constant 0 : index
    %267 = vector.load %arg2[%c0_73, %c0_74] : memref<128x384xbf16, #tpu.memory_space<vmem>>, vector<128x384xbf16>
    %cst_75 = arith.constant dense<0.000000e+00> : vector<8x384xf32>
    %268 = tpu.matmul %266, %267, %cst_75 {dimension_numbers = #tpu.dot_dimension_numbers<[1], [0], [0], [1], [0, 0, 1, 1], [], []>} : vector<8x128xbf16>, vector<128x384xbf16>, vector<8x384xf32> -> vector<8x384xf32>
    %269 = vector.extract_strided_slice %265 {offsets = [0, 0], sizes = [8, 128], strides = [1, 1]} : vector<8x384xf32> to vector<8x128xf32>
    %270 = vector.extract_strided_slice %268 {offsets = [0, 0], sizes = [8, 128], strides = [1, 1]} : vector<8x384xf32> to vector<8x128xf32>
    %271 = arith.addf %269, %270 : vector<8x128xf32>
    %272 = arith.negf %271 : vector<8x128xf32>
    %273 = math.exp %272 : vector<8x128xf32>
    %cst_76 = arith.constant 1.000000e+00 : f32
    %274 = vector.broadcast %cst_76 : f32 to vector<8x128xf32>
    %275 = arith.addf %274, %273 : vector<8x128xf32>
    %276 = arith.divf %274, %275 : vector<8x128xf32>
    %277 = vector.extract_strided_slice %265 {offsets = [0, 128], sizes = [8, 128], strides = [1, 1]} : vector<8x384xf32> to vector<8x128xf32>
    %278 = vector.extract_strided_slice %268 {offsets = [0, 128], sizes = [8, 128], strides = [1, 1]} : vector<8x384xf32> to vector<8x128xf32>
    %279 = arith.addf %277, %278 : vector<8x128xf32>
    %280 = arith.negf %279 : vector<8x128xf32>
    %281 = math.exp %280 : vector<8x128xf32>
    %cst_77 = arith.constant 1.000000e+00 : f32
    %282 = vector.broadcast %cst_77 : f32 to vector<8x128xf32>
    %283 = arith.addf %282, %281 : vector<8x128xf32>
    %284 = arith.divf %282, %283 : vector<8x128xf32>
    %285 = vector.extract_strided_slice %265 {offsets = [0, 256], sizes = [8, 128], strides = [1, 1]} : vector<8x384xf32> to vector<8x128xf32>
    %286 = vector.extract_strided_slice %268 {offsets = [0, 256], sizes = [8, 128], strides = [1, 1]} : vector<8x384xf32> to vector<8x128xf32>
    %287 = arith.addf %286, %2 : vector<8x128xf32>
    %288 = arith.mulf %276, %287 : vector<8x128xf32>
    %289 = arith.addf %285, %288 : vector<8x128xf32>
    %290 = math.tanh %289 : vector<8x128xf32>
    %cst_78 = arith.constant 1.000000e+00 : f32
    %291 = vector.broadcast %cst_78 : f32 to vector<8x128xf32>
    %292 = arith.subf %291, %284 : vector<8x128xf32>
    %293 = arith.mulf %292, %290 : vector<8x128xf32>
    %294 = arith.mulf %284, %258 : vector<8x128xf32>
    %295 = arith.addf %293, %294 : vector<8x128xf32>
    %296 = arith.index_cast %c7_i32 : i32 to index
    %c0_79 = arith.constant 0 : index
    %c0_80 = arith.constant 0 : index
    %297 = vector.load %arg4[%296, %c0_79, %c0_80] : memref<12x8x128xf32, #tpu.memory_space<vmem>>, vector<1x8x128xf32>
    %298 = vector.shape_cast %297 : vector<1x8x128xf32> to vector<8x128xf32>
    %299 = vector.shape_cast %295 : vector<8x128xf32> to vector<1x8x128xf32>
    tpu.vector_store %arg4[%296, %c0_79, %c0_80], %299 {strides = array<i32>} : memref<12x8x128xf32, #tpu.memory_space<vmem>>, vector<1x8x128xf32>,
    %c8_i32 = arith.constant 8 : i32
    %300 = arith.index_cast %c8_i32 : i32 to index
    %c0_81 = arith.constant 0 : index
    %c0_82 = arith.constant 0 : index
    %301 = vector.load %arg1[%300, %c0_81, %c0_82] : memref<12x8x384xf32, #tpu.memory_space<vmem>>, vector<1x8x384xf32>
    %302 = vector.shape_cast %301 : vector<1x8x384xf32> to vector<8x384xf32>
    %303 = arith.truncf %295 : vector<8x128xf32> to vector<8x128xbf16>
    %c0_83 = arith.constant 0 : index
    %c0_84 = arith.constant 0 : index
    %304 = vector.load %arg2[%c0_83, %c0_84] : memref<128x384xbf16, #tpu.memory_space<vmem>>, vector<128x384xbf16>
    %cst_85 = arith.constant dense<0.000000e+00> : vector<8x384xf32>
    %305 = tpu.matmul %303, %304, %cst_85 {dimension_numbers = #tpu.dot_dimension_numbers<[1], [0], [0], [1], [0, 0, 1, 1], [], []>} : vector<8x128xbf16>, vector<128x384xbf16>, vector<8x384xf32> -> vector<8x384xf32>
    %306 = vector.extract_strided_slice %302 {offsets = [0, 0], sizes = [8, 128], strides = [1, 1]} : vector<8x384xf32> to vector<8x128xf32>
    %307 = vector.extract_strided_slice %305 {offsets = [0, 0], sizes = [8, 128], strides = [1, 1]} : vector<8x384xf32> to vector<8x128xf32>
    %308 = arith.addf %306, %307 : vector<8x128xf32>
    %309 = arith.negf %308 : vector<8x128xf32>
    %310 = math.exp %309 : vector<8x128xf32>
    %cst_86 = arith.constant 1.000000e+00 : f32
    %311 = vector.broadcast %cst_86 : f32 to vector<8x128xf32>
    %312 = arith.addf %311, %310 : vector<8x128xf32>
    %313 = arith.divf %311, %312 : vector<8x128xf32>
    %314 = vector.extract_strided_slice %302 {offsets = [0, 128], sizes = [8, 128], strides = [1, 1]} : vector<8x384xf32> to vector<8x128xf32>
    %315 = vector.extract_strided_slice %305 {offsets = [0, 128], sizes = [8, 128], strides = [1, 1]} : vector<8x384xf32> to vector<8x128xf32>
    %316 = arith.addf %314, %315 : vector<8x128xf32>
    %317 = arith.negf %316 : vector<8x128xf32>
    %318 = math.exp %317 : vector<8x128xf32>
    %cst_87 = arith.constant 1.000000e+00 : f32
    %319 = vector.broadcast %cst_87 : f32 to vector<8x128xf32>
    %320 = arith.addf %319, %318 : vector<8x128xf32>
    %321 = arith.divf %319, %320 : vector<8x128xf32>
    %322 = vector.extract_strided_slice %302 {offsets = [0, 256], sizes = [8, 128], strides = [1, 1]} : vector<8x384xf32> to vector<8x128xf32>
    %323 = vector.extract_strided_slice %305 {offsets = [0, 256], sizes = [8, 128], strides = [1, 1]} : vector<8x384xf32> to vector<8x128xf32>
    %324 = arith.addf %323, %2 : vector<8x128xf32>
    %325 = arith.mulf %313, %324 : vector<8x128xf32>
    %326 = arith.addf %322, %325 : vector<8x128xf32>
    %327 = math.tanh %326 : vector<8x128xf32>
    %cst_88 = arith.constant 1.000000e+00 : f32
    %328 = vector.broadcast %cst_88 : f32 to vector<8x128xf32>
    %329 = arith.subf %328, %321 : vector<8x128xf32>
    %330 = arith.mulf %329, %327 : vector<8x128xf32>
    %331 = arith.mulf %321, %295 : vector<8x128xf32>
    %332 = arith.addf %330, %331 : vector<8x128xf32>
    %333 = arith.index_cast %c8_i32 : i32 to index
    %c0_89 = arith.constant 0 : index
    %c0_90 = arith.constant 0 : index
    %334 = vector.load %arg4[%333, %c0_89, %c0_90] : memref<12x8x128xf32, #tpu.memory_space<vmem>>, vector<1x8x128xf32>
    %335 = vector.shape_cast %334 : vector<1x8x128xf32> to vector<8x128xf32>
    %336 = vector.shape_cast %332 : vector<8x128xf32> to vector<1x8x128xf32>
    tpu.vector_store %arg4[%333, %c0_89, %c0_90], %336 {strides = array<i32>} : memref<12x8x128xf32, #tpu.memory_space<vmem>>, vector<1x8x128xf32>,
    %c9_i32 = arith.constant 9 : i32
    %337 = arith.index_cast %c9_i32 : i32 to index
    %c0_91 = arith.constant 0 : index
    %c0_92 = arith.constant 0 : index
    %338 = vector.load %arg1[%337, %c0_91, %c0_92] : memref<12x8x384xf32, #tpu.memory_space<vmem>>, vector<1x8x384xf32>
    %339 = vector.shape_cast %338 : vector<1x8x384xf32> to vector<8x384xf32>
    %340 = arith.truncf %332 : vector<8x128xf32> to vector<8x128xbf16>
    %c0_93 = arith.constant 0 : index
    %c0_94 = arith.constant 0 : index
    %341 = vector.load %arg2[%c0_93, %c0_94] : memref<128x384xbf16, #tpu.memory_space<vmem>>, vector<128x384xbf16>
    %cst_95 = arith.constant dense<0.000000e+00> : vector<8x384xf32>
    %342 = tpu.matmul %340, %341, %cst_95 {dimension_numbers = #tpu.dot_dimension_numbers<[1], [0], [0], [1], [0, 0, 1, 1], [], []>} : vector<8x128xbf16>, vector<128x384xbf16>, vector<8x384xf32> -> vector<8x384xf32>
    %343 = vector.extract_strided_slice %339 {offsets = [0, 0], sizes = [8, 128], strides = [1, 1]} : vector<8x384xf32> to vector<8x128xf32>
    %344 = vector.extract_strided_slice %342 {offsets = [0, 0], sizes = [8, 128], strides = [1, 1]} : vector<8x384xf32> to vector<8x128xf32>
    %345 = arith.addf %343, %344 : vector<8x128xf32>
    %346 = arith.negf %345 : vector<8x128xf32>
    %347 = math.exp %346 : vector<8x128xf32>
    %cst_96 = arith.constant 1.000000e+00 : f32
    %348 = vector.broadcast %cst_96 : f32 to vector<8x128xf32>
    %349 = arith.addf %348, %347 : vector<8x128xf32>
    %350 = arith.divf %348, %349 : vector<8x128xf32>
    %351 = vector.extract_strided_slice %339 {offsets = [0, 128], sizes = [8, 128], strides = [1, 1]} : vector<8x384xf32> to vector<8x128xf32>
    %352 = vector.extract_strided_slice %342 {offsets = [0, 128], sizes = [8, 128], strides = [1, 1]} : vector<8x384xf32> to vector<8x128xf32>
    %353 = arith.addf %351, %352 : vector<8x128xf32>
    %354 = arith.negf %353 : vector<8x128xf32>
    %355 = math.exp %354 : vector<8x128xf32>
    %cst_97 = arith.constant 1.000000e+00 : f32
    %356 = vector.broadcast %cst_97 : f32 to vector<8x128xf32>
    %357 = arith.addf %356, %355 : vector<8x128xf32>
    %358 = arith.divf %356, %357 : vector<8x128xf32>
    %359 = vector.extract_strided_slice %339 {offsets = [0, 256], sizes = [8, 128], strides = [1, 1]} : vector<8x384xf32> to vector<8x128xf32>
    %360 = vector.extract_strided_slice %342 {offsets = [0, 256], sizes = [8, 128], strides = [1, 1]} : vector<8x384xf32> to vector<8x128xf32>
    %361 = arith.addf %360, %2 : vector<8x128xf32>
    %362 = arith.mulf %350, %361 : vector<8x128xf32>
    %363 = arith.addf %359, %362 : vector<8x128xf32>
    %364 = math.tanh %363 : vector<8x128xf32>
    %cst_98 = arith.constant 1.000000e+00 : f32
    %365 = vector.broadcast %cst_98 : f32 to vector<8x128xf32>
    %366 = arith.subf %365, %358 : vector<8x128xf32>
    %367 = arith.mulf %366, %364 : vector<8x128xf32>
    %368 = arith.mulf %358, %332 : vector<8x128xf32>
    %369 = arith.addf %367, %368 : vector<8x128xf32>
    %370 = arith.index_cast %c9_i32 : i32 to index
    %c0_99 = arith.constant 0 : index
    %c0_100 = arith.constant 0 : index
    %371 = vector.load %arg4[%370, %c0_99, %c0_100] : memref<12x8x128xf32, #tpu.memory_space<vmem>>, vector<1x8x128xf32>
    %372 = vector.shape_cast %371 : vector<1x8x128xf32> to vector<8x128xf32>
    %373 = vector.shape_cast %369 : vector<8x128xf32> to vector<1x8x128xf32>
    tpu.vector_store %arg4[%370, %c0_99, %c0_100], %373 {strides = array<i32>} : memref<12x8x128xf32, #tpu.memory_space<vmem>>, vector<1x8x128xf32>,
    %c10_i32 = arith.constant 10 : i32
    %374 = arith.index_cast %c10_i32 : i32 to index
    %c0_101 = arith.constant 0 : index
    %c0_102 = arith.constant 0 : index
    %375 = vector.load %arg1[%374, %c0_101, %c0_102] : memref<12x8x384xf32, #tpu.memory_space<vmem>>, vector<1x8x384xf32>
    %376 = vector.shape_cast %375 : vector<1x8x384xf32> to vector<8x384xf32>
    %377 = arith.truncf %369 : vector<8x128xf32> to vector<8x128xbf16>
    %c0_103 = arith.constant 0 : index
    %c0_104 = arith.constant 0 : index
    %378 = vector.load %arg2[%c0_103, %c0_104] : memref<128x384xbf16, #tpu.memory_space<vmem>>, vector<128x384xbf16>
    %cst_105 = arith.constant dense<0.000000e+00> : vector<8x384xf32>
    %379 = tpu.matmul %377, %378, %cst_105 {dimension_numbers = #tpu.dot_dimension_numbers<[1], [0], [0], [1], [0, 0, 1, 1], [], []>} : vector<8x128xbf16>, vector<128x384xbf16>, vector<8x384xf32> -> vector<8x384xf32>
    %380 = vector.extract_strided_slice %376 {offsets = [0, 0], sizes = [8, 128], strides = [1, 1]} : vector<8x384xf32> to vector<8x128xf32>
    %381 = vector.extract_strided_slice %379 {offsets = [0, 0], sizes = [8, 128], strides = [1, 1]} : vector<8x384xf32> to vector<8x128xf32>
    %382 = arith.addf %380, %381 : vector<8x128xf32>
    %383 = arith.negf %382 : vector<8x128xf32>
    %384 = math.exp %383 : vector<8x128xf32>
    %cst_106 = arith.constant 1.000000e+00 : f32
    %385 = vector.broadcast %cst_106 : f32 to vector<8x128xf32>
    %386 = arith.addf %385, %384 : vector<8x128xf32>
    %387 = arith.divf %385, %386 : vector<8x128xf32>
    %388 = vector.extract_strided_slice %376 {offsets = [0, 128], sizes = [8, 128], strides = [1, 1]} : vector<8x384xf32> to vector<8x128xf32>
    %389 = vector.extract_strided_slice %379 {offsets = [0, 128], sizes = [8, 128], strides = [1, 1]} : vector<8x384xf32> to vector<8x128xf32>
    %390 = arith.addf %388, %389 : vector<8x128xf32>
    %391 = arith.negf %390 : vector<8x128xf32>
    %392 = math.exp %391 : vector<8x128xf32>
    %cst_107 = arith.constant 1.000000e+00 : f32
    %393 = vector.broadcast %cst_107 : f32 to vector<8x128xf32>
    %394 = arith.addf %393, %392 : vector<8x128xf32>
    %395 = arith.divf %393, %394 : vector<8x128xf32>
    %396 = vector.extract_strided_slice %376 {offsets = [0, 256], sizes = [8, 128], strides = [1, 1]} : vector<8x384xf32> to vector<8x128xf32>
    %397 = vector.extract_strided_slice %379 {offsets = [0, 256], sizes = [8, 128], strides = [1, 1]} : vector<8x384xf32> to vector<8x128xf32>
    %398 = arith.addf %397, %2 : vector<8x128xf32>
    %399 = arith.mulf %387, %398 : vector<8x128xf32>
    %400 = arith.addf %396, %399 : vector<8x128xf32>
    %401 = math.tanh %400 : vector<8x128xf32>
    %cst_108 = arith.constant 1.000000e+00 : f32
    %402 = vector.broadcast %cst_108 : f32 to vector<8x128xf32>
    %403 = arith.subf %402, %395 : vector<8x128xf32>
    %404 = arith.mulf %403, %401 : vector<8x128xf32>
    %405 = arith.mulf %395, %369 : vector<8x128xf32>
    %406 = arith.addf %404, %405 : vector<8x128xf32>
    %407 = arith.index_cast %c10_i32 : i32 to index
    %c0_109 = arith.constant 0 : index
    %c0_110 = arith.constant 0 : index
    %408 = vector.load %arg4[%407, %c0_109, %c0_110] : memref<12x8x128xf32, #tpu.memory_space<vmem>>, vector<1x8x128xf32>
    %409 = vector.shape_cast %408 : vector<1x8x128xf32> to vector<8x128xf32>
    %410 = vector.shape_cast %406 : vector<8x128xf32> to vector<1x8x128xf32>
    tpu.vector_store %arg4[%407, %c0_109, %c0_110], %410 {strides = array<i32>} : memref<12x8x128xf32, #tpu.memory_space<vmem>>, vector<1x8x128xf32>,
    %c11_i32 = arith.constant 11 : i32
    %411 = arith.index_cast %c11_i32 : i32 to index
    %c0_111 = arith.constant 0 : index
    %c0_112 = arith.constant 0 : index
    %412 = vector.load %arg1[%411, %c0_111, %c0_112] : memref<12x8x384xf32, #tpu.memory_space<vmem>>, vector<1x8x384xf32>
    %413 = vector.shape_cast %412 : vector<1x8x384xf32> to vector<8x384xf32>
    %414 = arith.truncf %406 : vector<8x128xf32> to vector<8x128xbf16>
    %c0_113 = arith.constant 0 : index
    %c0_114 = arith.constant 0 : index
    %415 = vector.load %arg2[%c0_113, %c0_114] : memref<128x384xbf16, #tpu.memory_space<vmem>>, vector<128x384xbf16>
    %cst_115 = arith.constant dense<0.000000e+00> : vector<8x384xf32>
    %416 = tpu.matmul %414, %415, %cst_115 {dimension_numbers = #tpu.dot_dimension_numbers<[1], [0], [0], [1], [0, 0, 1, 1], [], []>} : vector<8x128xbf16>, vector<128x384xbf16>, vector<8x384xf32> -> vector<8x384xf32>
    %417 = vector.extract_strided_slice %413 {offsets = [0, 0], sizes = [8, 128], strides = [1, 1]} : vector<8x384xf32> to vector<8x128xf32>
    %418 = vector.extract_strided_slice %416 {offsets = [0, 0], sizes = [8, 128], strides = [1, 1]} : vector<8x384xf32> to vector<8x128xf32>
    %419 = arith.addf %417, %418 : vector<8x128xf32>
    %420 = arith.negf %419 : vector<8x128xf32>
    %421 = math.exp %420 : vector<8x128xf32>
    %cst_116 = arith.constant 1.000000e+00 : f32
    %422 = vector.broadcast %cst_116 : f32 to vector<8x128xf32>
    %423 = arith.addf %422, %421 : vector<8x128xf32>
    %424 = arith.divf %422, %423 : vector<8x128xf32>
    %425 = vector.extract_strided_slice %413 {offsets = [0, 128], sizes = [8, 128], strides = [1, 1]} : vector<8x384xf32> to vector<8x128xf32>
    %426 = vector.extract_strided_slice %416 {offsets = [0, 128], sizes = [8, 128], strides = [1, 1]} : vector<8x384xf32> to vector<8x128xf32>
    %427 = arith.addf %425, %426 : vector<8x128xf32>
    %428 = arith.negf %427 : vector<8x128xf32>
    %429 = math.exp %428 : vector<8x128xf32>
    %cst_117 = arith.constant 1.000000e+00 : f32
    %430 = vector.broadcast %cst_117 : f32 to vector<8x128xf32>
    %431 = arith.addf %430, %429 : vector<8x128xf32>
    %432 = arith.divf %430, %431 : vector<8x128xf32>
    %433 = vector.extract_strided_slice %413 {offsets = [0, 256], sizes = [8, 128], strides = [1, 1]} : vector<8x384xf32> to vector<8x128xf32>
    %434 = vector.extract_strided_slice %416 {offsets = [0, 256], sizes = [8, 128], strides = [1, 1]} : vector<8x384xf32> to vector<8x128xf32>
    %435 = arith.addf %434, %2 : vector<8x128xf32>
    %436 = arith.mulf %424, %435 : vector<8x128xf32>
    %437 = arith.addf %433, %436 : vector<8x128xf32>
    %438 = math.tanh %437 : vector<8x128xf32>
    %cst_118 = arith.constant 1.000000e+00 : f32
    %439 = vector.broadcast %cst_118 : f32 to vector<8x128xf32>
    %440 = arith.subf %439, %432 : vector<8x128xf32>
    %441 = arith.mulf %440, %438 : vector<8x128xf32>
    %442 = arith.mulf %432, %406 : vector<8x128xf32>
    %443 = arith.addf %441, %442 : vector<8x128xf32>
    %444 = arith.index_cast %c11_i32 : i32 to index
    %c0_119 = arith.constant 0 : index
    %c0_120 = arith.constant 0 : index
    %445 = vector.load %arg4[%444, %c0_119, %c0_120] : memref<12x8x128xf32, #tpu.memory_space<vmem>>, vector<1x8x128xf32>
    %446 = vector.shape_cast %445 : vector<1x8x128xf32> to vector<8x128xf32>
    %447 = vector.shape_cast %443 : vector<8x128xf32> to vector<1x8x128xf32>
    tpu.vector_store %arg4[%444, %c0_119, %c0_120], %447 {strides = array<i32>} : memref<12x8x128xf32, #tpu.memory_space<vmem>>, vector<1x8x128xf32>,
    %c12_i32 = arith.constant 12 : i32
    return
  }
  func.func @transform_0(%arg0: i32) -> (i32, i32, i32) {
    %c0_i32 = arith.constant 0 : i32
    %c0_i32_0 = arith.constant 0 : i32
    %c0_i32_1 = arith.constant 0 : i32
    return %c0_i32, %arg0, %c0_i32_0 : i32, i32, i32
  }
  func.func @transform_1(%arg0: i32) -> (i32, i32) {
    %c0_i32 = arith.constant 0 : i32
    %c0_i32_0 = arith.constant 0 : i32
    %c0_i32_1 = arith.constant 0 : i32
    return %c0_i32, %c0_i32_0 : i32, i32
  }
  func.func @transform_2(%arg0: i32) -> (i32, i32) {
    %c0_i32 = arith.constant 0 : i32
    %c0_i32_0 = arith.constant 0 : i32
    %c0_i32_1 = arith.constant 0 : i32
    return %c0_i32, %c0_i32_0 : i32, i32
  }
  func.func @transform_3(%arg0: i32) -> (i32, i32, i32) {
    %c0_i32 = arith.constant 0 : i32
    %c0_i32_0 = arith.constant 0 : i32
    %c0_i32_1 = arith.constant 0 : i32
    return %c0_i32, %arg0, %c0_i32_0 : i32, i32, i32
  }
}

</mosaic_0001>

<llo_original>
// kernel: encoder_forward.1
$region0: #{encoder_forward.1}
  #allocation0 [shape = 'u32[]', space=smem, size = 0x4, offset = 0x4, fixed_abs, tag = 'smem constant byte address 0x4 - core index']
  #allocation1 [shape = 'u32[72,128]{1,0:T(1,128)}', space=vmem, size = 0x9000, scoped, tag = 'internal scratch']
  %s0 = inlined_call_operand.vmem [shape: f32[12,8,384], index: 0, kind: input, shape index: {}]
  %s1 = inlined_call_operand.vmem [shape: bf16[128,384], index: 1, kind: input, shape index: {}]
  %s2 = inlined_call_operand.vmem [shape: f32[1,128], index: 2, kind: input, shape index: {}]
  %s3 = inlined_call_operand.vmem [shape: f32[12,8,128], index: 3, kind: output, shape index: {}]
  %s4 = sld [smem:[#allocation0]]
  $region22: #{encoder_forward.1} parent=0
    _
  %s6 = ssub.s32 1, %s4
  %s7 = scalar_select 0, %s6, %s4
  // Predicated region
  $region2: #{encoder_forward.1} parent=0 // pred_check
    _
  $region3: #{encoder_forward.1} parent=0 // pred_check_branch
    %9 = sbr.rel (0) target = $region5
  $region4: #{encoder_forward.1} parent=0 // pred_region
    _
  $region5: #{encoder_forward.1} parent=0 // pred_fallthru
    _
  // Predicated region
  $region6: #{encoder_forward.1} parent=0 // pred_check
    _
  $region7: #{encoder_forward.1} parent=0 // pred_check_branch
    %11 = sbr.rel (0) target = $region9
  $region8: #{encoder_forward.1} parent=0 // pred_region
    _
  $region9: #{encoder_forward.1} parent=0 // pred_fallthru
    _
  // Predicated region
  $region10: #{encoder_forward.1} parent=0 // pred_check
    _
  $region11: #{encoder_forward.1} parent=0 // pred_check_branch
    %13 = sbr.rel (0) target = $region13
  $region12: #{encoder_forward.1} parent=0 // pred_region
    _
  $region13: #{encoder_forward.1} parent=0 // pred_fallthru
    _
  %v15 = vld [vmem:[%s2] sm:$0x1]
  %v17 = vperm.slane %v15, 0
  %v19 = vld [vmem:[%s0] sm:$0xff]
  %v20 = vld [vmem:[%s0 + $0x8] sm:$0xff]
  %v21 = vld [vmem:[%s0 + $0x10] sm:$0xff]
  %v22 = vld [vmem:[%s1] sm:$0xff]
  %v23 = vld [vmem:[%s1 + $0x8] sm:$0xf]
  %v24 = vld [vmem:[%s1 + $0xc] sm:$0xff]
  %v25 = vld [vmem:[%s1 + $0x14] sm:$0xf]
  %v26 = vld [vmem:[%s1 + $0x18] sm:$0xff]
  %v27 = vld [vmem:[%s1 + $0x20] sm:$0xf]
  %v28 = vld [vmem:[%s1 + $0x24] sm:$0xff]
  %v29 = vld [vmem:[%s1 + $0x2c] sm:$0xf]
  %v30 = vld [vmem:[%s1 + $0x30] sm:$0xff]
  %v31 = vld [vmem:[%s1 + $0x38] sm:$0xf]
  %v32 = vld [vmem:[%s1 + $0x3c] sm:$0xff]
  %v33 = vld [vmem:[%s1 + $0x44] sm:$0xf]
  %v34 = vld [vmem:[%s1 + $0x48] sm:$0xff]
  %v35 = vld [vmem:[%s1 + $0x50] sm:$0xf]
  %v36 = vld [vmem:[%s1 + $0x54] sm:$0xff]
  %v37 = vld [vmem:[%s1 + $0x5c] sm:$0xf]
  %v38 = vld [vmem:[%s1 + $0x60] sm:$0xff]
  %v39 = vld [vmem:[%s1 + $0x68] sm:$0xf]
  %v40 = vld [vmem:[%s1 + $0x6c] sm:$0xff]
  %v41 = vld [vmem:[%s1 + $0x74] sm:$0xf]
  %v42 = vld [vmem:[%s1 + $0x78] sm:$0xff]
  %v43 = vld [vmem:[%s1 + $0x80] sm:$0xf]
  %v44 = vld [vmem:[%s1 + $0x84] sm:$0xff]
  %v45 = vld [vmem:[%s1 + $0x8c] sm:$0xf]
  %v46 = vld [vmem:[%s1 + $0x90] sm:$0xff]
  %v47 = vld [vmem:[%s1 + $0x98] sm:$0xf]
  %v48 = vld [vmem:[%s1 + $0x9c] sm:$0xff]
  %v49 = vld [vmem:[%s1 + $0xa4] sm:$0xf]
  %v50 = vld [vmem:[%s1 + $0xa8] sm:$0xff]
  %v51 = vld [vmem:[%s1 + $0xb0] sm:$0xf]
  %v52 = vld [vmem:[%s1 + $0xb4] sm:$0xff]
  %v53 = vld [vmem:[%s1 + $0xbc] sm:$0xf]
  %v86 = vunpack.c.l.b16 %v22
  %v87 = vunpack.c.h.b16 %v22
  %v88 = vunpack.c.l.b16 %v23
  %v89 = vunpack.c.l.b16 %v24
  %v90 = vunpack.c.h.b16 %v24
  %v91 = vunpack.c.l.b16 %v25
  %v92 = vunpack.c.l.b16 %v26
  %v93 = vunpack.c.h.b16 %v26
  %v94 = vunpack.c.l.b16 %v27
  %v95 = vunpack.c.l.b16 %v28
  %v96 = vunpack.c.h.b16 %v28
  %v97 = vunpack.c.l.b16 %v29
  %v98 = vunpack.c.l.b16 %v30
  %v99 = vunpack.c.h.b16 %v30
  %v100 = vunpack.c.l.b16 %v31
  %v101 = vunpack.c.l.b16 %v32
  %v102 = vunpack.c.h.b16 %v32
  %v103 = vunpack.c.l.b16 %v33
  %v104 = vunpack.c.l.b16 %v34
  %v105 = vunpack.c.h.b16 %v34
  %v106 = vunpack.c.l.b16 %v35
  %v107 = vunpack.c.l.b16 %v36
  %v108 = vunpack.c.h.b16 %v36
  %v109 = vunpack.c.l.b16 %v37
  %v110 = vunpack.c.l.b16 %v38
  %v111 = vunpack.c.h.b16 %v38
  %v112 = vunpack.c.l.b16 %v39
  %v113 = vunpack.c.l.b16 %v40
  %v114 = vunpack.c.h.b16 %v40
  %v115 = vunpack.c.l.b16 %v41
  %v116 = vunpack.c.l.b16 %v42
  %v117 = vunpack.c.h.b16 %v42
  %v118 = vunpack.c.l.b16 %v43
  %v119 = vunpack.c.l.b16 %v44
  %v120 = vunpack.c.h.b16 %v44
  %v121 = vunpack.c.l.b16 %v45
  %v122 = vunpack.c.l.b16 %v46
  %v123 = vunpack.c.h.b16 %v46
  %v124 = vunpack.c.l.b16 %v47
  %v125 = vunpack.c.l.b16 %v48
  %v126 = vunpack.c.h.b16 %v48
  %v127 = vunpack.c.l.b16 %v49
  %v128 = vunpack.c.l.b16 %v50
  %v129 = vunpack.c.h.b16 %v50
  %v130 = vunpack.c.l.b16 %v51
  %v131 = vunpack.c.l.b16 %v52
  %v132 = vunpack.c.h.b16 %v52
  %v133 = vunpack.c.l.b16 %v53
  %v134 = vpack.c.b16 %v89, %v86
  %v135 = vpack.c.b16 %v90, %v87
  %v136 = vpack.c.b16 %v91, %v88
  %v137 = vpack.c.b16 %v95, %v92
  %v138 = vpack.c.b16 %v96, %v93
  %v139 = vpack.c.b16 %v97, %v94
  %v140 = vpack.c.b16 %v101, %v98
  %v141 = vpack.c.b16 %v102, %v99
  %v142 = vpack.c.b16 %v103, %v100
  %v143 = vpack.c.b16 %v107, %v104
  %v144 = vpack.c.b16 %v108, %v105
  %v145 = vpack.c.b16 %v109, %v106
  %v146 = vpack.c.b16 %v113, %v110
  %v147 = vpack.c.b16 %v114, %v111
  %v148 = vpack.c.b16 %v115, %v112
  %v149 = vpack.c.b16 %v119, %v116
  %v150 = vpack.c.b16 %v120, %v117
  %v151 = vpack.c.b16 %v121, %v118
  %v152 = vpack.c.b16 %v125, %v122
  %v153 = vpack.c.b16 %v126, %v123
  %v154 = vpack.c.b16 %v127, %v124
  %v155 = vpack.c.b16 %v131, %v128
  %v156 = vpack.c.b16 %v132, %v129
  %v157 = vpack.c.b16 %v133, %v130
  %182 = vmatpush.bf16.msra.mxu0 %v155
  %183 = vmatpush.bf16.msra.mxu0 %v152
  %184 = vmatpush.bf16.msra.mxu0 %v149
  %185 = vmatpush.bf16.msra.mxu0 %v146
  %186 = vmatpush.bf16.msra.mxu0 %v143
  %187 = vmatpush.bf16.msra.mxu0 %v140
  %188 = vmatpush.bf16.msra.mxu0 %v137
  %189 = vmatpush.bf16.msra.mxu0 %v134
  %190 = vmatmul.bf16.gmra.mxu0 0
  %v191 = vpop.f32.mrf.mxu0
  %v192 = vadd.f32 0.0, %v191
  %v193 = vpop.f32.mrf.mxu0
  %194 = vdwg.mxu0
  %195 = vmatpush.bf16.msra.mxu0 %v156
  %196 = vmatpush.bf16.msra.mxu0 %v153
  %197 = vmatpush.bf16.msra.mxu0 %v150
  %198 = vmatpush.bf16.msra.mxu0 %v147
  %199 = vmatpush.bf16.msra.mxu0 %v144
  %200 = vmatpush.bf16.msra.mxu0 %v141
  %201 = vmatpush.bf16.msra.mxu0 %v138
  %202 = vmatpush.bf16.msra.mxu0 %v135
  %203 = vmatmul.bf16.gmra.mxu0 0
  %v204 = vpop.f32.mrf.mxu0
  %v205 = vadd.f32 0.0, %v204
  %v206 = vpop.f32.mrf.mxu0
  %207 = vdwg.mxu0
  %208 = vmatpush.bf16.msra.mxu0 %v157
  %209 = vmatpush.bf16.msra.mxu0 %v154
  %210 = vmatpush.bf16.msra.mxu0 %v151
  %211 = vmatpush.bf16.msra.mxu0 %v148
  %212 = vmatpush.bf16.msra.mxu0 %v145
  %213 = vmatpush.bf16.msra.mxu0 %v142
  %214 = vmatpush.bf16.msra.mxu0 %v139
  %215 = vmatpush.bf16.msra.mxu0 %v136
  %216 = vmatmul.bf16.gmra.mxu0 0
  %v217 = vpop.f32.mrf.mxu0
  %v218 = vadd.f32 0.0, %v217
  %v219 = vpop.f32.mrf.mxu0
  %220 = vdwg.mxu0
  %v221 = vadd.f32 %v19, %v192
  %v222 = vxor.u32 %v221, 2147483648
  %v223 = vmul.f32 %v222, 1.442695
  %v224 = vpow.pop %v223
  %v225 = vadd.f32 %v224, 1.0
  %v226 = vrcp.pop %v225
  %v227 = vmul.f32 %v225, %v226
  %v228 = vsub.f32 1.0, %v227
  %v229 = vmul.f32 %v226, %v228
  %v230 = vadd.f32 %v226, %v229
  %vm231 = vweird.f32 %v225
  %vm232 = vweird.f32 %v226
  %vm233 = vmor %vm231, %vm232
  %v234 = vsel %vm233, %v226, %v230
  %v235 = vand.u32 2147483647, %v225
  %vm236 = vcmp.eq.f32.partialorder %v235, 8.507059e+37
  %v237 = vand.u32 %v225, 2147483648
  %v238 = vor.u32 1.1754944e-38, %v237
  %v239 = vsel %vm236, %v238, %v234
  %v240 = vmul.f32 1.0, %v239
  %v241 = vadd.f32 %v20, %v205
  %v242 = vxor.u32 %v241, 2147483648
  %v243 = vmul.f32 %v242, 1.442695
  %v244 = vpow.pop %v243
  %v245 = vadd.f32 %v244, 1.0
  %v246 = vrcp.pop %v245
  %v247 = vmul.f32 %v245, %v246
  %v248 = vsub.f32 1.0, %v247
  %v249 = vmul.f32 %v246, %v248
  %v250 = vadd.f32 %v246, %v249
  %vm251 = vweird.f32 %v245
  %vm252 = vweird.f32 %v246
  %vm253 = vmor %vm251, %vm252
  %v254 = vsel %vm253, %v246, %v250
  %v255 = vand.u32 2147483647, %v245
  %vm256 = vcmp.eq.f32.partialorder %v255, 8.507059e+37
  %v257 = vand.u32 %v245, 2147483648
  %v258 = vor.u32 1.1754944e-38, %v257
  %v259 = vsel %vm256, %v258, %v254
  %v260 = vmul.f32 1.0, %v259
  %v261 = vadd.f32 %v218, %v17
  %v262 = vmul.f32 %v240, %v261
  %v263 = vadd.f32 %v21, %v262
  %v264 = vtanh.pop %v263
  %v265 = vsub.f32 1.0, %v260
  %v266 = vmul.f32 %v265, %v264
  %v267 = vmul.f32 %v260, 0.0
  %v268 = vadd.f32 %v266, %v267
  %269 = vst [vmem:[%s3] sm:$0xff] %v268
  %s270 = scalar_lea.vmem %s0, 24
  %v271 = vld [vmem:[%s270] sm:$0xff]
  %v272 = vld [vmem:[%s270 + $0x8] sm:$0xff]
  %v273 = vld [vmem:[%s270 + $0x10] sm:$0xff]
  %v274 = vpack.c.bf16 %v268, %v268
  %v275 = vld [vmem:[%s1] sm:$0xff]
  %v276 = vld [vmem:[%s1 + $0x8] sm:$0xf]
  %v277 = vld [vmem:[%s1 + $0xc] sm:$0xff]
  %v278 = vld [vmem:[%s1 + $0x14] sm:$0xf]
  %v279 = vld [vmem:[%s1 + $0x18] sm:$0xff]
  %v280 = vld [vmem:[%s1 + $0x20] sm:$0xf]
  %v281 = vld [vmem:[%s1 + $0x24] sm:$0xff]
  %v282 = vld [vmem:[%s1 + $0x2c] sm:$0xf]
  %v283 = vld [vmem:[%s1 + $0x30] sm:$0xff]
  %v284 = vld [vmem:[%s1 + $0x38] sm:$0xf]
  %v285 = vld [vmem:[%s1 + $0x3c] sm:$0xff]
  %v286 = vld [vmem:[%s1 + $0x44] sm:$0xf]
  %v287 = vld [vmem:[%s1 + $0x48] sm:$0xff]
  %v288 = vld [vmem:[%s1 + $0x50] sm:$0xf]
  %v289 = vld [vmem:[%s1 + $0x54] sm:$0xff]
  %v290 = vld [vmem:[%s1 + $0x5c] sm:$0xf]
  %v291 = vld [vmem:[%s1 + $0x60] sm:$0xff]
  %v292 = vld [vmem:[%s1 + $0x68] sm:$0xf]
  %v293 = vld [vmem:[%s1 + $0x6c] sm:$0xff]
  %v294 = vld [vmem:[%s1 + $0x74] sm:$0xf]
  %v295 = vld [vmem:[%s1 + $0x78] sm:$0xff]
  %v296 = vld [vmem:[%s1 + $0x80] sm:$0xf]
  %v297 = vld [vmem:[%s1 + $0x84] sm:$0xff]
  %v298 = vld [vmem:[%s1 + $0x8c] sm:$0xf]
  %v299 = vld [vmem:[%s1 + $0x90] sm:$0xff]
  %v300 = vld [vmem:[%s1 + $0x98] sm:$0xf]
  %v301 = vld [vmem:[%s1 + $0x9c] sm:$0xff]
  %v302 = vld [vmem:[%s1 + $0xa4] sm:$0xf]
  %v303 = vld [vmem:[%s1 + $0xa8] sm:$0xff]
  %v304 = vld [vmem:[%s1 + $0xb0] sm:$0xf]
  %v305 = vld [vmem:[%s1 + $0xb4] sm:$0xff]
  %v306 = vld [vmem:[%s1 + $0xbc] sm:$0xf]
  %v339 = vunpack.c.l.b16 %v275
  %v340 = vunpack.c.h.b16 %v275
  %v341 = vunpack.c.l.b16 %v276
  %v342 = vunpack.c.l.b16 %v277
  %v343 = vunpack.c.h.b16 %v277
  %v344 = vunpack.c.l.b16 %v278
  %v345 = vunpack.c.l.b16 %v279
  %v346 = vunpack.c.h.b16 %v279
  %v347 = vunpack.c.l.b16 %v280
  %v348 = vunpack.c.l.b16 %v281
  %v349 = vunpack.c.h.b16 %v281
  %v350 = vunpack.c.l.b16 %v282
  %v351 = vunpack.c.l.b16 %v283
  %v352 = vunpack.c.h.b16 %v283
  %v353 = vunpack.c.l.b16 %v284
  %v354 = vunpack.c.l.b16 %v285
  %v355 = vunpack.c.h.b16 %v285
  %v356 = vunpack.c.l.b16 %v286
  %v357 = vunpack.c.l.b16 %v287
  %v358 = vunpack.c.h.b16 %v287
  %v359 = vunpack.c.l.b16 %v288
  %v360 = vunpack.c.l.b16 %v289
  %v361 = vunpack.c.h.b16 %v289
  %v362 = vunpack.c.l.b16 %v290
  %v363 = vunpack.c.l.b16 %v291
  %v364 = vunpack.c.h.b16 %v291
  %v365 = vunpack.c.l.b16 %v292
  %v366 = vunpack.c.l.b16 %v293
  %v367 = vunpack.c.h.b16 %v293
  %v368 = vunpack.c.l.b16 %v294
  %v369 = vunpack.c.l.b16 %v295
  %v370 = vunpack.c.h.b16 %v295
  %v371 = vunpack.c.l.b16 %v296
  %v372 = vunpack.c.l.b16 %v297
  %v373 = vunpack.c.h.b16 %v297
  %v374 = vunpack.c.l.b16 %v298
  %v375 = vunpack.c.l.b16 %v299
  %v376 = vunpack.c.h.b16 %v299
  %v377 = vunpack.c.l.b16 %v300
  %v378 = vunpack.c.l.b16 %v301
  %v379 = vunpack.c.h.b16 %v301
  %v380 = vunpack.c.l.b16 %v302
  %v381 = vunpack.c.l.b16 %v303
  %v382 = vunpack.c.h.b16 %v303
  %v383 = vunpack.c.l.b16 %v304
  %v384 = vunpack.c.l.b16 %v305
  %v385 = vunpack.c.h.b16 %v305
  %v386 = vunpack.c.l.b16 %v306
  %v387 = vpack.c.b16 %v342, %v339
  %v388 = vpack.c.b16 %v343, %v340
  %v389 = vpack.c.b16 %v344, %v341
  %v390 = vpack.c.b16 %v348, %v345
  %v391 = vpack.c.b16 %v349, %v346
  %v392 = vpack.c.b16 %v350, %v347
  %v393 = vpack.c.b16 %v354, %v351
  %v394 = vpack.c.b16 %v355, %v352
  %v395 = vpack.c.b16 %v356, %v353
  %v396 = vpack.c.b16 %v360, %v357
  %v397 = vpack.c.b16 %v361, %v358
  %v398 = vpack.c.b16 %v362, %v359
  %v399 = vpack.c.b16 %v366, %v363
  %v400 = vpack.c.b16 %v367, %v364
  %v401 = vpack.c.b16 %v368, %v365
  %v402 = vpack.c.b16 %v372, %v369
  %v403 = vpack.c.b16 %v373, %v370
  %v404 = vpack.c.b16 %v374, %v371
  %v405 = vpack.c.b16 %v378, %v375
  %v406 = vpack.c.b16 %v379, %v376
  %v407 = vpack.c.b16 %v380, %v377
  %v408 = vpack.c.b16 %v384, %v381
  %v409 = vpack.c.b16 %v385, %v382
  %v410 = vpack.c.b16 %v386, %v383
  %435 = vmatpush.bf16.msra.mxu0 %v408
  %436 = vmatpush.bf16.msra.mxu0 %v405
  %437 = vmatpush.bf16.msra.mxu0 %v402
  %438 = vmatpush.bf16.msra.mxu0 %v399
  %439 = vmatpush.bf16.msra.mxu0 %v396
  %440 = vmatpush.bf16.msra.mxu0 %v393
  %441 = vmatpush.bf16.msra.mxu0 %v390
  %442 = vmatpush.bf16.msra.mxu0 %v387
  %443 = vmatmul.bf16.gmra.mxu0 %v274
  %v444 = vpop.f32.mrf.mxu0
  %v445 = vadd.f32 0.0, %v444
  %v446 = vpop.f32.mrf.mxu0
  %447 = vdwg.mxu0
  %448 = vmatpush.bf16.msra.mxu0 %v409
  %449 = vmatpush.bf16.msra.mxu0 %v406
  %450 = vmatpush.bf16.msra.mxu0 %v403
  %451 = vmatpush.bf16.msra.mxu0 %v400
  %452 = vmatpush.bf16.msra.mxu0 %v397
  %453 = vmatpush.bf16.msra.mxu0 %v394
  %454 = vmatpush.bf16.msra.mxu0 %v391
  %455 = vmatpush.bf16.msra.mxu0 %v388
  %456 = vmatmul.bf16.gmra.mxu0 %v274
  %v457 = vpop.f32.mrf.mxu0
  %v458 = vadd.f32 0.0, %v457
  %v459 = vpop.f32.mrf.mxu0
  %460 = vdwg.mxu0
  %461 = vmatpush.bf16.msra.mxu0 %v410
  %462 = vmatpush.bf16.msra.mxu0 %v407
  %463 = vmatpush.bf16.msra.mxu0 %v404
  %464 = vmatpush.bf16.msra.mxu0 %v401
  %465 = vmatpush.bf16.msra.mxu0 %v398
  %466 = vmatpush.bf16.msra.mxu0 %v395
  %467 = vmatpush.bf16.msra.mxu0 %v392
  %468 = vmatpush.bf16.msra.mxu0 %v389
  %469 = vmatmul.bf16.gmra.mxu0 %v274
  %v470 = vpop.f32.mrf.mxu0
  %v471 = vadd.f32 0.0, %v470
  %v472 = vpop.f32.mrf.mxu0
  %473 = vdwg.mxu0
  %v474 = vadd.f32 %v271, %v445
  %v475 = vxor.u32 %v474, 2147483648
  %v476 = vmul.f32 %v475, 1.442695
  %v477 = vpow.pop %v476
  %v478 = vadd.f32 %v477, 1.0
  %v479 = vrcp.pop %v478
  %v480 = vmul.f32 %v478, %v479
  %v481 = vsub.f32 1.0, %v480
  %v482 = vmul.f32 %v479, %v481
  %v483 = vadd.f32 %v479, %v482
  %vm484 = vweird.f32 %v478
  %vm485 = vweird.f32 %v479
  %vm486 = vmor %vm484, %vm485
  %v487 = vsel %vm486, %v479, %v483
  %v488 = vand.u32 2147483647, %v478
  %vm489 = vcmp.eq.f32.partialorder %v488, 8.507059e+37
  %v490 = vand.u32 %v478, 2147483648
  %v491 = vor.u32 1.1754944e-38, %v490
  %v492 = vsel %vm489, %v491, %v487
  %v493 = vmul.f32 1.0, %v492
  %v494 = vadd.f32 %v272, %v458
  %v495 = vxor.u32 %v494, 2147483648
  %v496 = vmul.f32 %v495, 1.442695
  %v497 = vpow.pop %v496
  %v498 = vadd.f32 %v497, 1.0
  %v499 = vrcp.pop %v498
  %v500 = vmul.f32 %v498, %v499
  %v501 = vsub.f32 1.0, %v500
  %v502 = vmul.f32 %v499, %v501
  %v503 = vadd.f32 %v499, %v502
  %vm504 = vweird.f32 %v498
  %vm505 = vweird.f32 %v499
  %vm506 = vmor %vm504, %vm505
  %v507 = vsel %vm506, %v499, %v503
  %v508 = vand.u32 2147483647, %v498
  %vm509 = vcmp.eq.f32.partialorder %v508, 8.507059e+37
  %v510 = vand.u32 %v498, 2147483648
  %v511 = vor.u32 1.1754944e-38, %v510
  %v512 = vsel %vm509, %v511, %v507
  %v513 = vmul.f32 1.0, %v512
  %v514 = vadd.f32 %v471, %v17
  %v515 = vmul.f32 %v493, %v514
  %v516 = vadd.f32 %v273, %v515
  %v517 = vtanh.pop %v516
  %v518 = vsub.f32 1.0, %v513
  %v519 = vmul.f32 %v518, %v517
  %v520 = vmul.f32 %v513, %v268
  %v521 = vadd.f32 %v519, %v520
  %s522 = scalar_lea.vmem %s3, 8
  %523 = vst [vmem:[%s522] sm:$0xff] %v521
  %s524 = scalar_lea.vmem %s0, 48
  %v525 = vld [vmem:[%s524] sm:$0xff]
  %v526 = vld [vmem:[%s524 + $0x8] sm:$0xff]
  %v527 = vld [vmem:[%s524 + $0x10] sm:$0xff]
  %v528 = vpack.c.bf16 %v521, %v521
  %v529 = vld [vmem:[%s1] sm:$0xff]
  %v530 = vld [vmem:[%s1 + $0x8] sm:$0xf]
  %v531 = vld [vmem:[%s1 + $0xc] sm:$0xff]
  %v532 = vld [vmem:[%s1 + $0x14] sm:$0xf]
  %v533 = vld [vmem:[%s1 + $0x18] sm:$0xff]
  %v534 = vld [vmem:[%s1 + $0x20] sm:$0xf]
  %v535 = vld [vmem:[%s1 + $0x24] sm:$0xff]
  %v536 = vld [vmem:[%s1 + $0x2c] sm:$0xf]
  %v537 = vld [vmem:[%s1 + $0x30] sm:$0xff]
  %v538 = vld [vmem:[%s1 + $0x38] sm:$0xf]
  %v539 = vld [vmem:[%s1 + $0x3c] sm:$0xff]
  %v540 = vld [vmem:[%s1 + $0x44] sm:$0xf]
  %v541 = vld [vmem:[%s1 + $0x48] sm:$0xff]
  %v542 = vld [vmem:[%s1 + $0x50] sm:$0xf]
  %v543 = vld [vmem:[%s1 + $0x54] sm:$0xff]
  %v544 = vld [vmem:[%s1 + $0x5c] sm:$0xf]
  %v545 = vld [vmem:[%s1 + $0x60] sm:$0xff]
  %v546 = vld [vmem:[%s1 + $0x68] sm:$0xf]
  %v547 = vld [vmem:[%s1 + $0x6c] sm:$0xff]
  %v548 = vld [vmem:[%s1 + $0x74] sm:$0xf]
  %v549 = vld [vmem:[%s1 + $0x78] sm:$0xff]
  %v550 = vld [vmem:[%s1 + $0x80] sm:$0xf]
  %v551 = vld [vmem:[%s1 + $0x84] sm:$0xff]
  %v552 = vld [vmem:[%s1 + $0x8c] sm:$0xf]
  %v553 = vld [vmem:[%s1 + $0x90] sm:$0xff]
  %v554 = vld [vmem:[%s1 + $0x98] sm:$0xf]
  %v555 = vld [vmem:[%s1 + $0x9c] sm:$0xff]
  %v556 = vld [vmem:[%s1 + $0xa4] sm:$0xf]
  %v557 = vld [vmem:[%s1 + $0xa8] sm:$0xff]
  %v558 = vld [vmem:[%s1 + $0xb0] sm:$0xf]
  %v559 = vld [vmem:[%s1 + $0xb4] sm:$0xff]
  %v560 = vld [vmem:[%s1 + $0xbc] sm:$0xf]
  %v593 = vunpack.c.l.b16 %v529
  %v594 = vunpack.c.h.b16 %v529
  %v595 = vunpack.c.l.b16 %v530
  %v596 = vunpack.c.l.b16 %v531
  %v597 = vunpack.c.h.b16 %v531
  %v598 = vunpack.c.l.b16 %v532
  %v599 = vunpack.c.l.b16 %v533
  %v600 = vunpack.c.h.b16 %v533
  %v601 = vunpack.c.l.b16 %v534
  %v602 = vunpack.c.l.b16 %v535
  %v603 = vunpack.c.h.b16 %v535
  %v604 = vunpack.c.l.b16 %v536
  %v605 = vunpack.c.l.b16 %v537
  %v606 = vunpack.c.h.b16 %v537
  %v607 = vunpack.c.l.b16 %v538
  %v608 = vunpack.c.l.b16 %v539
  %v609 = vunpack.c.h.b16 %v539
  %v610 = vunpack.c.l.b16 %v540
  %v611 = vunpack.c.l.b16 %v541
  %v612 = vunpack.c.h.b16 %v541
  %v613 = vunpack.c.l.b16 %v542
  %v614 = vunpack.c.l.b16 %v543
  %v615 = vunpack.c.h.b16 %v543
  %v616 = vunpack.c.l.b16 %v544
  %v617 = vunpack.c.l.b16 %v545
  %v618 = vunpack.c.h.b16 %v545
  %v619 = vunpack.c.l.b16 %v546
  %v620 = vunpack.c.l.b16 %v547
  %v621 = vunpack.c.h.b16 %v547
  %v622 = vunpack.c.l.b16 %v548
  %v623 = vunpack.c.l.b16 %v549
  %v624 = vunpack.c.h.b16 %v549
  %v625 = vunpack.c.l.b16 %v550
  %v626 = vunpack.c.l.b16 %v551
  %v627 = vunpack.c.h.b16 %v551
  %v628 = vunpack.c.l.b16 %v552
  %v629 = vunpack.c.l.b16 %v553
  %v630 = vunpack.c.h.b16 %v553
  %v631 = vunpack.c.l.b16 %v554
  %v632 = vunpack.c.l.b16 %v555
  %v633 = vunpack.c.h.b16 %v555
  %v634 = vunpack.c.l.b16 %v556
  %v635 = vunpack.c.l.b16 %v557
  %v636 = vunpack.c.h.b16 %v557
  %v637 = vunpack.c.l.b16 %v558
  %v638 = vunpack.c.l.b16 %v559
  %v639 = vunpack.c.h.b16 %v559
  %v640 = vunpack.c.l.b16 %v560
  %v641 = vpack.c.b16 %v596, %v593
  %v642 = vpack.c.b16 %v597, %v594
  %v643 = vpack.c.b16 %v598, %v595
  %v644 = vpack.c.b16 %v602, %v599
  %v645 = vpack.c.b16 %v603, %v600
  %v646 = vpack.c.b16 %v604, %v601
  %v647 = vpack.c.b16 %v608, %v605
  %v648 = vpack.c.b16 %v609, %v606
  %v649 = vpack.c.b16 %v610, %v607
  %v650 = vpack.c.b16 %v614, %v611
  %v651 = vpack.c.b16 %v615, %v612
  %v652 = vpack.c.b16 %v616, %v613
  %v653 = vpack.c.b16 %v620, %v617
  %v654 = vpack.c.b16 %v621, %v618
  %v655 = vpack.c.b16 %v622, %v619
  %v656 = vpack.c.b16 %v626, %v623
  %v657 = vpack.c.b16 %v627, %v624
  %v658 = vpack.c.b16 %v628, %v625
  %v659 = vpack.c.b16 %v632, %v629
  %v660 = vpack.c.b16 %v633, %v630
  %v661 = vpack.c.b16 %v634, %v631
  %v662 = vpack.c.b16 %v638, %v635
  %v663 = vpack.c.b16 %v639, %v636
  %v664 = vpack.c.b16 %v640, %v637
  %689 = vmatpush.bf16.msra.mxu0 %v662
  %690 = vmatpush.bf16.msra.mxu0 %v659
  %691 = vmatpush.bf16.msra.mxu0 %v656
  %692 = vmatpush.bf16.msra.mxu0 %v653
  %693 = vmatpush.bf16.msra.mxu0 %v650
  %694 = vmatpush.bf16.msra.mxu0 %v647
  %695 = vmatpush.bf16.msra.mxu0 %v644
  %696 = vmatpush.bf16.msra.mxu0 %v641
  %697 = vmatmul.bf16.gmra.mxu0 %v528
  %v698 = vpop.f32.mrf.mxu0
  %v699 = vadd.f32 0.0, %v698
  %v700 = vpop.f32.mrf.mxu0
  %701 = vdwg.mxu0
  %702 = vmatpush.bf16.msra.mxu0 %v663
  %703 = vmatpush.bf16.msra.mxu0 %v660
  %704 = vmatpush.bf16.msra.mxu0 %v657
  %705 = vmatpush.bf16.msra.mxu0 %v654
  %706 = vmatpush.bf16.msra.mxu0 %v651
  %707 = vmatpush.bf16.msra.mxu0 %v648
  %708 = vmatpush.bf16.msra.mxu0 %v645
  %709 = vmatpush.bf16.msra.mxu0 %v642
  %710 = vmatmul.bf16.gmra.mxu0 %v528
  %v711 = vpop.f32.mrf.mxu0
  %v712 = vadd.f32 0.0, %v711
  %v713 = vpop.f32.mrf.mxu0
  %714 = vdwg.mxu0
  %715 = vmatpush.bf16.msra.mxu0 %v664
  %716 = vmatpush.bf16.msra.mxu0 %v661
  %717 = vmatpush.bf16.msra.mxu0 %v658
  %718 = vmatpush.bf16.msra.mxu0 %v655
  %719 = vmatpush.bf16.msra.mxu0 %v652
  %720 = vmatpush.bf16.msra.mxu0 %v649
  %721 = vmatpush.bf16.msra.mxu0 %v646
  %722 = vmatpush.bf16.msra.mxu0 %v643
  %723 = vmatmul.bf16.gmra.mxu0 %v528
  %v724 = vpop.f32.mrf.mxu0
  %v725 = vadd.f32 0.0, %v724
  %v726 = vpop.f32.mrf.mxu0
  %727 = vdwg.mxu0
  %v728 = vadd.f32 %v525, %v699
  %v729 = vxor.u32 %v728, 2147483648
  %v730 = vmul.f32 %v729, 1.442695
  %v731 = vpow.pop %v730
  %v732 = vadd.f32 %v731, 1.0
  %v733 = vrcp.pop %v732
  %v734 = vmul.f32 %v732, %v733
  %v735 = vsub.f32 1.0, %v734
  %v736 = vmul.f32 %v733, %v735
  %v737 = vadd.f32 %v733, %v736
  %vm738 = vweird.f32 %v732
  %vm739 = vweird.f32 %v733
  %vm740 = vmor %vm738, %vm739
  %v741 = vsel %vm740, %v733, %v737
  %v742 = vand.u32 2147483647, %v732
  %vm743 = vcmp.eq.f32.partialorder %v742, 8.507059e+37
  %v744 = vand.u32 %v732, 2147483648
  %v745 = vor.u32 1.1754944e-38, %v744
  %v746 = vsel %vm743, %v745, %v741
  %v747 = vmul.f32 1.0, %v746
  %v748 = vadd.f32 %v526, %v712
  %v749 = vxor.u32 %v748, 2147483648
  %v750 = vmul.f32 %v749, 1.442695
  %v751 = vpow.pop %v750
  %v752 = vadd.f32 %v751, 1.0
  %v753 = vrcp.pop %v752
  %v754 = vmul.f32 %v752, %v753
  %v755 = vsub.f32 1.0, %v754
  %v756 = vmul.f32 %v753, %v755
  %v757 = vadd.f32 %v753, %v756
  %vm758 = vweird.f32 %v752
  %vm759 = vweird.f32 %v753
  %vm760 = vmor %vm758, %vm759
  %v761 = vsel %vm760, %v753, %v757
  %v762 = vand.u32 2147483647, %v752
  %vm763 = vcmp.eq.f32.partialorder %v762, 8.507059e+37
  %v764 = vand.u32 %v752, 2147483648
  %v765 = vor.u32 1.1754944e-38, %v764
  %v766 = vsel %vm763, %v765, %v761
  %v767 = vmul.f32 1.0, %v766
  %v768 = vadd.f32 %v725, %v17
  %v769 = vmul.f32 %v747, %v768
  %v770 = vadd.f32 %v527, %v769
  %v771 = vtanh.pop %v770
  %v772 = vsub.f32 1.0, %v767
  %v773 = vmul.f32 %v772, %v771
  %v774 = vmul.f32 %v767, %v521
  %v775 = vadd.f32 %v773, %v774
  %s776 = scalar_lea.vmem %s3, 16
  %777 = vst [vmem:[%s776] sm:$0xff] %v775
  %s778 = scalar_lea.vmem %s0, 72
  %v779 = vld [vmem:[%s778] sm:$0xff]
  %v780 = vld [vmem:[%s778 + $0x8] sm:$0xff]
  %v781 = vld [vmem:[%s778 + $0x10] sm:$0xff]
  %v782 = vpack.c.bf16 %v775, %v775
  %v783 = vld [vmem:[%s1] sm:$0xff]
  %v784 = vld [vmem:[%s1 + $0x8] sm:$0xf]
  %v785 = vld [vmem:[%s1 + $0xc] sm:$0xff]
  %v786 = vld [vmem:[%s1 + $0x14] sm:$0xf]
  %v787 = vld [vmem:[%s1 + $0x18] sm:$0xff]
  %v788 = vld [vmem:[%s1 + $0x20] sm:$0xf]
  %v789 = vld [vmem:[%s1 + $0x24] sm:$0xff]
  %v790 = vld [vmem:[%s1 + $0x2c] sm:$0xf]
  %v791 = vld [vmem:[%s1 + $0x30] sm:$0xff]
  %v792 = vld [vmem:[%s1 + $0x38] sm:$0xf]
  %v793 = vld [vmem:[%s1 + $0x3c] sm:$0xff]
  %v794 = vld [vmem:[%s1 + $0x44] sm:$0xf]
  %v795 = vld [vmem:[%s1 + $0x48] sm:$0xff]
  %v796 = vld [vmem:[%s1 + $0x50] sm:$0xf]
  %v797 = vld [vmem:[%s1 + $0x54] sm:$0xff]
  %v798 = vld [vmem:[%s1 + $0x5c] sm:$0xf]
  %v799 = vld [vmem:[%s1 + $0x60] sm:$0xff]
  %v800 = vld [vmem:[%s1 + $0x68] sm:$0xf]
  %v801 = vld [vmem:[%s1 + $0x6c] sm:$0xff]
  %v802 = vld [vmem:[%s1 + $0x74] sm:$0xf]
  %v803 = vld [vmem:[%s1 + $0x78] sm:$0xff]
  %v804 = vld [vmem:[%s1 + $0x80] sm:$0xf]
  %v805 = vld [vmem:[%s1 + $0x84] sm:$0xff]
  %v806 = vld [vmem:[%s1 + $0x8c] sm:$0xf]
  %v807 = vld [vmem:[%s1 + $0x90] sm:$0xff]
  %v808 = vld [vmem:[%s1 + $0x98] sm:$0xf]
  %v809 = vld [vmem:[%s1 + $0x9c] sm:$0xff]
  %v810 = vld [vmem:[%s1 + $0xa4] sm:$0xf]
  %v811 = vld [vmem:[%s1 + $0xa8] sm:$0xff]
  %v812 = vld [vmem:[%s1 + $0xb0] sm:$0xf]
  %v813 = vld [vmem:[%s1 + $0xb4] sm:$0xff]
  %v814 = vld [vmem:[%s1 + $0xbc] sm:$0xf]
  %v847 = vunpack.c.l.b16 %v783
  %v848 = vunpack.c.h.b16 %v783
  %v849 = vunpack.c.l.b16 %v784
  %v850 = vunpack.c.l.b16 %v785
  %v851 = vunpack.c.h.b16 %v785
  %v852 = vunpack.c.l.b16 %v786
  %v853 = vunpack.c.l.b16 %v787
  %v854 = vunpack.c.h.b16 %v787
  %v855 = vunpack.c.l.b16 %v788
  %v856 = vunpack.c.l.b16 %v789
  %v857 = vunpack.c.h.b16 %v789
  %v858 = vunpack.c.l.b16 %v790
  %v859 = vunpack.c.l.b16 %v791
  %v860 = vunpack.c.h.b16 %v791
  %v861 = vunpack.c.l.b16 %v792
  %v862 = vunpack.c.l.b16 %v793
  %v863 = vunpack.c.h.b16 %v793
  %v864 = vunpack.c.l.b16 %v794
  %v865 = vunpack.c.l.b16 %v795
  %v866 = vunpack.c.h.b16 %v795
  %v867 = vunpack.c.l.b16 %v796
  %v868 = vunpack.c.l.b16 %v797
  %v869 = vunpack.c.h.b16 %v797
  %v870 = vunpack.c.l.b16 %v798
  %v871 = vunpack.c.l.b16 %v799
  %v872 = vunpack.c.h.b16 %v799
  %v873 = vunpack.c.l.b16 %v800
  %v874 = vunpack.c.l.b16 %v801
  %v875 = vunpack.c.h.b16 %v801
  %v876 = vunpack.c.l.b16 %v802
  %v877 = vunpack.c.l.b16 %v803
  %v878 = vunpack.c.h.b16 %v803
  %v879 = vunpack.c.l.b16 %v804
  %v880 = vunpack.c.l.b16 %v805
  %v881 = vunpack.c.h.b16 %v805
  %v882 = vunpack.c.l.b16 %v806
  %v883 = vunpack.c.l.b16 %v807
  %v884 = vunpack.c.h.b16 %v807
  %v885 = vunpack.c.l.b16 %v808
  %v886 = vunpack.c.l.b16 %v809
  %v887 = vunpack.c.h.b16 %v809
  %v888 = vunpack.c.l.b16 %v810
  %v889 = vunpack.c.l.b16 %v811
  %v890 = vunpack.c.h.b16 %v811
  %v891 = vunpack.c.l.b16 %v812
  %v892 = vunpack.c.l.b16 %v813
  %v893 = vunpack.c.h.b16 %v813
  %v894 = vunpack.c.l.b16 %v814
  %v895 = vpack.c.b16 %v850, %v847
  %v896 = vpack.c.b16 %v851, %v848
  %v897 = vpack.c.b16 %v852, %v849
  %v898 = vpack.c.b16 %v856, %v853
  %v899 = vpack.c.b16 %v857, %v854
  %v900 = vpack.c.b16 %v858, %v855
  %v901 = vpack.c.b16 %v862, %v859
  %v902 = vpack.c.b16 %v863, %v860
  %v903 = vpack.c.b16 %v864, %v861
  %v904 = vpack.c.b16 %v868, %v865
  %v905 = vpack.c.b16 %v869, %v866
  %v906 = vpack.c.b16 %v870, %v867
  %v907 = vpack.c.b16 %v874, %v871
  %v908 = vpack.c.b16 %v875, %v872
  %v909 = vpack.c.b16 %v876, %v873
  %v910 = vpack.c.b16 %v880, %v877
  %v911 = vpack.c.b16 %v881, %v878
  %v912 = vpack.c.b16 %v882, %v879
  %v913 = vpack.c.b16 %v886, %v883
  %v914 = vpack.c.b16 %v887, %v884
  %v915 = vpack.c.b16 %v888, %v885
  %v916 = vpack.c.b16 %v892, %v889
  %v917 = vpack.c.b16 %v893, %v890
  %v918 = vpack.c.b16 %v894, %v891
  %943 = vmatpush.bf16.msra.mxu0 %v916
  %944 = vmatpush.bf16.msra.mxu0 %v913
  %945 = vmatpush.bf16.msra.mxu0 %v910
  %946 = vmatpush.bf16.msra.mxu0 %v907
  %947 = vmatpush.bf16.msra.mxu0 %v904
  %948 = vmatpush.bf16.msra.mxu0 %v901
  %949 = vmatpush.bf16.msra.mxu0 %v898
  %950 = vmatpush.bf16.msra.mxu0 %v895
  %951 = vmatmul.bf16.gmra.mxu0 %v782
  %v952 = vpop.f32.mrf.mxu0
  %v953 = vadd.f32 0.0, %v952
  %v954 = vpop.f32.mrf.mxu0
  %955 = vdwg.mxu0
  %956 = vmatpush.bf16.msra.mxu0 %v917
  %957 = vmatpush.bf16.msra.mxu0 %v914
  %958 = vmatpush.bf16.msra.mxu0 %v911
  %959 = vmatpush.bf16.msra.mxu0 %v908
  %960 = vmatpush.bf16.msra.mxu0 %v905
  %961 = vmatpush.bf16.msra.mxu0 %v902
  %962 = vmatpush.bf16.msra.mxu0 %v899
  %963 = vmatpush.bf16.msra.mxu0 %v896
  %964 = vmatmul.bf16.gmra.mxu0 %v782
  %v965 = vpop.f32.mrf.mxu0
  %v966 = vadd.f32 0.0, %v965
  %v967 = vpop.f32.mrf.mxu0
  %968 = vdwg.mxu0
  %969 = vmatpush.bf16.msra.mxu0 %v918
  %970 = vmatpush.bf16.msra.mxu0 %v915
  %971 = vmatpush.bf16.msra.mxu0 %v912
  %972 = vmatpush.bf16.msra.mxu0 %v909
  %973 = vmatpush.bf16.msra.mxu0 %v906
  %974 = vmatpush.bf16.msra.mxu0 %v903
  %975 = vmatpush.bf16.msra.mxu0 %v900
  %976 = vmatpush.bf16.msra.mxu0 %v897
  %977 = vmatmul.bf16.gmra.mxu0 %v782
  %v978 = vpop.f32.mrf.mxu0
  %v979 = vadd.f32 0.0, %v978
  %v980 = vpop.f32.mrf.mxu0
  %981 = vdwg.mxu0
  %v982 = vadd.f32 %v779, %v953
  %v983 = vxor.u32 %v982, 2147483648
  %v984 = vmul.f32 %v983, 1.442695
  %v985 = vpow.pop %v984
  %v986 = vadd.f32 %v985, 1.0
  %v987 = vrcp.pop %v986
  %v988 = vmul.f32 %v986, %v987
  %v989 = vsub.f32 1.0, %v988
  %v990 = vmul.f32 %v987, %v989
  %v991 = vadd.f32 %v987, %v990
  %vm992 = vweird.f32 %v986
  %vm993 = vweird.f32 %v987
  %vm994 = vmor %vm992, %vm993
  %v995 = vsel %vm994, %v987, %v991
  %v996 = vand.u32 2147483647, %v986
  %vm997 = vcmp.eq.f32.partialorder %v996, 8.507059e+37
  %v998 = vand.u32 %v986, 2147483648
  %v999 = vor.u32 1.1754944e-38, %v998
  %v1000 = vsel %vm997, %v999, %v995
  %v1001 = vmul.f32 1.0, %v1000
  %v1002 = vadd.f32 %v780, %v966
  %v1003 = vxor.u32 %v1002, 2147483648
  %v1004 = vmul.f32 %v1003, 1.442695
  %v1005 = vpow.pop %v1004
  %v1006 = vadd.f32 %v1005, 1.0
  %v1007 = vrcp.pop %v1006
  %v1008 = vmul.f32 %v1006, %v1007
  %v1009 = vsub.f32 1.0, %v1008
  %v1010 = vmul.f32 %v1007, %v1009
  %v1011 = vadd.f32 %v1007, %v1010
  %vm1012 = vweird.f32 %v1006
  %vm1013 = vweird.f32 %v1007
  %vm1014 = vmor %vm1012, %vm1013
  %v1015 = vsel %vm1014, %v1007, %v1011
  %v1016 = vand.u32 2147483647, %v1006
  %vm1017 = vcmp.eq.f32.partialorder %v1016, 8.507059e+37
  %v1018 = vand.u32 %v1006, 2147483648
  %v1019 = vor.u32 1.1754944e-38, %v1018
  %v1020 = vsel %vm1017, %v1019, %v1015
  %v1021 = vmul.f32 1.0, %v1020
  %v1022 = vadd.f32 %v979, %v17
  %v1023 = vmul.f32 %v1001, %v1022
  %v1024 = vadd.f32 %v781, %v1023
  %v1025 = vtanh.pop %v1024
  %v1026 = vsub.f32 1.0, %v1021
  %v1027 = vmul.f32 %v1026, %v1025
  %v1028 = vmul.f32 %v1021, %v775
  %v1029 = vadd.f32 %v1027, %v1028
  %s1030 = scalar_lea.vmem %s3, 24
  %1031 = vst [vmem:[%s1030] sm:$0xff] %v1029
  %s1032 = scalar_lea.vmem %s0, 96
  %v1033 = vld [vmem:[%s1032] sm:$0xff]
  %v1034 = vld [vmem:[%s1032 + $0x8] sm:$0xff]
  %v1035 = vld [vmem:[%s1032 + $0x10] sm:$0xff]
  %v1036 = vpack.c.bf16 %v1029, %v1029
  %v1037 = vld [vmem:[%s1] sm:$0xff]
  %v1038 = vld [vmem:[%s1 + $0x8] sm:$0xf]
  %v1039 = vld [vmem:[%s1 + $0xc] sm:$0xff]
  %v1040 = vld [vmem:[%s1 + $0x14] sm:$0xf]
  %v1041 = vld [vmem:[%s1 + $0x18] sm:$0xff]
  %v1042 = vld [vmem:[%s1 + $0x20] sm:$0xf]
  %v1043 = vld [vmem:[%s1 + $0x24] sm:$0xff]
  %v1044 = vld [vmem:[%s1 + $0x2c] sm:$0xf]
  %v1045 = vld [vmem:[%s1 + $0x30] sm:$0xff]
  %v1046 = vld [vmem:[%s1 + $0x38] sm:$0xf]
  %v1047 = vld [vmem:[%s1 + $0x3c] sm:$0xff]
  %v1048 = vld [vmem:[%s1 + $0x44] sm:$0xf]
  %v1049 = vld [vmem:[%s1 + $0x48] sm:$0xff]
  %v1050 = vld [vmem:[%s1 + $0x50] sm:$0xf]
  %v1051 = vld [vmem:[%s1 + $0x54] sm:$0xff]
  %v1052 = vld [vmem:[%s1 + $0x5c] sm:$0xf]
  %v1053 = vld [vmem:[%s1 + $0x60] sm:$0xff]
  %v1054 = vld [vmem:[%s1 + $0x68] sm:$0xf]
  %v1055 = vld [vmem:[%s1 + $0x6c] sm:$0xff]
  %v1056 = vld [vmem:[%s1 + $0x74] sm:$0xf]
  %v1057 = vld [vmem:[%s1 + $0x78] sm:$0xff]
  %v1058 = vld [vmem:[%s1 + $0x80] sm:$0xf]
  %v1059 = vld [vmem:[%s1 + $0x84] sm:$0xff]
  %v1060 = vld [vmem:[%s1 + $0x8c] sm:$0xf]
  %v1061 = vld [vmem:[%s1 + $0x90] sm:$0xff]
  %v1062 = vld [vmem:[%s1 + $0x98] sm:$0xf]
  %v1063 = vld [vmem:[%s1 + $0x9c] sm:$0xff]
  %v1064 = vld [vmem:[%s1 + $0xa4] sm:$0xf]
  %v1065 = vld [vmem:[%s1 + $0xa8] sm:$0xff]
  %v1066 = vld [vmem:[%s1 + $0xb0] sm:$0xf]
  %v1067 = vld [vmem:[%s1 + $0xb4] sm:$0xff]
  %v1068 = vld [vmem:[%s1 + $0xbc] sm:$0xf]
  %v1101 = vunpack.c.l.b16 %v1037
  %v1102 = vunpack.c.h.b16 %v1037
  %v1103 = vunpack.c.l.b16 %v1038
  %v1104 = vunpack.c.l.b16 %v1039
  %v1105 = vunpack.c.h.b16 %v1039
  %v1106 = vunpack.c.l.b16 %v1040
  %v1107 = vunpack.c.l.b16 %v1041
  %v1108 = vunpack.c.h.b16 %v1041
  %v1109 = vunpack.c.l.b16 %v1042
  %v1110 = vunpack.c.l.b16 %v1043
  %v1111 = vunpack.c.h.b16 %v1043
  %v1112 = vunpack.c.l.b16 %v1044
  %v1113 = vunpack.c.l.b16 %v1045
  %v1114 = vunpack.c.h.b16 %v1045
  %v1115 = vunpack.c.l.b16 %v1046
  %v1116 = vunpack.c.l.b16 %v1047
  %v1117 = vunpack.c.h.b16 %v1047
  %v1118 = vunpack.c.l.b16 %v1048
  %v1119 = vunpack.c.l.b16 %v1049
  %v1120 = vunpack.c.h.b16 %v1049
  %v1121 = vunpack.c.l.b16 %v1050
  %v1122 = vunpack.c.l.b16 %v1051
  %v1123 = vunpack.c.h.b16 %v1051
  %v1124 = vunpack.c.l.b16 %v1052
  %v1125 = vunpack.c.l.b16 %v1053
  %v1126 = vunpack.c.h.b16 %v1053
  %v1127 = vunpack.c.l.b16 %v1054
  %v1128 = vunpack.c.l.b16 %v1055
  %v1129 = vunpack.c.h.b16 %v1055
  %v1130 = vunpack.c.l.b16 %v1056
  %v1131 = vunpack.c.l.b16 %v1057
  %v1132 = vunpack.c.h.b16 %v1057
  %v1133 = vunpack.c.l.b16 %v1058
  %v1134 = vunpack.c.l.b16 %v1059
  %v1135 = vunpack.c.h.b16 %v1059
  %v1136 = vunpack.c.l.b16 %v1060
  %v1137 = vunpack.c.l.b16 %v1061
  %v1138 = vunpack.c.h.b16 %v1061
  %v1139 = vunpack.c.l.b16 %v1062
  %v1140 = vunpack.c.l.b16 %v1063
  %v1141 = vunpack.c.h.b16 %v1063
  %v1142 = vunpack.c.l.b16 %v1064
  %v1143 = vunpack.c.l.b16 %v1065
  %v1144 = vunpack.c.h.b16 %v1065
  %v1145 = vunpack.c.l.b16 %v1066
  %v1146 = vunpack.c.l.b16 %v1067
  %v1147 = vunpack.c.h.b16 %v1067
  %v1148 = vunpack.c.l.b16 %v1068
  %v1149 = vpack.c.b16 %v1104, %v1101
  %v1150 = vpack.c.b16 %v1105, %v1102
  %v1151 = vpack.c.b16 %v1106, %v1103
  %v1152 = vpack.c.b16 %v1110, %v1107
  %v1153 = vpack.c.b16 %v1111, %v1108
  %v1154 = vpack.c.b16 %v1112, %v1109
  %v1155 = vpack.c.b16 %v1116, %v1113
  %v1156 = vpack.c.b16 %v1117, %v1114
  %v1157 = vpack.c.b16 %v1118, %v1115
  %v1158 = vpack.c.b16 %v1122, %v1119
  %v1159 = vpack.c.b16 %v1123, %v1120
  %v1160 = vpack.c.b16 %v1124, %v1121
  %v1161 = vpack.c.b16 %v1128, %v1125
  %v1162 = vpack.c.b16 %v1129, %v1126
  %v1163 = vpack.c.b16 %v1130, %v1127
  %v1164 = vpack.c.b16 %v1134, %v1131
  %v1165 = vpack.c.b16 %v1135, %v1132
  %v1166 = vpack.c.b16 %v1136, %v1133
  %v1167 = vpack.c.b16 %v1140, %v1137
  %v1168 = vpack.c.b16 %v1141, %v1138
  %v1169 = vpack.c.b16 %v1142, %v1139
  %v1170 = vpack.c.b16 %v1146, %v1143
  %v1171 = vpack.c.b16 %v1147, %v1144
  %v1172 = vpack.c.b16 %v1148, %v1145
  %1197 = vmatpush.bf16.msra.mxu0 %v1170
  %1198 = vmatpush.bf16.msra.mxu0 %v1167
  %1199 = vmatpush.bf16.msra.mxu0 %v1164
  %1200 = vmatpush.bf16.msra.mxu0 %v1161
  %1201 = vmatpush.bf16.msra.mxu0 %v1158
  %1202 = vmatpush.bf16.msra.mxu0 %v1155
  %1203 = vmatpush.bf16.msra.mxu0 %v1152
  %1204 = vmatpush.bf16.msra.mxu0 %v1149
  %1205 = vmatmul.bf16.gmra.mxu0 %v1036
  %v1206 = vpop.f32.mrf.mxu0
  %v1207 = vadd.f32 0.0, %v1206
  %v1208 = vpop.f32.mrf.mxu0
  %1209 = vdwg.mxu0
  %1210 = vmatpush.bf16.msra.mxu0 %v1171
  %1211 = vmatpush.bf16.msra.mxu0 %v1168
  %1212 = vmatpush.bf16.msra.mxu0 %v1165
  %1213 = vmatpush.bf16.msra.mxu0 %v1162
  %1214 = vmatpush.bf16.msra.mxu0 %v1159
  %1215 = vmatpush.bf16.msra.mxu0 %v1156
  %1216 = vmatpush.bf16.msra.mxu0 %v1153
  %1217 = vmatpush.bf16.msra.mxu0 %v1150
  %1218 = vmatmul.bf16.gmra.mxu0 %v1036
  %v1219 = vpop.f32.mrf.mxu0
  %v1220 = vadd.f32 0.0, %v1219
  %v1221 = vpop.f32.mrf.mxu0
  %1222 = vdwg.mxu0
  %1223 = vmatpush.bf16.msra.mxu0 %v1172
  %1224 = vmatpush.bf16.msra.mxu0 %v1169
  %1225 = vmatpush.bf16.msra.mxu0 %v1166
  %1226 = vmatpush.bf16.msra.mxu0 %v1163
  %1227 = vmatpush.bf16.msra.mxu0 %v1160
  %1228 = vmatpush.bf16.msra.mxu0 %v1157
  %1229 = vmatpush.bf16.msra.mxu0 %v1154
  %1230 = vmatpush.bf16.msra.mxu0 %v1151
  %1231 = vmatmul.bf16.gmra.mxu0 %v1036
  %v1232 = vpop.f32.mrf.mxu0
  %v1233 = vadd.f32 0.0, %v1232
  %v1234 = vpop.f32.mrf.mxu0
  %1235 = vdwg.mxu0
  %v1236 = vadd.f32 %v1033, %v1207
  %v1237 = vxor.u32 %v1236, 2147483648
  %v1238 = vmul.f32 %v1237, 1.442695
  %v1239 = vpow.pop %v1238
  %v1240 = vadd.f32 %v1239, 1.0
  %v1241 = vrcp.pop %v1240
  %v1242 = vmul.f32 %v1240, %v1241
  %v1243 = vsub.f32 1.0, %v1242
  %v1244 = vmul.f32 %v1241, %v1243
  %v1245 = vadd.f32 %v1241, %v1244
  %vm1246 = vweird.f32 %v1240
  %vm1247 = vweird.f32 %v1241
  %vm1248 = vmor %vm1246, %vm1247
  %v1249 = vsel %vm1248, %v1241, %v1245
  %v1250 = vand.u32 2147483647, %v1240
  %vm1251 = vcmp.eq.f32.partialorder %v1250, 8.507059e+37
  %v1252 = vand.u32 %v1240, 2147483648
  %v1253 = vor.u32 1.1754944e-38, %v1252
  %v1254 = vsel %vm1251, %v1253, %v1249
  %v1255 = vmul.f32 1.0, %v1254
  %v1256 = vadd.f32 %v1034, %v1220
  %v1257 = vxor.u32 %v1256, 2147483648
  %v1258 = vmul.f32 %v1257, 1.442695
  %v1259 = vpow.pop %v1258
  %v1260 = vadd.f32 %v1259, 1.0
  %v1261 = vrcp.pop %v1260
  %v1262 = vmul.f32 %v1260, %v1261
  %v1263 = vsub.f32 1.0, %v1262
  %v1264 = vmul.f32 %v1261, %v1263
  %v1265 = vadd.f32 %v1261, %v1264
  %vm1266 = vweird.f32 %v1260
  %vm1267 = vweird.f32 %v1261
  %vm1268 = vmor %vm1266, %vm1267
  %v1269 = vsel %vm1268, %v1261, %v1265
  %v1270 = vand.u32 2147483647, %v1260
  %vm1271 = vcmp.eq.f32.partialorder %v1270, 8.507059e+37
  %v1272 = vand.u32 %v1260, 2147483648
  %v1273 = vor.u32 1.1754944e-38, %v1272
  %v1274 = vsel %vm1271, %v1273, %v1269
  %v1275 = vmul.f32 1.0, %v1274
  %v1276 = vadd.f32 %v1233, %v17
  %v1277 = vmul.f32 %v1255, %v1276
  %v1278 = vadd.f32 %v1035, %v1277
  %v1279 = vtanh.pop %v1278
  %v1280 = vsub.f32 1.0, %v1275
  %v1281 = vmul.f32 %v1280, %v1279
  %v1282 = vmul.f32 %v1275, %v1029
  %v1283 = vadd.f32 %v1281, %v1282
  %s1284 = scalar_lea.vmem %s3, 32
  %1285 = vst [vmem:[%s1284] sm:$0xff] %v1283
  %s1286 = scalar_lea.vmem %s0, 120
  %v1287 = vld [vmem:[%s1286] sm:$0xff]
  %v1288 = vld [vmem:[%s1286 + $0x8] sm:$0xff]
  %v1289 = vld [vmem:[%s1286 + $0x10] sm:$0xff]
  %v1290 = vpack.c.bf16 %v1283, %v1283
  %v1291 = vld [vmem:[%s1] sm:$0xff]
  %v1292 = vld [vmem:[%s1 + $0x8] sm:$0xf]
  %v1293 = vld [vmem:[%s1 + $0xc] sm:$0xff]
  %v1294 = vld [vmem:[%s1 + $0x14] sm:$0xf]
  %v1295 = vld [vmem:[%s1 + $0x18] sm:$0xff]
  %v1296 = vld [vmem:[%s1 + $0x20] sm:$0xf]
  %v1297 = vld [vmem:[%s1 + $0x24] sm:$0xff]
  %v1298 = vld [vmem:[%s1 + $0x2c] sm:$0xf]
  %v1299 = vld [vmem:[%s1 + $0x30] sm:$0xff]
  %v1300 = vld [vmem:[%s1 + $0x38] sm:$0xf]
  %v1301 = vld [vmem:[%s1 + $0x3c] sm:$0xff]
  %v1302 = vld [vmem:[%s1 + $0x44] sm:$0xf]
  %v1303 = vld [vmem:[%s1 + $0x48] sm:$0xff]
  %v1304 = vld [vmem:[%s1 + $0x50] sm:$0xf]
  %v1305 = vld [vmem:[%s1 + $0x54] sm:$0xff]
  %v1306 = vld [vmem:[%s1 + $0x5c] sm:$0xf]
  %v1307 = vld [vmem:[%s1 + $0x60] sm:$0xff]
  %v1308 = vld [vmem:[%s1 + $0x68] sm:$0xf]
  %v1309 = vld [vmem:[%s1 + $0x6c] sm:$0xff]
  %v1310 = vld [vmem:[%s1 + $0x74] sm:$0xf]
  %v1311 = vld [vmem:[%s1 + $0x78] sm:$0xff]
  %v1312 = vld [vmem:[%s1 + $0x80] sm:$0xf]
  %v1313 = vld [vmem:[%s1 + $0x84] sm:$0xff]
  %v1314 = vld [vmem:[%s1 + $0x8c] sm:$0xf]
  %v1315 = vld [vmem:[%s1 + $0x90] sm:$0xff]
  %v1316 = vld [vmem:[%s1 + $0x98] sm:$0xf]
  %v1317 = vld [vmem:[%s1 + $0x9c] sm:$0xff]
  %v1318 = vld [vmem:[%s1 + $0xa4] sm:$0xf]
  %v1319 = vld [vmem:[%s1 + $0xa8] sm:$0xff]
  %v1320 = vld [vmem:[%s1 + $0xb0] sm:$0xf]
  %v1321 = vld [vmem:[%s1 + $0xb4] sm:$0xff]
  %v1322 = vld [vmem:[%s1 + $0xbc] sm:$0xf]
  %v1355 = vunpack.c.l.b16 %v1291
  %v1356 = vunpack.c.h.b16 %v1291
  %v1357 = vunpack.c.l.b16 %v1292
  %v1358 = vunpack.c.l.b16 %v1293
  %v1359 = vunpack.c.h.b16 %v1293
  %v1360 = vunpack.c.l.b16 %v1294
  %v1361 = vunpack.c.l.b16 %v1295
  %v1362 = vunpack.c.h.b16 %v1295
  %v1363 = vunpack.c.l.b16 %v1296
  %v1364 = vunpack.c.l.b16 %v1297
  %v1365 = vunpack.c.h.b16 %v1297
  %v1366 = vunpack.c.l.b16 %v1298
  %v1367 = vunpack.c.l.b16 %v1299
  %v1368 = vunpack.c.h.b16 %v1299
  %v1369 = vunpack.c.l.b16 %v1300
  %v1370 = vunpack.c.l.b16 %v1301
  %v1371 = vunpack.c.h.b16 %v1301
  %v1372 = vunpack.c.l.b16 %v1302
  %v1373 = vunpack.c.l.b16 %v1303
  %v1374 = vunpack.c.h.b16 %v1303
  %v1375 = vunpack.c.l.b16 %v1304
  %v1376 = vunpack.c.l.b16 %v1305
  %v1377 = vunpack.c.h.b16 %v1305
  %v1378 = vunpack.c.l.b16 %v1306
  %v1379 = vunpack.c.l.b16 %v1307
  %v1380 = vunpack.c.h.b16 %v1307
  %v1381 = vunpack.c.l.b16 %v1308
  %v1382 = vunpack.c.l.b16 %v1309
  %v1383 = vunpack.c.h.b16 %v1309
  %v1384 = vunpack.c.l.b16 %v1310
  %v1385 = vunpack.c.l.b16 %v1311
  %v1386 = vunpack.c.h.b16 %v1311
  %v1387 = vunpack.c.l.b16 %v1312
  %v1388 = vunpack.c.l.b16 %v1313
  %v1389 = vunpack.c.h.b16 %v1313
  %v1390 = vunpack.c.l.b16 %v1314
  %v1391 = vunpack.c.l.b16 %v1315
  %v1392 = vunpack.c.h.b16 %v1315
  %v1393 = vunpack.c.l.b16 %v1316
  %v1394 = vunpack.c.l.b16 %v1317
  %v1395 = vunpack.c.h.b16 %v1317
  %v1396 = vunpack.c.l.b16 %v1318
  %v1397 = vunpack.c.l.b16 %v1319
  %v1398 = vunpack.c.h.b16 %v1319
  %v1399 = vunpack.c.l.b16 %v1320
  %v1400 = vunpack.c.l.b16 %v1321
  %v1401 = vunpack.c.h.b16 %v1321
  %v1402 = vunpack.c.l.b16 %v1322
  %v1403 = vpack.c.b16 %v1358, %v1355
  %v1404 = vpack.c.b16 %v1359, %v1356
  %v1405 = vpack.c.b16 %v1360, %v1357
  %v1406 = vpack.c.b16 %v1364, %v1361
  %v1407 = vpack.c.b16 %v1365, %v1362
  %v1408 = vpack.c.b16 %v1366, %v1363
  %v1409 = vpack.c.b16 %v1370, %v1367
  %v1410 = vpack.c.b16 %v1371, %v1368
  %v1411 = vpack.c.b16 %v1372, %v1369
  %v1412 = vpack.c.b16 %v1376, %v1373
  %v1413 = vpack.c.b16 %v1377, %v1374
  %v1414 = vpack.c.b16 %v1378, %v1375
  %v1415 = vpack.c.b16 %v1382, %v1379
  %v1416 = vpack.c.b16 %v1383, %v1380
  %v1417 = vpack.c.b16 %v1384, %v1381
  %v1418 = vpack.c.b16 %v1388, %v1385
  %v1419 = vpack.c.b16 %v1389, %v1386
  %v1420 = vpack.c.b16 %v1390, %v1387
  %v1421 = vpack.c.b16 %v1394, %v1391
  %v1422 = vpack.c.b16 %v1395, %v1392
  %v1423 = vpack.c.b16 %v1396, %v1393
  %v1424 = vpack.c.b16 %v1400, %v1397
  %v1425 = vpack.c.b16 %v1401, %v1398
  %v1426 = vpack.c.b16 %v1402, %v1399
  %1451 = vmatpush.bf16.msra.mxu0 %v1424
  %1452 = vmatpush.bf16.msra.mxu0 %v1421
  %1453 = vmatpush.bf16.msra.mxu0 %v1418
  %1454 = vmatpush.bf16.msra.mxu0 %v1415
  %1455 = vmatpush.bf16.msra.mxu0 %v1412
  %1456 = vmatpush.bf16.msra.mxu0 %v1409
  %1457 = vmatpush.bf16.msra.mxu0 %v1406
  %1458 = vmatpush.bf16.msra.mxu0 %v1403
  %1459 = vmatmul.bf16.gmra.mxu0 %v1290
  %v1460 = vpop.f32.mrf.mxu0
  %v1461 = vadd.f32 0.0, %v1460
  %v1462 = vpop.f32.mrf.mxu0
  %1463 = vdwg.mxu0
  %1464 = vmatpush.bf16.msra.mxu0 %v1425
  %1465 = vmatpush.bf16.msra.mxu0 %v1422
  %1466 = vmatpush.bf16.msra.mxu0 %v1419
  %1467 = vmatpush.bf16.msra.mxu0 %v1416
  %1468 = vmatpush.bf16.msra.mxu0 %v1413
  %1469 = vmatpush.bf16.msra.mxu0 %v1410
  %1470 = vmatpush.bf16.msra.mxu0 %v1407
  %1471 = vmatpush.bf16.msra.mxu0 %v1404
  %1472 = vmatmul.bf16.gmra.mxu0 %v1290
  %v1473 = vpop.f32.mrf.mxu0
  %v1474 = vadd.f32 0.0, %v1473
  %v1475 = vpop.f32.mrf.mxu0
  %1476 = vdwg.mxu0
  %1477 = vmatpush.bf16.msra.mxu0 %v1426
  %1478 = vmatpush.bf16.msra.mxu0 %v1423
  %1479 = vmatpush.bf16.msra.mxu0 %v1420
  %1480 = vmatpush.bf16.msra.mxu0 %v1417
  %1481 = vmatpush.bf16.msra.mxu0 %v1414
  %1482 = vmatpush.bf16.msra.mxu0 %v1411
  %1483 = vmatpush.bf16.msra.mxu0 %v1408
  %1484 = vmatpush.bf16.msra.mxu0 %v1405
  %1485 = vmatmul.bf16.gmra.mxu0 %v1290
  %v1486 = vpop.f32.mrf.mxu0
  %v1487 = vadd.f32 0.0, %v1486
  %v1488 = vpop.f32.mrf.mxu0
  %1489 = vdwg.mxu0
  %v1490 = vadd.f32 %v1287, %v1461
  %v1491 = vxor.u32 %v1490, 2147483648
  %v1492 = vmul.f32 %v1491, 1.442695
  %v1493 = vpow.pop %v1492
  %v1494 = vadd.f32 %v1493, 1.0
  %v1495 = vrcp.pop %v1494
  %v1496 = vmul.f32 %v1494, %v1495
  %v1497 = vsub.f32 1.0, %v1496
  %v1498 = vmul.f32 %v1495, %v1497
  %v1499 = vadd.f32 %v1495, %v1498
  %vm1500 = vweird.f32 %v1494
  %vm1501 = vweird.f32 %v1495
  %vm1502 = vmor %vm1500, %vm1501
  %v1503 = vsel %vm1502, %v1495, %v1499
  %v1504 = vand.u32 2147483647, %v1494
  %vm1505 = vcmp.eq.f32.partialorder %v1504, 8.507059e+37
  %v1506 = vand.u32 %v1494, 2147483648
  %v1507 = vor.u32 1.1754944e-38, %v1506
  %v1508 = vsel %vm1505, %v1507, %v1503
  %v1509 = vmul.f32 1.0, %v1508
  %v1510 = vadd.f32 %v1288, %v1474
  %v1511 = vxor.u32 %v1510, 2147483648
  %v1512 = vmul.f32 %v1511, 1.442695
  %v1513 = vpow.pop %v1512
  %v1514 = vadd.f32 %v1513, 1.0
  %v1515 = vrcp.pop %v1514
  %v1516 = vmul.f32 %v1514, %v1515
  %v1517 = vsub.f32 1.0, %v1516
  %v1518 = vmul.f32 %v1515, %v1517
  %v1519 = vadd.f32 %v1515, %v1518
  %vm1520 = vweird.f32 %v1514
  %vm1521 = vweird.f32 %v1515
  %vm1522 = vmor %vm1520, %vm1521
  %v1523 = vsel %vm1522, %v1515, %v1519
  %v1524 = vand.u32 2147483647, %v1514
  %vm1525 = vcmp.eq.f32.partialorder %v1524, 8.507059e+37
  %v1526 = vand.u32 %v1514, 2147483648
  %v1527 = vor.u32 1.1754944e-38, %v1526
  %v1528 = vsel %vm1525, %v1527, %v1523
  %v1529 = vmul.f32 1.0, %v1528
  %v1530 = vadd.f32 %v1487, %v17
  %v1531 = vmul.f32 %v1509, %v1530
  %v1532 = vadd.f32 %v1289, %v1531
  %v1533 = vtanh.pop %v1532
  %v1534 = vsub.f32 1.0, %v1529
  %v1535 = vmul.f32 %v1534, %v1533
  %v1536 = vmul.f32 %v1529, %v1283
  %v1537 = vadd.f32 %v1535, %v1536
  %s1538 = scalar_lea.vmem %s3, 40
  %1539 = vst [vmem:[%s1538] sm:$0xff] %v1537
  %s1540 = scalar_lea.vmem %s0, 144
  %v1541 = vld [vmem:[%s1540] sm:$0xff]
  %v1542 = vld [vmem:[%s1540 + $0x8] sm:$0xff]
  %v1543 = vld [vmem:[%s1540 + $0x10] sm:$0xff]
  %v1544 = vpack.c.bf16 %v1537, %v1537
  %v1545 = vld [vmem:[%s1] sm:$0xff]
  %v1546 = vld [vmem:[%s1 + $0x8] sm:$0xf]
  %v1547 = vld [vmem:[%s1 + $0xc] sm:$0xff]
  %v1548 = vld [vmem:[%s1 + $0x14] sm:$0xf]
  %v1549 = vld [vmem:[%s1 + $0x18] sm:$0xff]
  %v1550 = vld [vmem:[%s1 + $0x20] sm:$0xf]
  %v1551 = vld [vmem:[%s1 + $0x24] sm:$0xff]
  %v1552 = vld [vmem:[%s1 + $0x2c] sm:$0xf]
  %v1553 = vld [vmem:[%s1 + $0x30] sm:$0xff]
  %v1554 = vld [vmem:[%s1 + $0x38] sm:$0xf]
  %v1555 = vld [vmem:[%s1 + $0x3c] sm:$0xff]
  %v1556 = vld [vmem:[%s1 + $0x44] sm:$0xf]
  %v1557 = vld [vmem:[%s1 + $0x48] sm:$0xff]
  %v1558 = vld [vmem:[%s1 + $0x50] sm:$0xf]
  %v1559 = vld [vmem:[%s1 + $0x54] sm:$0xff]
  %v1560 = vld [vmem:[%s1 + $0x5c] sm:$0xf]
  %v1561 = vld [vmem:[%s1 + $0x60] sm:$0xff]
  %v1562 = vld [vmem:[%s1 + $0x68] sm:$0xf]
  %v1563 = vld [vmem:[%s1 + $0x6c] sm:$0xff]
  %v1564 = vld [vmem:[%s1 + $0x74] sm:$0xf]
  %v1565 = vld [vmem:[%s1 + $0x78] sm:$0xff]
  %v1566 = vld [vmem:[%s1 + $0x80] sm:$0xf]
  %v1567 = vld [vmem:[%s1 + $0x84] sm:$0xff]
  %v1568 = vld [vmem:[%s1 + $0x8c] sm:$0xf]
  %v1569 = vld [vmem:[%s1 + $0x90] sm:$0xff]
  %v1570 = vld [vmem:[%s1 + $0x98] sm:$0xf]
  %v1571 = vld [vmem:[%s1 + $0x9c] sm:$0xff]
  %v1572 = vld [vmem:[%s1 + $0xa4] sm:$0xf]
  %v1573 = vld [vmem:[%s1 + $0xa8] sm:$0xff]
  %v1574 = vld [vmem:[%s1 + $0xb0] sm:$0xf]
  %v1575 = vld [vmem:[%s1 + $0xb4] sm:$0xff]
  %v1576 = vld [vmem:[%s1 + $0xbc] sm:$0xf]
  %v1609 = vunpack.c.l.b16 %v1545
  %v1610 = vunpack.c.h.b16 %v1545
  %v1611 = vunpack.c.l.b16 %v1546
  %v1612 = vunpack.c.l.b16 %v1547
  %v1613 = vunpack.c.h.b16 %v1547
  %v1614 = vunpack.c.l.b16 %v1548
  %v1615 = vunpack.c.l.b16 %v1549
  %v1616 = vunpack.c.h.b16 %v1549
  %v1617 = vunpack.c.l.b16 %v1550
  %v1618 = vunpack.c.l.b16 %v1551
  %v1619 = vunpack.c.h.b16 %v1551
  %v1620 = vunpack.c.l.b16 %v1552
  %v1621 = vunpack.c.l.b16 %v1553
  %v1622 = vunpack.c.h.b16 %v1553
  %v1623 = vunpack.c.l.b16 %v1554
  %v1624 = vunpack.c.l.b16 %v1555
  %v1625 = vunpack.c.h.b16 %v1555
  %v1626 = vunpack.c.l.b16 %v1556
  %v1627 = vunpack.c.l.b16 %v1557
  %v1628 = vunpack.c.h.b16 %v1557
  %v1629 = vunpack.c.l.b16 %v1558
  %v1630 = vunpack.c.l.b16 %v1559
  %v1631 = vunpack.c.h.b16 %v1559
  %v1632 = vunpack.c.l.b16 %v1560
  %v1633 = vunpack.c.l.b16 %v1561
  %v1634 = vunpack.c.h.b16 %v1561
  %v1635 = vunpack.c.l.b16 %v1562
  %v1636 = vunpack.c.l.b16 %v1563
  %v1637 = vunpack.c.h.b16 %v1563
  %v1638 = vunpack.c.l.b16 %v1564
  %v1639 = vunpack.c.l.b16 %v1565
  %v1640 = vunpack.c.h.b16 %v1565
  %v1641 = vunpack.c.l.b16 %v1566
  %v1642 = vunpack.c.l.b16 %v1567
  %v1643 = vunpack.c.h.b16 %v1567
  %v1644 = vunpack.c.l.b16 %v1568
  %v1645 = vunpack.c.l.b16 %v1569
  %v1646 = vunpack.c.h.b16 %v1569
  %v1647 = vunpack.c.l.b16 %v1570
  %v1648 = vunpack.c.l.b16 %v1571
  %v1649 = vunpack.c.h.b16 %v1571
  %v1650 = vunpack.c.l.b16 %v1572
  %v1651 = vunpack.c.l.b16 %v1573
  %v1652 = vunpack.c.h.b16 %v1573
  %v1653 = vunpack.c.l.b16 %v1574
  %v1654 = vunpack.c.l.b16 %v1575
  %v1655 = vunpack.c.h.b16 %v1575
  %v1656 = vunpack.c.l.b16 %v1576
  %v1657 = vpack.c.b16 %v1612, %v1609
  %v1658 = vpack.c.b16 %v1613, %v1610
  %v1659 = vpack.c.b16 %v1614, %v1611
  %v1660 = vpack.c.b16 %v1618, %v1615
  %v1661 = vpack.c.b16 %v1619, %v1616
  %v1662 = vpack.c.b16 %v1620, %v1617
  %v1663 = vpack.c.b16 %v1624, %v1621
  %v1664 = vpack.c.b16 %v1625, %v1622
  %v1665 = vpack.c.b16 %v1626, %v1623
  %v1666 = vpack.c.b16 %v1630, %v1627
  %v1667 = vpack.c.b16 %v1631, %v1628
  %v1668 = vpack.c.b16 %v1632, %v1629
  %v1669 = vpack.c.b16 %v1636, %v1633
  %v1670 = vpack.c.b16 %v1637, %v1634
  %v1671 = vpack.c.b16 %v1638, %v1635
  %v1672 = vpack.c.b16 %v1642, %v1639
  %v1673 = vpack.c.b16 %v1643, %v1640
  %v1674 = vpack.c.b16 %v1644, %v1641
  %v1675 = vpack.c.b16 %v1648, %v1645
  %v1676 = vpack.c.b16 %v1649, %v1646
  %v1677 = vpack.c.b16 %v1650, %v1647
  %v1678 = vpack.c.b16 %v1654, %v1651
  %v1679 = vpack.c.b16 %v1655, %v1652
  %v1680 = vpack.c.b16 %v1656, %v1653
  %1705 = vmatpush.bf16.msra.mxu0 %v1678
  %1706 = vmatpush.bf16.msra.mxu0 %v1675
  %1707 = vmatpush.bf16.msra.mxu0 %v1672
  %1708 = vmatpush.bf16.msra.mxu0 %v1669
  %1709 = vmatpush.bf16.msra.mxu0 %v1666
  %1710 = vmatpush.bf16.msra.mxu0 %v1663
  %1711 = vmatpush.bf16.msra.mxu0 %v1660
  %1712 = vmatpush.bf16.msra.mxu0 %v1657
  %1713 = vmatmul.bf16.gmra.mxu0 %v1544
  %v1714 = vpop.f32.mrf.mxu0
  %v1715 = vadd.f32 0.0, %v1714
  %v1716 = vpop.f32.mrf.mxu0
  %1717 = vdwg.mxu0
  %1718 = vmatpush.bf16.msra.mxu0 %v1679
  %1719 = vmatpush.bf16.msra.mxu0 %v1676
  %1720 = vmatpush.bf16.msra.mxu0 %v1673
  %1721 = vmatpush.bf16.msra.mxu0 %v1670
  %1722 = vmatpush.bf16.msra.mxu0 %v1667
  %1723 = vmatpush.bf16.msra.mxu0 %v1664
  %1724 = vmatpush.bf16.msra.mxu0 %v1661
  %1725 = vmatpush.bf16.msra.mxu0 %v1658
  %1726 = vmatmul.bf16.gmra.mxu0 %v1544
  %v1727 = vpop.f32.mrf.mxu0
  %v1728 = vadd.f32 0.0, %v1727
  %v1729 = vpop.f32.mrf.mxu0
  %1730 = vdwg.mxu0
  %1731 = vmatpush.bf16.msra.mxu0 %v1680
  %1732 = vmatpush.bf16.msra.mxu0 %v1677
  %1733 = vmatpush.bf16.msra.mxu0 %v1674
  %1734 = vmatpush.bf16.msra.mxu0 %v1671
  %1735 = vmatpush.bf16.msra.mxu0 %v1668
  %1736 = vmatpush.bf16.msra.mxu0 %v1665
  %1737 = vmatpush.bf16.msra.mxu0 %v1662
  %1738 = vmatpush.bf16.msra.mxu0 %v1659
  %1739 = vmatmul.bf16.gmra.mxu0 %v1544
  %v1740 = vpop.f32.mrf.mxu0
  %v1741 = vadd.f32 0.0, %v1740
  %v1742 = vpop.f32.mrf.mxu0
  %1743 = vdwg.mxu0
  %v1744 = vadd.f32 %v1541, %v1715
  %v1745 = vxor.u32 %v1744, 2147483648
  %v1746 = vmul.f32 %v1745, 1.442695
  %v1747 = vpow.pop %v1746
  %v1748 = vadd.f32 %v1747, 1.0
  %v1749 = vrcp.pop %v1748
  %v1750 = vmul.f32 %v1748, %v1749
  %v1751 = vsub.f32 1.0, %v1750
  %v1752 = vmul.f32 %v1749, %v1751
  %v1753 = vadd.f32 %v1749, %v1752
  %vm1754 = vweird.f32 %v1748
  %vm1755 = vweird.f32 %v1749
  %vm1756 = vmor %vm1754, %vm1755
  %v1757 = vsel %vm1756, %v1749, %v1753
  %v1758 = vand.u32 2147483647, %v1748
  %vm1759 = vcmp.eq.f32.partialorder %v1758, 8.507059e+37
  %v1760 = vand.u32 %v1748, 2147483648
  %v1761 = vor.u32 1.1754944e-38, %v1760
  %v1762 = vsel %vm1759, %v1761, %v1757
  %v1763 = vmul.f32 1.0, %v1762
  %v1764 = vadd.f32 %v1542, %v1728
  %v1765 = vxor.u32 %v1764, 2147483648
  %v1766 = vmul.f32 %v1765, 1.442695
  %v1767 = vpow.pop %v1766
  %v1768 = vadd.f32 %v1767, 1.0
  %v1769 = vrcp.pop %v1768
  %v1770 = vmul.f32 %v1768, %v1769
  %v1771 = vsub.f32 1.0, %v1770
  %v1772 = vmul.f32 %v1769, %v1771
  %v1773 = vadd.f32 %v1769, %v1772
  %vm1774 = vweird.f32 %v1768
  %vm1775 = vweird.f32 %v1769
  %vm1776 = vmor %vm1774, %vm1775
  %v1777 = vsel %vm1776, %v1769, %v1773
  %v1778 = vand.u32 2147483647, %v1768
  %vm1779 = vcmp.eq.f32.partialorder %v1778, 8.507059e+37
  %v1780 = vand.u32 %v1768, 2147483648
  %v1781 = vor.u32 1.1754944e-38, %v1780
  %v1782 = vsel %vm1779, %v1781, %v1777
  %v1783 = vmul.f32 1.0, %v1782
  %v1784 = vadd.f32 %v1741, %v17
  %v1785 = vmul.f32 %v1763, %v1784
  %v1786 = vadd.f32 %v1543, %v1785
  %v1787 = vtanh.pop %v1786
  %v1788 = vsub.f32 1.0, %v1783
  %v1789 = vmul.f32 %v1788, %v1787
  %v1790 = vmul.f32 %v1783, %v1537
  %v1791 = vadd.f32 %v1789, %v1790
  %s1792 = scalar_lea.vmem %s3, 48
  %1793 = vst [vmem:[%s1792] sm:$0xff] %v1791
  %s1794 = scalar_lea.vmem %s0, 168
  %v1795 = vld [vmem:[%s1794] sm:$0xff]
  %v1796 = vld [vmem:[%s1794 + $0x8] sm:$0xff]
  %v1797 = vld [vmem:[%s1794 + $0x10] sm:$0xff]
  %v1798 = vpack.c.bf16 %v1791, %v1791
  %v1799 = vld [vmem:[%s1] sm:$0xff]
  %v1800 = vld [vmem:[%s1 + $0x8] sm:$0xf]
  %v1801 = vld [vmem:[%s1 + $0xc] sm:$0xff]
  %v1802 = vld [vmem:[%s1 + $0x14] sm:$0xf]
  %v1803 = vld [vmem:[%s1 + $0x18] sm:$0xff]
  %v1804 = vld [vmem:[%s1 + $0x20] sm:$0xf]
  %v1805 = vld [vmem:[%s1 + $0x24] sm:$0xff]
  %v1806 = vld [vmem:[%s1 + $0x2c] sm:$0xf]
  %v1807 = vld [vmem:[%s1 + $0x30] sm:$0xff]
  %v1808 = vld [vmem:[%s1 + $0x38] sm:$0xf]
  %v1809 = vld [vmem:[%s1 + $0x3c] sm:$0xff]
  %v1810 = vld [vmem:[%s1 + $0x44] sm:$0xf]
  %v1811 = vld [vmem:[%s1 + $0x48] sm:$0xff]
  %v1812 = vld [vmem:[%s1 + $0x50] sm:$0xf]
  %v1813 = vld [vmem:[%s1 + $0x54] sm:$0xff]
  %v1814 = vld [vmem:[%s1 + $0x5c] sm:$0xf]
  %v1815 = vld [vmem:[%s1 + $0x60] sm:$0xff]
  %v1816 = vld [vmem:[%s1 + $0x68] sm:$0xf]
  %v1817 = vld [vmem:[%s1 + $0x6c] sm:$0xff]
  %v1818 = vld [vmem:[%s1 + $0x74] sm:$0xf]
  %v1819 = vld [vmem:[%s1 + $0x78] sm:$0xff]
  %v1820 = vld [vmem:[%s1 + $0x80] sm:$0xf]
  %v1821 = vld [vmem:[%s1 + $0x84] sm:$0xff]
  %v1822 = vld [vmem:[%s1 + $0x8c] sm:$0xf]
  %v1823 = vld [vmem:[%s1 + $0x90] sm:$0xff]
  %v1824 = vld [vmem:[%s1 + $0x98] sm:$0xf]
  %v1825 = vld [vmem:[%s1 + $0x9c] sm:$0xff]
  %v1826 = vld [vmem:[%s1 + $0xa4] sm:$0xf]
  %v1827 = vld [vmem:[%s1 + $0xa8] sm:$0xff]
  %v1828 = vld [vmem:[%s1 + $0xb0] sm:$0xf]
  %v1829 = vld [vmem:[%s1 + $0xb4] sm:$0xff]
  %v1830 = vld [vmem:[%s1 + $0xbc] sm:$0xf]
  %v1863 = vunpack.c.l.b16 %v1799
  %v1864 = vunpack.c.h.b16 %v1799
  %v1865 = vunpack.c.l.b16 %v1800
  %v1866 = vunpack.c.l.b16 %v1801
  %v1867 = vunpack.c.h.b16 %v1801
  %v1868 = vunpack.c.l.b16 %v1802
  %v1869 = vunpack.c.l.b16 %v1803
  %v1870 = vunpack.c.h.b16 %v1803
  %v1871 = vunpack.c.l.b16 %v1804
  %v1872 = vunpack.c.l.b16 %v1805
  %v1873 = vunpack.c.h.b16 %v1805
  %v1874 = vunpack.c.l.b16 %v1806
  %v1875 = vunpack.c.l.b16 %v1807
  %v1876 = vunpack.c.h.b16 %v1807
  %v1877 = vunpack.c.l.b16 %v1808
  %v1878 = vunpack.c.l.b16 %v1809
  %v1879 = vunpack.c.h.b16 %v1809
  %v1880 = vunpack.c.l.b16 %v1810
  %v1881 = vunpack.c.l.b16 %v1811
  %v1882 = vunpack.c.h.b16 %v1811
  %v1883 = vunpack.c.l.b16 %v1812
  %v1884 = vunpack.c.l.b16 %v1813
  %v1885 = vunpack.c.h.b16 %v1813
  %v1886 = vunpack.c.l.b16 %v1814
  %v1887 = vunpack.c.l.b16 %v1815
  %v1888 = vunpack.c.h.b16 %v1815
  %v1889 = vunpack.c.l.b16 %v1816
  %v1890 = vunpack.c.l.b16 %v1817
  %v1891 = vunpack.c.h.b16 %v1817
  %v1892 = vunpack.c.l.b16 %v1818
  %v1893 = vunpack.c.l.b16 %v1819
  %v1894 = vunpack.c.h.b16 %v1819
  %v1895 = vunpack.c.l.b16 %v1820
  %v1896 = vunpack.c.l.b16 %v1821
  %v1897 = vunpack.c.h.b16 %v1821
  %v1898 = vunpack.c.l.b16 %v1822
  %v1899 = vunpack.c.l.b16 %v1823
  %v1900 = vunpack.c.h.b16 %v1823
  %v1901 = vunpack.c.l.b16 %v1824
  %v1902 = vunpack.c.l.b16 %v1825
  %v1903 = vunpack.c.h.b16 %v1825
  %v1904 = vunpack.c.l.b16 %v1826
  %v1905 = vunpack.c.l.b16 %v1827
  %v1906 = vunpack.c.h.b16 %v1827
  %v1907 = vunpack.c.l.b16 %v1828
  %v1908 = vunpack.c.l.b16 %v1829
  %v1909 = vunpack.c.h.b16 %v1829
  %v1910 = vunpack.c.l.b16 %v1830
  %v1911 = vpack.c.b16 %v1866, %v1863
  %v1912 = vpack.c.b16 %v1867, %v1864
  %v1913 = vpack.c.b16 %v1868, %v1865
  %v1914 = vpack.c.b16 %v1872, %v1869
  %v1915 = vpack.c.b16 %v1873, %v1870
  %v1916 = vpack.c.b16 %v1874, %v1871
  %v1917 = vpack.c.b16 %v1878, %v1875
  %v1918 = vpack.c.b16 %v1879, %v1876
  %v1919 = vpack.c.b16 %v1880, %v1877
  %v1920 = vpack.c.b16 %v1884, %v1881
  %v1921 = vpack.c.b16 %v1885, %v1882
  %v1922 = vpack.c.b16 %v1886, %v1883
  %v1923 = vpack.c.b16 %v1890, %v1887
  %v1924 = vpack.c.b16 %v1891, %v1888
  %v1925 = vpack.c.b16 %v1892, %v1889
  %v1926 = vpack.c.b16 %v1896, %v1893
  %v1927 = vpack.c.b16 %v1897, %v1894
  %v1928 = vpack.c.b16 %v1898, %v1895
  %v1929 = vpack.c.b16 %v1902, %v1899
  %v1930 = vpack.c.b16 %v1903, %v1900
  %v1931 = vpack.c.b16 %v1904, %v1901
  %v1932 = vpack.c.b16 %v1908, %v1905
  %v1933 = vpack.c.b16 %v1909, %v1906
  %v1934 = vpack.c.b16 %v1910, %v1907
  %1959 = vmatpush.bf16.msra.mxu0 %v1932
  %1960 = vmatpush.bf16.msra.mxu0 %v1929
  %1961 = vmatpush.bf16.msra.mxu0 %v1926
  %1962 = vmatpush.bf16.msra.mxu0 %v1923
  %1963 = vmatpush.bf16.msra.mxu0 %v1920
  %1964 = vmatpush.bf16.msra.mxu0 %v1917
  %1965 = vmatpush.bf16.msra.mxu0 %v1914
  %1966 = vmatpush.bf16.msra.mxu0 %v1911
  %1967 = vmatmul.bf16.gmra.mxu0 %v1798
  %v1968 = vpop.f32.mrf.mxu0
  %v1969 = vadd.f32 0.0, %v1968
  %v1970 = vpop.f32.mrf.mxu0
  %1971 = vdwg.mxu0
  %1972 = vmatpush.bf16.msra.mxu0 %v1933
  %1973 = vmatpush.bf16.msra.mxu0 %v1930
  %1974 = vmatpush.bf16.msra.mxu0 %v1927
  %1975 = vmatpush.bf16.msra.mxu0 %v1924
  %1976 = vmatpush.bf16.msra.mxu0 %v1921
  %1977 = vmatpush.bf16.msra.mxu0 %v1918
  %1978 = vmatpush.bf16.msra.mxu0 %v1915
  %1979 = vmatpush.bf16.msra.mxu0 %v1912
  %1980 = vmatmul.bf16.gmra.mxu0 %v1798
  %v1981 = vpop.f32.mrf.mxu0
  %v1982 = vadd.f32 0.0, %v1981
  %v1983 = vpop.f32.mrf.mxu0
  %1984 = vdwg.mxu0
  %1985 = vmatpush.bf16.msra.mxu0 %v1934
  %1986 = vmatpush.bf16.msra.mxu0 %v1931
  %1987 = vmatpush.bf16.msra.mxu0 %v1928
  %1988 = vmatpush.bf16.msra.mxu0 %v1925
  %1989 = vmatpush.bf16.msra.mxu0 %v1922
  %1990 = vmatpush.bf16.msra.mxu0 %v1919
  %1991 = vmatpush.bf16.msra.mxu0 %v1916
  %1992 = vmatpush.bf16.msra.mxu0 %v1913
  %1993 = vmatmul.bf16.gmra.mxu0 %v1798
  %v1994 = vpop.f32.mrf.mxu0
  %v1995 = vadd.f32 0.0, %v1994
  %v1996 = vpop.f32.mrf.mxu0
  %1997 = vdwg.mxu0
  %v1998 = vadd.f32 %v1795, %v1969
  %v1999 = vxor.u32 %v1998, 2147483648
  %v2000 = vmul.f32 %v1999, 1.442695
  %v2001 = vpow.pop %v2000
  %v2002 = vadd.f32 %v2001, 1.0
  %v2003 = vrcp.pop %v2002
  %v2004 = vmul.f32 %v2002, %v2003
  %v2005 = vsub.f32 1.0, %v2004
  %v2006 = vmul.f32 %v2003, %v2005
  %v2007 = vadd.f32 %v2003, %v2006
  %vm2008 = vweird.f32 %v2002
  %vm2009 = vweird.f32 %v2003
  %vm2010 = vmor %vm2008, %vm2009
  %v2011 = vsel %vm2010, %v2003, %v2007
  %v2012 = vand.u32 2147483647, %v2002
  %vm2013 = vcmp.eq.f32.partialorder %v2012, 8.507059e+37
  %v2014 = vand.u32 %v2002, 2147483648
  %v2015 = vor.u32 1.1754944e-38, %v2014
  %v2016 = vsel %vm2013, %v2015, %v2011
  %v2017 = vmul.f32 1.0, %v2016
  %v2018 = vadd.f32 %v1796, %v1982
  %v2019 = vxor.u32 %v2018, 2147483648
  %v2020 = vmul.f32 %v2019, 1.442695
  %v2021 = vpow.pop %v2020
  %v2022 = vadd.f32 %v2021, 1.0
  %v2023 = vrcp.pop %v2022
  %v2024 = vmul.f32 %v2022, %v2023
  %v2025 = vsub.f32 1.0, %v2024
  %v2026 = vmul.f32 %v2023, %v2025
  %v2027 = vadd.f32 %v2023, %v2026
  %vm2028 = vweird.f32 %v2022
  %vm2029 = vweird.f32 %v2023
  %vm2030 = vmor %vm2028, %vm2029
  %v2031 = vsel %vm2030, %v2023, %v2027
  %v2032 = vand.u32 2147483647, %v2022
  %vm2033 = vcmp.eq.f32.partialorder %v2032, 8.507059e+37
  %v2034 = vand.u32 %v2022, 2147483648
  %v2035 = vor.u32 1.1754944e-38, %v2034
  %v2036 = vsel %vm2033, %v2035, %v2031
  %v2037 = vmul.f32 1.0, %v2036
  %v2038 = vadd.f32 %v1995, %v17
  %v2039 = vmul.f32 %v2017, %v2038
  %v2040 = vadd.f32 %v1797, %v2039
  %v2041 = vtanh.pop %v2040
  %v2042 = vsub.f32 1.0, %v2037
  %v2043 = vmul.f32 %v2042, %v2041
  %v2044 = vmul.f32 %v2037, %v1791
  %v2045 = vadd.f32 %v2043, %v2044
  %s2046 = scalar_lea.vmem %s3, 56
  %2047 = vst [vmem:[%s2046] sm:$0xff] %v2045
  %s2048 = scalar_lea.vmem %s0, 192
  %v2049 = vld [vmem:[%s2048] sm:$0xff]
  %v2050 = vld [vmem:[%s2048 + $0x8] sm:$0xff]
  %v2051 = vld [vmem:[%s2048 + $0x10] sm:$0xff]
  %v2052 = vpack.c.bf16 %v2045, %v2045
  %v2053 = vld [vmem:[%s1] sm:$0xff]
  %v2054 = vld [vmem:[%s1 + $0x8] sm:$0xf]
  %v2055 = vld [vmem:[%s1 + $0xc] sm:$0xff]
  %v2056 = vld [vmem:[%s1 + $0x14] sm:$0xf]
  %v2057 = vld [vmem:[%s1 + $0x18] sm:$0xff]
  %v2058 = vld [vmem:[%s1 + $0x20] sm:$0xf]
  %v2059 = vld [vmem:[%s1 + $0x24] sm:$0xff]
  %v2060 = vld [vmem:[%s1 + $0x2c] sm:$0xf]
  %v2061 = vld [vmem:[%s1 + $0x30] sm:$0xff]
  %v2062 = vld [vmem:[%s1 + $0x38] sm:$0xf]
  %v2063 = vld [vmem:[%s1 + $0x3c] sm:$0xff]
  %v2064 = vld [vmem:[%s1 + $0x44] sm:$0xf]
  %v2065 = vld [vmem:[%s1 + $0x48] sm:$0xff]
  %v2066 = vld [vmem:[%s1 + $0x50] sm:$0xf]
  %v2067 = vld [vmem:[%s1 + $0x54] sm:$0xff]
  %v2068 = vld [vmem:[%s1 + $0x5c] sm:$0xf]
  %v2069 = vld [vmem:[%s1 + $0x60] sm:$0xff]
  %v2070 = vld [vmem:[%s1 + $0x68] sm:$0xf]
  %v2071 = vld [vmem:[%s1 + $0x6c] sm:$0xff]
  %v2072 = vld [vmem:[%s1 + $0x74] sm:$0xf]
  %v2073 = vld [vmem:[%s1 + $0x78] sm:$0xff]
  %v2074 = vld [vmem:[%s1 + $0x80] sm:$0xf]
  %v2075 = vld [vmem:[%s1 + $0x84] sm:$0xff]
  %v2076 = vld [vmem:[%s1 + $0x8c] sm:$0xf]
  %v2077 = vld [vmem:[%s1 + $0x90] sm:$0xff]
  %v2078 = vld [vmem:[%s1 + $0x98] sm:$0xf]
  %v2079 = vld [vmem:[%s1 + $0x9c] sm:$0xff]
  %v2080 = vld [vmem:[%s1 + $0xa4] sm:$0xf]
  %v2081 = vld [vmem:[%s1 + $0xa8] sm:$0xff]
  %v2082 = vld [vmem:[%s1 + $0xb0] sm:$0xf]
  %v2083 = vld [vmem:[%s1 + $0xb4] sm:$0xff]
  %v2084 = vld [vmem:[%s1 + $0xbc] sm:$0xf]
  %v2117 = vunpack.c.l.b16 %v2053
  %v2118 = vunpack.c.h.b16 %v2053
  %v2119 = vunpack.c.l.b16 %v2054
  %v2120 = vunpack.c.l.b16 %v2055
  %v2121 = vunpack.c.h.b16 %v2055
  %v2122 = vunpack.c.l.b16 %v2056
  %v2123 = vunpack.c.l.b16 %v2057
  %v2124 = vunpack.c.h.b16 %v2057
  %v2125 = vunpack.c.l.b16 %v2058
  %v2126 = vunpack.c.l.b16 %v2059
  %v2127 = vunpack.c.h.b16 %v2059
  %v2128 = vunpack.c.l.b16 %v2060
  %v2129 = vunpack.c.l.b16 %v2061
  %v2130 = vunpack.c.h.b16 %v2061
  %v2131 = vunpack.c.l.b16 %v2062
  %v2132 = vunpack.c.l.b16 %v2063
  %v2133 = vunpack.c.h.b16 %v2063
  %v2134 = vunpack.c.l.b16 %v2064
  %v2135 = vunpack.c.l.b16 %v2065
  %v2136 = vunpack.c.h.b16 %v2065
  %v2137 = vunpack.c.l.b16 %v2066
  %v2138 = vunpack.c.l.b16 %v2067
  %v2139 = vunpack.c.h.b16 %v2067
  %v2140 = vunpack.c.l.b16 %v2068
  %v2141 = vunpack.c.l.b16 %v2069
  %v2142 = vunpack.c.h.b16 %v2069
  %v2143 = vunpack.c.l.b16 %v2070
  %v2144 = vunpack.c.l.b16 %v2071
  %v2145 = vunpack.c.h.b16 %v2071
  %v2146 = vunpack.c.l.b16 %v2072
  %v2147 = vunpack.c.l.b16 %v2073
  %v2148 = vunpack.c.h.b16 %v2073
  %v2149 = vunpack.c.l.b16 %v2074
  %v2150 = vunpack.c.l.b16 %v2075
  %v2151 = vunpack.c.h.b16 %v2075
  %v2152 = vunpack.c.l.b16 %v2076
  %v2153 = vunpack.c.l.b16 %v2077
  %v2154 = vunpack.c.h.b16 %v2077
  %v2155 = vunpack.c.l.b16 %v2078
  %v2156 = vunpack.c.l.b16 %v2079
  %v2157 = vunpack.c.h.b16 %v2079
  %v2158 = vunpack.c.l.b16 %v2080
  %v2159 = vunpack.c.l.b16 %v2081
  %v2160 = vunpack.c.h.b16 %v2081
  %v2161 = vunpack.c.l.b16 %v2082
  %v2162 = vunpack.c.l.b16 %v2083
  %v2163 = vunpack.c.h.b16 %v2083
  %v2164 = vunpack.c.l.b16 %v2084
  %v2165 = vpack.c.b16 %v2120, %v2117
  %v2166 = vpack.c.b16 %v2121, %v2118
  %v2167 = vpack.c.b16 %v2122, %v2119
  %v2168 = vpack.c.b16 %v2126, %v2123
  %v2169 = vpack.c.b16 %v2127, %v2124
  %v2170 = vpack.c.b16 %v2128, %v2125
  %v2171 = vpack.c.b16 %v2132, %v2129
  %v2172 = vpack.c.b16 %v2133, %v2130
  %v2173 = vpack.c.b16 %v2134, %v2131
  %v2174 = vpack.c.b16 %v2138, %v2135
  %v2175 = vpack.c.b16 %v2139, %v2136
  %v2176 = vpack.c.b16 %v2140, %v2137
  %v2177 = vpack.c.b16 %v2144, %v2141
  %v2178 = vpack.c.b16 %v2145, %v2142
  %v2179 = vpack.c.b16 %v2146, %v2143
  %v2180 = vpack.c.b16 %v2150, %v2147
  %v2181 = vpack.c.b16 %v2151, %v2148
  %v2182 = vpack.c.b16 %v2152, %v2149
  %v2183 = vpack.c.b16 %v2156, %v2153
  %v2184 = vpack.c.b16 %v2157, %v2154
  %v2185 = vpack.c.b16 %v2158, %v2155
  %v2186 = vpack.c.b16 %v2162, %v2159
  %v2187 = vpack.c.b16 %v2163, %v2160
  %v2188 = vpack.c.b16 %v2164, %v2161
  %2213 = vmatpush.bf16.msra.mxu0 %v2186
  %2214 = vmatpush.bf16.msra.mxu0 %v2183
  %2215 = vmatpush.bf16.msra.mxu0 %v2180
  %2216 = vmatpush.bf16.msra.mxu0 %v2177
  %2217 = vmatpush.bf16.msra.mxu0 %v2174
  %2218 = vmatpush.bf16.msra.mxu0 %v2171
  %2219 = vmatpush.bf16.msra.mxu0 %v2168
  %2220 = vmatpush.bf16.msra.mxu0 %v2165
  %2221 = vmatmul.bf16.gmra.mxu0 %v2052
  %v2222 = vpop.f32.mrf.mxu0
  %v2223 = vadd.f32 0.0, %v2222
  %v2224 = vpop.f32.mrf.mxu0
  %2225 = vdwg.mxu0
  %2226 = vmatpush.bf16.msra.mxu0 %v2187
  %2227 = vmatpush.bf16.msra.mxu0 %v2184
  %2228 = vmatpush.bf16.msra.mxu0 %v2181
  %2229 = vmatpush.bf16.msra.mxu0 %v2178
  %2230 = vmatpush.bf16.msra.mxu0 %v2175
  %2231 = vmatpush.bf16.msra.mxu0 %v2172
  %2232 = vmatpush.bf16.msra.mxu0 %v2169
  %2233 = vmatpush.bf16.msra.mxu0 %v2166
  %2234 = vmatmul.bf16.gmra.mxu0 %v2052
  %v2235 = vpop.f32.mrf.mxu0
  %v2236 = vadd.f32 0.0, %v2235
  %v2237 = vpop.f32.mrf.mxu0
  %2238 = vdwg.mxu0
  %2239 = vmatpush.bf16.msra.mxu0 %v2188
  %2240 = vmatpush.bf16.msra.mxu0 %v2185
  %2241 = vmatpush.bf16.msra.mxu0 %v2182
  %2242 = vmatpush.bf16.msra.mxu0 %v2179
  %2243 = vmatpush.bf16.msra.mxu0 %v2176
  %2244 = vmatpush.bf16.msra.mxu0 %v2173
  %2245 = vmatpush.bf16.msra.mxu0 %v2170
  %2246 = vmatpush.bf16.msra.mxu0 %v2167
  %2247 = vmatmul.bf16.gmra.mxu0 %v2052
  %v2248 = vpop.f32.mrf.mxu0
  %v2249 = vadd.f32 0.0, %v2248
  %v2250 = vpop.f32.mrf.mxu0
  %2251 = vdwg.mxu0
  %v2252 = vadd.f32 %v2049, %v2223
  %v2253 = vxor.u32 %v2252, 2147483648
  %v2254 = vmul.f32 %v2253, 1.442695
  %v2255 = vpow.pop %v2254
  %v2256 = vadd.f32 %v2255, 1.0
  %v2257 = vrcp.pop %v2256
  %v2258 = vmul.f32 %v2256, %v2257
  %v2259 = vsub.f32 1.0, %v2258
  %v2260 = vmul.f32 %v2257, %v2259
  %v2261 = vadd.f32 %v2257, %v2260
  %vm2262 = vweird.f32 %v2256
  %vm2263 = vweird.f32 %v2257
  %vm2264 = vmor %vm2262, %vm2263
  %v2265 = vsel %vm2264, %v2257, %v2261
  %v2266 = vand.u32 2147483647, %v2256
  %vm2267 = vcmp.eq.f32.partialorder %v2266, 8.507059e+37
  %v2268 = vand.u32 %v2256, 2147483648
  %v2269 = vor.u32 1.1754944e-38, %v2268
  %v2270 = vsel %vm2267, %v2269, %v2265
  %v2271 = vmul.f32 1.0, %v2270
  %v2272 = vadd.f32 %v2050, %v2236
  %v2273 = vxor.u32 %v2272, 2147483648
  %v2274 = vmul.f32 %v2273, 1.442695
  %v2275 = vpow.pop %v2274
  %v2276 = vadd.f32 %v2275, 1.0
  %v2277 = vrcp.pop %v2276
  %v2278 = vmul.f32 %v2276, %v2277
  %v2279 = vsub.f32 1.0, %v2278
  %v2280 = vmul.f32 %v2277, %v2279
  %v2281 = vadd.f32 %v2277, %v2280
  %vm2282 = vweird.f32 %v2276
  %vm2283 = vweird.f32 %v2277
  %vm2284 = vmor %vm2282, %vm2283
  %v2285 = vsel %vm2284, %v2277, %v2281
  %v2286 = vand.u32 2147483647, %v2276
  %vm2287 = vcmp.eq.f32.partialorder %v2286, 8.507059e+37
  %v2288 = vand.u32 %v2276, 2147483648
  %v2289 = vor.u32 1.1754944e-38, %v2288
  %v2290 = vsel %vm2287, %v2289, %v2285
  %v2291 = vmul.f32 1.0, %v2290
  %v2292 = vadd.f32 %v2249, %v17
  %v2293 = vmul.f32 %v2271, %v2292
  %v2294 = vadd.f32 %v2051, %v2293
  %v2295 = vtanh.pop %v2294
  %v2296 = vsub.f32 1.0, %v2291
  %v2297 = vmul.f32 %v2296, %v2295
  %v2298 = vmul.f32 %v2291, %v2045
  %v2299 = vadd.f32 %v2297, %v2298
  %s2300 = scalar_lea.vmem %s3, 64
  %2301 = vst [vmem:[%s2300] sm:$0xff] %v2299
  %s2302 = scalar_lea.vmem %s0, 216
  %v2303 = vld [vmem:[%s2302] sm:$0xff]
  %v2304 = vld [vmem:[%s2302 + $0x8] sm:$0xff]
  %v2305 = vld [vmem:[%s2302 + $0x10] sm:$0xff]
  %v2306 = vpack.c.bf16 %v2299, %v2299
  %v2307 = vld [vmem:[%s1] sm:$0xff]
  %v2308 = vld [vmem:[%s1 + $0x8] sm:$0xf]
  %v2309 = vld [vmem:[%s1 + $0xc] sm:$0xff]
  %v2310 = vld [vmem:[%s1 + $0x14] sm:$0xf]
  %v2311 = vld [vmem:[%s1 + $0x18] sm:$0xff]
  %v2312 = vld [vmem:[%s1 + $0x20] sm:$0xf]
  %v2313 = vld [vmem:[%s1 + $0x24] sm:$0xff]
  %v2314 = vld [vmem:[%s1 + $0x2c] sm:$0xf]
  %v2315 = vld [vmem:[%s1 + $0x30] sm:$0xff]
  %v2316 = vld [vmem:[%s1 + $0x38] sm:$0xf]
  %v2317 = vld [vmem:[%s1 + $0x3c] sm:$0xff]
  %v2318 = vld [vmem:[%s1 + $0x44] sm:$0xf]
  %v2319 = vld [vmem:[%s1 + $0x48] sm:$0xff]
  %v2320 = vld [vmem:[%s1 + $0x50] sm:$0xf]
  %v2321 = vld [vmem:[%s1 + $0x54] sm:$0xff]
  %v2322 = vld [vmem:[%s1 + $0x5c] sm:$0xf]
  %v2323 = vld [vmem:[%s1 + $0x60] sm:$0xff]
  %v2324 = vld [vmem:[%s1 + $0x68] sm:$0xf]
  %v2325 = vld [vmem:[%s1 + $0x6c] sm:$0xff]
  %v2326 = vld [vmem:[%s1 + $0x74] sm:$0xf]
  %v2327 = vld [vmem:[%s1 + $0x78] sm:$0xff]
  %v2328 = vld [vmem:[%s1 + $0x80] sm:$0xf]
  %v2329 = vld [vmem:[%s1 + $0x84] sm:$0xff]
  %v2330 = vld [vmem:[%s1 + $0x8c] sm:$0xf]
  %v2331 = vld [vmem:[%s1 + $0x90] sm:$0xff]
  %v2332 = vld [vmem:[%s1 + $0x98] sm:$0xf]
  %v2333 = vld [vmem:[%s1 + $0x9c] sm:$0xff]
  %v2334 = vld [vmem:[%s1 + $0xa4] sm:$0xf]
  %v2335 = vld [vmem:[%s1 + $0xa8] sm:$0xff]
  %v2336 = vld [vmem:[%s1 + $0xb0] sm:$0xf]
  %v2337 = vld [vmem:[%s1 + $0xb4] sm:$0xff]
  %v2338 = vld [vmem:[%s1 + $0xbc] sm:$0xf]
  %v2371 = vunpack.c.l.b16 %v2307
  %v2372 = vunpack.c.h.b16 %v2307
  %v2373 = vunpack.c.l.b16 %v2308
  %v2374 = vunpack.c.l.b16 %v2309
  %v2375 = vunpack.c.h.b16 %v2309
  %v2376 = vunpack.c.l.b16 %v2310
  %v2377 = vunpack.c.l.b16 %v2311
  %v2378 = vunpack.c.h.b16 %v2311
  %v2379 = vunpack.c.l.b16 %v2312
  %v2380 = vunpack.c.l.b16 %v2313
  %v2381 = vunpack.c.h.b16 %v2313
  %v2382 = vunpack.c.l.b16 %v2314
  %v2383 = vunpack.c.l.b16 %v2315
  %v2384 = vunpack.c.h.b16 %v2315
  %v2385 = vunpack.c.l.b16 %v2316
  %v2386 = vunpack.c.l.b16 %v2317
  %v2387 = vunpack.c.h.b16 %v2317
  %v2388 = vunpack.c.l.b16 %v2318
  %v2389 = vunpack.c.l.b16 %v2319
  %v2390 = vunpack.c.h.b16 %v2319
  %v2391 = vunpack.c.l.b16 %v2320
  %v2392 = vunpack.c.l.b16 %v2321
  %v2393 = vunpack.c.h.b16 %v2321
  %v2394 = vunpack.c.l.b16 %v2322
  %v2395 = vunpack.c.l.b16 %v2323
  %v2396 = vunpack.c.h.b16 %v2323
  %v2397 = vunpack.c.l.b16 %v2324
  %v2398 = vunpack.c.l.b16 %v2325
  %v2399 = vunpack.c.h.b16 %v2325
  %v2400 = vunpack.c.l.b16 %v2326
  %v2401 = vunpack.c.l.b16 %v2327
  %v2402 = vunpack.c.h.b16 %v2327
  %v2403 = vunpack.c.l.b16 %v2328
  %v2404 = vunpack.c.l.b16 %v2329
  %v2405 = vunpack.c.h.b16 %v2329
  %v2406 = vunpack.c.l.b16 %v2330
  %v2407 = vunpack.c.l.b16 %v2331
  %v2408 = vunpack.c.h.b16 %v2331
  %v2409 = vunpack.c.l.b16 %v2332
  %v2410 = vunpack.c.l.b16 %v2333
  %v2411 = vunpack.c.h.b16 %v2333
  %v2412 = vunpack.c.l.b16 %v2334
  %v2413 = vunpack.c.l.b16 %v2335
  %v2414 = vunpack.c.h.b16 %v2335
  %v2415 = vunpack.c.l.b16 %v2336
  %v2416 = vunpack.c.l.b16 %v2337
  %v2417 = vunpack.c.h.b16 %v2337
  %v2418 = vunpack.c.l.b16 %v2338
  %v2419 = vpack.c.b16 %v2374, %v2371
  %v2420 = vpack.c.b16 %v2375, %v2372
  %v2421 = vpack.c.b16 %v2376, %v2373
  %v2422 = vpack.c.b16 %v2380, %v2377
  %v2423 = vpack.c.b16 %v2381, %v2378
  %v2424 = vpack.c.b16 %v2382, %v2379
  %v2425 = vpack.c.b16 %v2386, %v2383
  %v2426 = vpack.c.b16 %v2387, %v2384
  %v2427 = vpack.c.b16 %v2388, %v2385
  %v2428 = vpack.c.b16 %v2392, %v2389
  %v2429 = vpack.c.b16 %v2393, %v2390
  %v2430 = vpack.c.b16 %v2394, %v2391
  %v2431 = vpack.c.b16 %v2398, %v2395
  %v2432 = vpack.c.b16 %v2399, %v2396
  %v2433 = vpack.c.b16 %v2400, %v2397
  %v2434 = vpack.c.b16 %v2404, %v2401
  %v2435 = vpack.c.b16 %v2405, %v2402
  %v2436 = vpack.c.b16 %v2406, %v2403
  %v2437 = vpack.c.b16 %v2410, %v2407
  %v2438 = vpack.c.b16 %v2411, %v2408
  %v2439 = vpack.c.b16 %v2412, %v2409
  %v2440 = vpack.c.b16 %v2416, %v2413
  %v2441 = vpack.c.b16 %v2417, %v2414
  %v2442 = vpack.c.b16 %v2418, %v2415
  %2467 = vmatpush.bf16.msra.mxu0 %v2440
  %2468 = vmatpush.bf16.msra.mxu0 %v2437
  %2469 = vmatpush.bf16.msra.mxu0 %v2434
  %2470 = vmatpush.bf16.msra.mxu0 %v2431
  %2471 = vmatpush.bf16.msra.mxu0 %v2428
  %2472 = vmatpush.bf16.msra.mxu0 %v2425
  %2473 = vmatpush.bf16.msra.mxu0 %v2422
  %2474 = vmatpush.bf16.msra.mxu0 %v2419
  %2475 = vmatmul.bf16.gmra.mxu0 %v2306
  %v2476 = vpop.f32.mrf.mxu0
  %v2477 = vadd.f32 0.0, %v2476
  %v2478 = vpop.f32.mrf.mxu0
  %2479 = vdwg.mxu0
  %2480 = vmatpush.bf16.msra.mxu0 %v2441
  %2481 = vmatpush.bf16.msra.mxu0 %v2438
  %2482 = vmatpush.bf16.msra.mxu0 %v2435
  %2483 = vmatpush.bf16.msra.mxu0 %v2432
  %2484 = vmatpush.bf16.msra.mxu0 %v2429
  %2485 = vmatpush.bf16.msra.mxu0 %v2426
  %2486 = vmatpush.bf16.msra.mxu0 %v2423
  %2487 = vmatpush.bf16.msra.mxu0 %v2420
  %2488 = vmatmul.bf16.gmra.mxu0 %v2306
  %v2489 = vpop.f32.mrf.mxu0
  %v2490 = vadd.f32 0.0, %v2489
  %v2491 = vpop.f32.mrf.mxu0
  %2492 = vdwg.mxu0
  %2493 = vmatpush.bf16.msra.mxu0 %v2442
  %2494 = vmatpush.bf16.msra.mxu0 %v2439
  %2495 = vmatpush.bf16.msra.mxu0 %v2436
  %2496 = vmatpush.bf16.msra.mxu0 %v2433
  %2497 = vmatpush.bf16.msra.mxu0 %v2430
  %2498 = vmatpush.bf16.msra.mxu0 %v2427
  %2499 = vmatpush.bf16.msra.mxu0 %v2424
  %2500 = vmatpush.bf16.msra.mxu0 %v2421
  %2501 = vmatmul.bf16.gmra.mxu0 %v2306
  %v2502 = vpop.f32.mrf.mxu0
  %v2503 = vadd.f32 0.0, %v2502
  %v2504 = vpop.f32.mrf.mxu0
  %2505 = vdwg.mxu0
  %v2506 = vadd.f32 %v2303, %v2477
  %v2507 = vxor.u32 %v2506, 2147483648
  %v2508 = vmul.f32 %v2507, 1.442695
  %v2509 = vpow.pop %v2508
  %v2510 = vadd.f32 %v2509, 1.0
  %v2511 = vrcp.pop %v2510
  %v2512 = vmul.f32 %v2510, %v2511
  %v2513 = vsub.f32 1.0, %v2512
  %v2514 = vmul.f32 %v2511, %v2513
  %v2515 = vadd.f32 %v2511, %v2514
  %vm2516 = vweird.f32 %v2510
  %vm2517 = vweird.f32 %v2511
  %vm2518 = vmor %vm2516, %vm2517
  %v2519 = vsel %vm2518, %v2511, %v2515
  %v2520 = vand.u32 2147483647, %v2510
  %vm2521 = vcmp.eq.f32.partialorder %v2520, 8.507059e+37
  %v2522 = vand.u32 %v2510, 2147483648
  %v2523 = vor.u32 1.1754944e-38, %v2522
  %v2524 = vsel %vm2521, %v2523, %v2519
  %v2525 = vmul.f32 1.0, %v2524
  %v2526 = vadd.f32 %v2304, %v2490
  %v2527 = vxor.u32 %v2526, 2147483648
  %v2528 = vmul.f32 %v2527, 1.442695
  %v2529 = vpow.pop %v2528
  %v2530 = vadd.f32 %v2529, 1.0
  %v2531 = vrcp.pop %v2530
  %v2532 = vmul.f32 %v2530, %v2531
  %v2533 = vsub.f32 1.0, %v2532
  %v2534 = vmul.f32 %v2531, %v2533
  %v2535 = vadd.f32 %v2531, %v2534
  %vm2536 = vweird.f32 %v2530
  %vm2537 = vweird.f32 %v2531
  %vm2538 = vmor %vm2536, %vm2537
  %v2539 = vsel %vm2538, %v2531, %v2535
  %v2540 = vand.u32 2147483647, %v2530
  %vm2541 = vcmp.eq.f32.partialorder %v2540, 8.507059e+37
  %v2542 = vand.u32 %v2530, 2147483648
  %v2543 = vor.u32 1.1754944e-38, %v2542
  %v2544 = vsel %vm2541, %v2543, %v2539
  %v2545 = vmul.f32 1.0, %v2544
  %v2546 = vadd.f32 %v2503, %v17
  %v2547 = vmul.f32 %v2525, %v2546
  %v2548 = vadd.f32 %v2305, %v2547
  %v2549 = vtanh.pop %v2548
  %v2550 = vsub.f32 1.0, %v2545
  %v2551 = vmul.f32 %v2550, %v2549
  %v2552 = vmul.f32 %v2545, %v2299
  %v2553 = vadd.f32 %v2551, %v2552
  %s2554 = scalar_lea.vmem %s3, 72
  %2555 = vst [vmem:[%s2554] sm:$0xff] %v2553
  %s2556 = scalar_lea.vmem %s0, 240
  %v2557 = vld [vmem:[%s2556] sm:$0xff]
  %v2558 = vld [vmem:[%s2556 + $0x8] sm:$0xff]
  %v2559 = vld [vmem:[%s2556 + $0x10] sm:$0xff]
  %v2560 = vpack.c.bf16 %v2553, %v2553
  %v2561 = vld [vmem:[%s1] sm:$0xff]
  %v2562 = vld [vmem:[%s1 + $0x8] sm:$0xf]
  %v2563 = vld [vmem:[%s1 + $0xc] sm:$0xff]
  %v2564 = vld [vmem:[%s1 + $0x14] sm:$0xf]
  %v2565 = vld [vmem:[%s1 + $0x18] sm:$0xff]
  %v2566 = vld [vmem:[%s1 + $0x20] sm:$0xf]
  %v2567 = vld [vmem:[%s1 + $0x24] sm:$0xff]
  %v2568 = vld [vmem:[%s1 + $0x2c] sm:$0xf]
  %v2569 = vld [vmem:[%s1 + $0x30] sm:$0xff]
  %v2570 = vld [vmem:[%s1 + $0x38] sm:$0xf]
  %v2571 = vld [vmem:[%s1 + $0x3c] sm:$0xff]
  %v2572 = vld [vmem:[%s1 + $0x44] sm:$0xf]
  %v2573 = vld [vmem:[%s1 + $0x48] sm:$0xff]
  %v2574 = vld [vmem:[%s1 + $0x50] sm:$0xf]
  %v2575 = vld [vmem:[%s1 + $0x54] sm:$0xff]
  %v2576 = vld [vmem:[%s1 + $0x5c] sm:$0xf]
  %v2577 = vld [vmem:[%s1 + $0x60] sm:$0xff]
  %v2578 = vld [vmem:[%s1 + $0x68] sm:$0xf]
  %v2579 = vld [vmem:[%s1 + $0x6c] sm:$0xff]
  %v2580 = vld [vmem:[%s1 + $0x74] sm:$0xf]
  %v2581 = vld [vmem:[%s1 + $0x78] sm:$0xff]
  %v2582 = vld [vmem:[%s1 + $0x80] sm:$0xf]
  %v2583 = vld [vmem:[%s1 + $0x84] sm:$0xff]
  %v2584 = vld [vmem:[%s1 + $0x8c] sm:$0xf]
  %v2585 = vld [vmem:[%s1 + $0x90] sm:$0xff]
  %v2586 = vld [vmem:[%s1 + $0x98] sm:$0xf]
  %v2587 = vld [vmem:[%s1 + $0x9c] sm:$0xff]
  %v2588 = vld [vmem:[%s1 + $0xa4] sm:$0xf]
  %v2589 = vld [vmem:[%s1 + $0xa8] sm:$0xff]
  %v2590 = vld [vmem:[%s1 + $0xb0] sm:$0xf]
  %v2591 = vld [vmem:[%s1 + $0xb4] sm:$0xff]
  %v2592 = vld [vmem:[%s1 + $0xbc] sm:$0xf]
  %v2625 = vunpack.c.l.b16 %v2561
  %v2626 = vunpack.c.h.b16 %v2561
  %v2627 = vunpack.c.l.b16 %v2562
  %v2628 = vunpack.c.l.b16 %v2563
  %v2629 = vunpack.c.h.b16 %v2563
  %v2630 = vunpack.c.l.b16 %v2564
  %v2631 = vunpack.c.l.b16 %v2565
  %v2632 = vunpack.c.h.b16 %v2565
  %v2633 = vunpack.c.l.b16 %v2566
  %v2634 = vunpack.c.l.b16 %v2567
  %v2635 = vunpack.c.h.b16 %v2567
  %v2636 = vunpack.c.l.b16 %v2568
  %v2637 = vunpack.c.l.b16 %v2569
  %v2638 = vunpack.c.h.b16 %v2569
  %v2639 = vunpack.c.l.b16 %v2570
  %v2640 = vunpack.c.l.b16 %v2571
  %v2641 = vunpack.c.h.b16 %v2571
  %v2642 = vunpack.c.l.b16 %v2572
  %v2643 = vunpack.c.l.b16 %v2573
  %v2644 = vunpack.c.h.b16 %v2573
  %v2645 = vunpack.c.l.b16 %v2574
  %v2646 = vunpack.c.l.b16 %v2575
  %v2647 = vunpack.c.h.b16 %v2575
  %v2648 = vunpack.c.l.b16 %v2576
  %v2649 = vunpack.c.l.b16 %v2577
  %v2650 = vunpack.c.h.b16 %v2577
  %v2651 = vunpack.c.l.b16 %v2578
  %v2652 = vunpack.c.l.b16 %v2579
  %v2653 = vunpack.c.h.b16 %v2579
  %v2654 = vunpack.c.l.b16 %v2580
  %v2655 = vunpack.c.l.b16 %v2581
  %v2656 = vunpack.c.h.b16 %v2581
  %v2657 = vunpack.c.l.b16 %v2582
  %v2658 = vunpack.c.l.b16 %v2583
  %v2659 = vunpack.c.h.b16 %v2583
  %v2660 = vunpack.c.l.b16 %v2584
  %v2661 = vunpack.c.l.b16 %v2585
  %v2662 = vunpack.c.h.b16 %v2585
  %v2663 = vunpack.c.l.b16 %v2586
  %v2664 = vunpack.c.l.b16 %v2587
  %v2665 = vunpack.c.h.b16 %v2587
  %v2666 = vunpack.c.l.b16 %v2588
  %v2667 = vunpack.c.l.b16 %v2589
  %v2668 = vunpack.c.h.b16 %v2589
  %v2669 = vunpack.c.l.b16 %v2590
  %v2670 = vunpack.c.l.b16 %v2591
  %v2671 = vunpack.c.h.b16 %v2591
  %v2672 = vunpack.c.l.b16 %v2592
  %v2673 = vpack.c.b16 %v2628, %v2625
  %v2674 = vpack.c.b16 %v2629, %v2626
  %v2675 = vpack.c.b16 %v2630, %v2627
  %v2676 = vpack.c.b16 %v2634, %v2631
  %v2677 = vpack.c.b16 %v2635, %v2632
  %v2678 = vpack.c.b16 %v2636, %v2633
  %v2679 = vpack.c.b16 %v2640, %v2637
  %v2680 = vpack.c.b16 %v2641, %v2638
  %v2681 = vpack.c.b16 %v2642, %v2639
  %v2682 = vpack.c.b16 %v2646, %v2643
  %v2683 = vpack.c.b16 %v2647, %v2644
  %v2684 = vpack.c.b16 %v2648, %v2645
  %v2685 = vpack.c.b16 %v2652, %v2649
  %v2686 = vpack.c.b16 %v2653, %v2650
  %v2687 = vpack.c.b16 %v2654, %v2651
  %v2688 = vpack.c.b16 %v2658, %v2655
  %v2689 = vpack.c.b16 %v2659, %v2656
  %v2690 = vpack.c.b16 %v2660, %v2657
  %v2691 = vpack.c.b16 %v2664, %v2661
  %v2692 = vpack.c.b16 %v2665, %v2662
  %v2693 = vpack.c.b16 %v2666, %v2663
  %v2694 = vpack.c.b16 %v2670, %v2667
  %v2695 = vpack.c.b16 %v2671, %v2668
  %v2696 = vpack.c.b16 %v2672, %v2669
  %2721 = vmatpush.bf16.msra.mxu0 %v2694
  %2722 = vmatpush.bf16.msra.mxu0 %v2691
  %2723 = vmatpush.bf16.msra.mxu0 %v2688
  %2724 = vmatpush.bf16.msra.mxu0 %v2685
  %2725 = vmatpush.bf16.msra.mxu0 %v2682
  %2726 = vmatpush.bf16.msra.mxu0 %v2679
  %2727 = vmatpush.bf16.msra.mxu0 %v2676
  %2728 = vmatpush.bf16.msra.mxu0 %v2673
  %2729 = vmatmul.bf16.gmra.mxu0 %v2560
  %v2730 = vpop.f32.mrf.mxu0
  %v2731 = vadd.f32 0.0, %v2730
  %v2732 = vpop.f32.mrf.mxu0
  %2733 = vdwg.mxu0
  %2734 = vmatpush.bf16.msra.mxu0 %v2695
  %2735 = vmatpush.bf16.msra.mxu0 %v2692
  %2736 = vmatpush.bf16.msra.mxu0 %v2689
  %2737 = vmatpush.bf16.msra.mxu0 %v2686
  %2738 = vmatpush.bf16.msra.mxu0 %v2683
  %2739 = vmatpush.bf16.msra.mxu0 %v2680
  %2740 = vmatpush.bf16.msra.mxu0 %v2677
  %2741 = vmatpush.bf16.msra.mxu0 %v2674
  %2742 = vmatmul.bf16.gmra.mxu0 %v2560
  %v2743 = vpop.f32.mrf.mxu0
  %v2744 = vadd.f32 0.0, %v2743
  %v2745 = vpop.f32.mrf.mxu0
  %2746 = vdwg.mxu0
  %2747 = vmatpush.bf16.msra.mxu0 %v2696
  %2748 = vmatpush.bf16.msra.mxu0 %v2693
  %2749 = vmatpush.bf16.msra.mxu0 %v2690
  %2750 = vmatpush.bf16.msra.mxu0 %v2687
  %2751 = vmatpush.bf16.msra.mxu0 %v2684
  %2752 = vmatpush.bf16.msra.mxu0 %v2681
  %2753 = vmatpush.bf16.msra.mxu0 %v2678
  %2754 = vmatpush.bf16.msra.mxu0 %v2675
  %2755 = vmatmul.bf16.gmra.mxu0 %v2560
  %v2756 = vpop.f32.mrf.mxu0
  %v2757 = vadd.f32 0.0, %v2756
  %v2758 = vpop.f32.mrf.mxu0
  %2759 = vdwg.mxu0
  %v2760 = vadd.f32 %v2557, %v2731
  %v2761 = vxor.u32 %v2760, 2147483648
  %v2762 = vmul.f32 %v2761, 1.442695
  %v2763 = vpow.pop %v2762
  %v2764 = vadd.f32 %v2763, 1.0
  %v2765 = vrcp.pop %v2764
  %v2766 = vmul.f32 %v2764, %v2765
  %v2767 = vsub.f32 1.0, %v2766
  %v2768 = vmul.f32 %v2765, %v2767
  %v2769 = vadd.f32 %v2765, %v2768
  %vm2770 = vweird.f32 %v2764
  %vm2771 = vweird.f32 %v2765
  %vm2772 = vmor %vm2770, %vm2771
  %v2773 = vsel %vm2772, %v2765, %v2769
  %v2774 = vand.u32 2147483647, %v2764
  %vm2775 = vcmp.eq.f32.partialorder %v2774, 8.507059e+37
  %v2776 = vand.u32 %v2764, 2147483648
  %v2777 = vor.u32 1.1754944e-38, %v2776
  %v2778 = vsel %vm2775, %v2777, %v2773
  %v2779 = vmul.f32 1.0, %v2778
  %v2780 = vadd.f32 %v2558, %v2744
  %v2781 = vxor.u32 %v2780, 2147483648
  %v2782 = vmul.f32 %v2781, 1.442695
  %v2783 = vpow.pop %v2782
  %v2784 = vadd.f32 %v2783, 1.0
  %v2785 = vrcp.pop %v2784
  %v2786 = vmul.f32 %v2784, %v2785
  %v2787 = vsub.f32 1.0, %v2786
  %v2788 = vmul.f32 %v2785, %v2787
  %v2789 = vadd.f32 %v2785, %v2788
  %vm2790 = vweird.f32 %v2784
  %vm2791 = vweird.f32 %v2785
  %vm2792 = vmor %vm2790, %vm2791
  %v2793 = vsel %vm2792, %v2785, %v2789
  %v2794 = vand.u32 2147483647, %v2784
  %vm2795 = vcmp.eq.f32.partialorder %v2794, 8.507059e+37
  %v2796 = vand.u32 %v2784, 2147483648
  %v2797 = vor.u32 1.1754944e-38, %v2796
  %v2798 = vsel %vm2795, %v2797, %v2793
  %v2799 = vmul.f32 1.0, %v2798
  %v2800 = vadd.f32 %v2757, %v17
  %v2801 = vmul.f32 %v2779, %v2800
  %v2802 = vadd.f32 %v2559, %v2801
  %v2803 = vtanh.pop %v2802
  %v2804 = vsub.f32 1.0, %v2799
  %v2805 = vmul.f32 %v2804, %v2803
  %v2806 = vmul.f32 %v2799, %v2553
  %v2807 = vadd.f32 %v2805, %v2806
  %s2808 = scalar_lea.vmem %s3, 80
  %2809 = vst [vmem:[%s2808] sm:$0xff] %v2807
  %s2810 = scalar_lea.vmem %s0, 264
  %v2811 = vld [vmem:[%s2810] sm:$0xff]
  %v2812 = vld [vmem:[%s2810 + $0x8] sm:$0xff]
  %v2813 = vld [vmem:[%s2810 + $0x10] sm:$0xff]
  %v2814 = vpack.c.bf16 %v2807, %v2807
  %v2815 = vld [vmem:[%s1] sm:$0xff]
  %v2816 = vld [vmem:[%s1 + $0x8] sm:$0xf]
  %v2817 = vld [vmem:[%s1 + $0xc] sm:$0xff]
  %v2818 = vld [vmem:[%s1 + $0x14] sm:$0xf]
  %v2819 = vld [vmem:[%s1 + $0x18] sm:$0xff]
  %v2820 = vld [vmem:[%s1 + $0x20] sm:$0xf]
  %v2821 = vld [vmem:[%s1 + $0x24] sm:$0xff]
  %v2822 = vld [vmem:[%s1 + $0x2c] sm:$0xf]
  %v2823 = vld [vmem:[%s1 + $0x30] sm:$0xff]
  %v2824 = vld [vmem:[%s1 + $0x38] sm:$0xf]
  %v2825 = vld [vmem:[%s1 + $0x3c] sm:$0xff]
  %v2826 = vld [vmem:[%s1 + $0x44] sm:$0xf]
  %v2827 = vld [vmem:[%s1 + $0x48] sm:$0xff]
  %v2828 = vld [vmem:[%s1 + $0x50] sm:$0xf]
  %v2829 = vld [vmem:[%s1 + $0x54] sm:$0xff]
  %v2830 = vld [vmem:[%s1 + $0x5c] sm:$0xf]
  %v2831 = vld [vmem:[%s1 + $0x60] sm:$0xff]
  %v2832 = vld [vmem:[%s1 + $0x68] sm:$0xf]
  %v2833 = vld [vmem:[%s1 + $0x6c] sm:$0xff]
  %v2834 = vld [vmem:[%s1 + $0x74] sm:$0xf]
  %v2835 = vld [vmem:[%s1 + $0x78] sm:$0xff]
  %v2836 = vld [vmem:[%s1 + $0x80] sm:$0xf]
  %v2837 = vld [vmem:[%s1 + $0x84] sm:$0xff]
  %v2838 = vld [vmem:[%s1 + $0x8c] sm:$0xf]
  %v2839 = vld [vmem:[%s1 + $0x90] sm:$0xff]
  %v2840 = vld [vmem:[%s1 + $0x98] sm:$0xf]
  %v2841 = vld [vmem:[%s1 + $0x9c] sm:$0xff]
  %v2842 = vld [vmem:[%s1 + $0xa4] sm:$0xf]
  %v2843 = vld [vmem:[%s1 + $0xa8] sm:$0xff]
  %v2844 = vld [vmem:[%s1 + $0xb0] sm:$0xf]
  %v2845 = vld [vmem:[%s1 + $0xb4] sm:$0xff]
  %v2846 = vld [vmem:[%s1 + $0xbc] sm:$0xf]
  %v2879 = vunpack.c.l.b16 %v2815
  %v2880 = vunpack.c.h.b16 %v2815
  %v2881 = vunpack.c.l.b16 %v2816
  %v2882 = vunpack.c.l.b16 %v2817
  %v2883 = vunpack.c.h.b16 %v2817
  %v2884 = vunpack.c.l.b16 %v2818
  %v2885 = vunpack.c.l.b16 %v2819
  %v2886 = vunpack.c.h.b16 %v2819
  %v2887 = vunpack.c.l.b16 %v2820
  %v2888 = vunpack.c.l.b16 %v2821
  %v2889 = vunpack.c.h.b16 %v2821
  %v2890 = vunpack.c.l.b16 %v2822
  %v2891 = vunpack.c.l.b16 %v2823
  %v2892 = vunpack.c.h.b16 %v2823
  %v2893 = vunpack.c.l.b16 %v2824
  %v2894 = vunpack.c.l.b16 %v2825
  %v2895 = vunpack.c.h.b16 %v2825
  %v2896 = vunpack.c.l.b16 %v2826
  %v2897 = vunpack.c.l.b16 %v2827
  %v2898 = vunpack.c.h.b16 %v2827
  %v2899 = vunpack.c.l.b16 %v2828
  %v2900 = vunpack.c.l.b16 %v2829
  %v2901 = vunpack.c.h.b16 %v2829
  %v2902 = vunpack.c.l.b16 %v2830
  %v2903 = vunpack.c.l.b16 %v2831
  %v2904 = vunpack.c.h.b16 %v2831
  %v2905 = vunpack.c.l.b16 %v2832
  %v2906 = vunpack.c.l.b16 %v2833
  %v2907 = vunpack.c.h.b16 %v2833
  %v2908 = vunpack.c.l.b16 %v2834
  %v2909 = vunpack.c.l.b16 %v2835
  %v2910 = vunpack.c.h.b16 %v2835
  %v2911 = vunpack.c.l.b16 %v2836
  %v2912 = vunpack.c.l.b16 %v2837
  %v2913 = vunpack.c.h.b16 %v2837
  %v2914 = vunpack.c.l.b16 %v2838
  %v2915 = vunpack.c.l.b16 %v2839
  %v2916 = vunpack.c.h.b16 %v2839
  %v2917 = vunpack.c.l.b16 %v2840
  %v2918 = vunpack.c.l.b16 %v2841
  %v2919 = vunpack.c.h.b16 %v2841
  %v2920 = vunpack.c.l.b16 %v2842
  %v2921 = vunpack.c.l.b16 %v2843
  %v2922 = vunpack.c.h.b16 %v2843
  %v2923 = vunpack.c.l.b16 %v2844
  %v2924 = vunpack.c.l.b16 %v2845
  %v2925 = vunpack.c.h.b16 %v2845
  %v2926 = vunpack.c.l.b16 %v2846
  %v2927 = vpack.c.b16 %v2882, %v2879
  %v2928 = vpack.c.b16 %v2883, %v2880
  %v2929 = vpack.c.b16 %v2884, %v2881
  %v2930 = vpack.c.b16 %v2888, %v2885
  %v2931 = vpack.c.b16 %v2889, %v2886
  %v2932 = vpack.c.b16 %v2890, %v2887
  %v2933 = vpack.c.b16 %v2894, %v2891
  %v2934 = vpack.c.b16 %v2895, %v2892
  %v2935 = vpack.c.b16 %v2896, %v2893
  %v2936 = vpack.c.b16 %v2900, %v2897
  %v2937 = vpack.c.b16 %v2901, %v2898
  %v2938 = vpack.c.b16 %v2902, %v2899
  %v2939 = vpack.c.b16 %v2906, %v2903
  %v2940 = vpack.c.b16 %v2907, %v2904
  %v2941 = vpack.c.b16 %v2908, %v2905
  %v2942 = vpack.c.b16 %v2912, %v2909
  %v2943 = vpack.c.b16 %v2913, %v2910
  %v2944 = vpack.c.b16 %v2914, %v2911
  %v2945 = vpack.c.b16 %v2918, %v2915
  %v2946 = vpack.c.b16 %v2919, %v2916
  %v2947 = vpack.c.b16 %v2920, %v2917
  %v2948 = vpack.c.b16 %v2924, %v2921
  %v2949 = vpack.c.b16 %v2925, %v2922
  %v2950 = vpack.c.b16 %v2926, %v2923
  %2975 = vmatpush.bf16.msra.mxu0 %v2948
  %2976 = vmatpush.bf16.msra.mxu0 %v2945
  %2977 = vmatpush.bf16.msra.mxu0 %v2942
  %2978 = vmatpush.bf16.msra.mxu0 %v2939
  %2979 = vmatpush.bf16.msra.mxu0 %v2936
  %2980 = vmatpush.bf16.msra.mxu0 %v2933
  %2981 = vmatpush.bf16.msra.mxu0 %v2930
  %2982 = vmatpush.bf16.msra.mxu0 %v2927
  %2983 = vmatmul.bf16.gmra.mxu0 %v2814
  %v2984 = vpop.f32.mrf.mxu0
  %v2985 = vadd.f32 0.0, %v2984
  %v2986 = vpop.f32.mrf.mxu0
  %2987 = vdwg.mxu0
  %2988 = vmatpush.bf16.msra.mxu0 %v2949
  %2989 = vmatpush.bf16.msra.mxu0 %v2946
  %2990 = vmatpush.bf16.msra.mxu0 %v2943
  %2991 = vmatpush.bf16.msra.mxu0 %v2940
  %2992 = vmatpush.bf16.msra.mxu0 %v2937
  %2993 = vmatpush.bf16.msra.mxu0 %v2934
  %2994 = vmatpush.bf16.msra.mxu0 %v2931
  %2995 = vmatpush.bf16.msra.mxu0 %v2928
  %2996 = vmatmul.bf16.gmra.mxu0 %v2814
  %v2997 = vpop.f32.mrf.mxu0
  %v2998 = vadd.f32 0.0, %v2997
  %v2999 = vpop.f32.mrf.mxu0
  %3000 = vdwg.mxu0
  %3001 = vmatpush.bf16.msra.mxu0 %v2950
  %3002 = vmatpush.bf16.msra.mxu0 %v2947
  %3003 = vmatpush.bf16.msra.mxu0 %v2944
  %3004 = vmatpush.bf16.msra.mxu0 %v2941
  %3005 = vmatpush.bf16.msra.mxu0 %v2938
  %3006 = vmatpush.bf16.msra.mxu0 %v2935
  %3007 = vmatpush.bf16.msra.mxu0 %v2932
  %3008 = vmatpush.bf16.msra.mxu0 %v2929
  %3009 = vmatmul.bf16.gmra.mxu0 %v2814
  %v3010 = vpop.f32.mrf.mxu0
  %v3011 = vadd.f32 0.0, %v3010
  %v3012 = vpop.f32.mrf.mxu0
  %3013 = vdwg.mxu0
  %v3014 = vadd.f32 %v2811, %v2985
  %v3015 = vxor.u32 %v3014, 2147483648
  %v3016 = vmul.f32 %v3015, 1.442695
  %v3017 = vpow.pop %v3016
  %v3018 = vadd.f32 %v3017, 1.0
  %v3019 = vrcp.pop %v3018
  %v3020 = vmul.f32 %v3018, %v3019
  %v3021 = vsub.f32 1.0, %v3020
  %v3022 = vmul.f32 %v3019, %v3021
  %v3023 = vadd.f32 %v3019, %v3022
  %vm3024 = vweird.f32 %v3018
  %vm3025 = vweird.f32 %v3019
  %vm3026 = vmor %vm3024, %vm3025
  %v3027 = vsel %vm3026, %v3019, %v3023
  %v3028 = vand.u32 2147483647, %v3018
  %vm3029 = vcmp.eq.f32.partialorder %v3028, 8.507059e+37
  %v3030 = vand.u32 %v3018, 2147483648
  %v3031 = vor.u32 1.1754944e-38, %v3030
  %v3032 = vsel %vm3029, %v3031, %v3027
  %v3033 = vmul.f32 1.0, %v3032
  %v3034 = vadd.f32 %v2812, %v2998
  %v3035 = vxor.u32 %v3034, 2147483648
  %v3036 = vmul.f32 %v3035, 1.442695
  %v3037 = vpow.pop %v3036
  %v3038 = vadd.f32 %v3037, 1.0
  %v3039 = vrcp.pop %v3038
  %v3040 = vmul.f32 %v3038, %v3039
  %v3041 = vsub.f32 1.0, %v3040
  %v3042 = vmul.f32 %v3039, %v3041
  %v3043 = vadd.f32 %v3039, %v3042
  %vm3044 = vweird.f32 %v3038
  %vm3045 = vweird.f32 %v3039
  %vm3046 = vmor %vm3044, %vm3045
  %v3047 = vsel %vm3046, %v3039, %v3043
  %v3048 = vand.u32 2147483647, %v3038
  %vm3049 = vcmp.eq.f32.partialorder %v3048, 8.507059e+37
  %v3050 = vand.u32 %v3038, 2147483648
  %v3051 = vor.u32 1.1754944e-38, %v3050
  %v3052 = vsel %vm3049, %v3051, %v3047
  %v3053 = vmul.f32 1.0, %v3052
  %v3054 = vadd.f32 %v3011, %v17
  %v3055 = vmul.f32 %v3033, %v3054
  %v3056 = vadd.f32 %v2813, %v3055
  %v3057 = vtanh.pop %v3056
  %v3058 = vsub.f32 1.0, %v3053
  %v3059 = vmul.f32 %v3058, %v3057
  %v3060 = vmul.f32 %v3053, %v2807
  %v3061 = vadd.f32 %v3059, %v3060
  %s3062 = scalar_lea.vmem %s3, 88
  %3063 = vst [vmem:[%s3062] sm:$0xff] %v3061
  // Predicated region
  $region14: #{encoder_forward.1} parent=0 // pred_check
    _
  $region15: #{encoder_forward.1} parent=0 // pred_check_branch
    %3065 = sbr.rel (0) target = $region17
  $region16: #{encoder_forward.1} parent=0 // pred_region
    _
  $region17: #{encoder_forward.1} parent=0 // pred_fallthru
    _
  // Predicated region
  $region18: #{encoder_forward.1} parent=0 // pred_check
    _
  $region19: #{encoder_forward.1} parent=0 // pred_check_branch
    %3067 = sbr.rel (0) target = $region21
  $region20: #{encoder_forward.1} parent=0 // pred_region
    _
  $region21: #{encoder_forward.1} parent=0 // pred_fallthru
    _

</llo_original>
